<compile_context>
chip_gen: v6e
topology: v6e:2x2x1
jax: 0.10.0
libtpu: 0.0.40
codegen_flags: <defaults>
</compile_context>

<pallas_src>
import functools

import jax
import jax.numpy as jnp
import numpy as np
from jax import lax
from jax.experimental import pallas as pl
from jax.experimental.pallas import tpu as pltpu


def _lstm_unrolled(get_proj_row, whh_ref, hidden, seq_len, collect=True):
    """Batch-1 LSTM over seq_len steps, fully unrolled.

    get_proj_row(t) -> (1, 4*hidden) precomputed  x_t @ W_ih + b  row.
    Per step only the recurrent  h @ W_hh_stacked  matmul + activations run.
    """
    whh = whh_ref[...]                                   # (hidden, 4*hidden), load once
    h = jnp.zeros((1, hidden), jnp.float32)
    c = jnp.zeros((1, hidden), jnp.float32)
    hs = []
    for t in range(seq_len):                             # static trip count -> unrolled
        pre = get_proj_row(t) + jnp.dot(h, whh, preferred_element_type=jnp.float32)
        i = jax.nn.sigmoid(pre[:, 0 * hidden:1 * hidden])
        f = jax.nn.sigmoid(pre[:, 1 * hidden:2 * hidden])
        g = jnp.tanh(pre[:, 2 * hidden:3 * hidden])
        o = jax.nn.sigmoid(pre[:, 3 * hidden:4 * hidden])
        c = f * c + i * g
        h = o * jnp.tanh(c)
        if collect:
            hs.append(h)
    h_seq = jnp.concatenate(hs, axis=0) if collect else None
    return h, h_seq


def _rae_kernel(x_ref,
                e1_wih, e1_whh, e1_b,
                e2_wih, e2_whh, e2_b,
                d1_wih, d1_whh, d1_b,
                d2_wih, d2_whh, d2_b,
                out_wt, out_b,
                z_ref, recon_ref,
                *, seq_len, emb):
    hid = 2 * emb

    # ---------------- Encoder ----------------
    # rnn1: n_features(=1) -> 2*emb. Hoisted input projection: degenerate K=1
    # contraction -> broadcast multiply, one shot for the whole sequence.
    xproj = x_ref[...] * e1_wih[...] + e1_b[...]              # (S,1)*(1,4*hid) -> (S,4*hid)
    _, h1_seq = _lstm_unrolled(lambda t: xproj[t:t + 1, :], e1_whh, hid, seq_len)

    # rnn2: 2*emb -> emb. Hoisted projection: one (S, 2*emb) @ (2*emb, 4*emb) matmul.
    h1proj = (jnp.dot(h1_seq, e2_wih[...], preferred_element_type=jnp.float32)
              + e2_b[...])                                     # (S, 4*emb)
    z, _ = _lstm_unrolled(lambda t: h1proj[t:t + 1, :], e2_whh, emb, seq_len,
                          collect=False)
    z_ref[...] = z                                             # (1, emb) == (n_features, emb)

    # ---------------- Decoder ----------------
    # rnn1: input sequence is the constant latent z -> a single (1, 4*emb)
    # projection computed once and reused every step.
    zproj = (jnp.dot(z, d1_wih[...], preferred_element_type=jnp.float32)
             + d1_b[...])                                      # (1, 4*emb)
    _, g1_seq = _lstm_unrolled(lambda t: zproj, d1_whh, emb, seq_len)

    # rnn2: emb -> 2*emb. Hoisted projection again.
    g1proj = (jnp.dot(g1_seq, d2_wih[...], preferred_element_type=jnp.float32)
              + d2_b[...])                                     # (S, 8*emb)
    _, g2_seq = _lstm_unrolled(lambda t: g1proj[t:t + 1, :], d2_whh, hid, seq_len)

    # Output Linear (2*emb -> 1): N=1, so skip the MXU and use a VPU multiply
    # + lane reduce (XLU) instead of a 1-lane matmul.
    recon_ref[...] = (jnp.sum(g2_seq * out_wt[...], axis=-1, keepdims=True)
                      + out_b[...])                            # (S, 1)


def _stack_lstm_params(p):
    """(4,in,H),(4,H,H),(4,1,H) per-gate  ->  lane-dense (in,4H),(H,4H),(1,4H)."""
    wih, whh, b = p
    wih_s = jnp.concatenate([wih[g] for g in range(4)], axis=-1)
    whh_s = jnp.concatenate([whh[g] for g in range(4)], axis=-1)
    b_s = jnp.concatenate([b[g] for g in range(4)], axis=-1)
    return wih_s, whh_s, b_s


def recurrent_autoencoder(x, params, *, seq_len, n_features, emb):
    assert n_features == 1, "module semantics (encoder reshape) require n_features == 1"
    e1, e2, d1, d2, out_w, out_b = params

    # Host-side restack into lane-dense, gate-stacked tensors.
    e1s, e2s, d1s, d2s = (_stack_lstm_params(p) for p in (e1, e2, d1, d2))
    out_wt = jnp.transpose(out_w)                  # (n_features, 2*emb) - lane dense

    inputs = (x,
              *e1s, *e2s, *d1s, *d2s,
              out_wt, out_b)

    vmem = pl.BlockSpec(memory_space=pltpu.MemorySpace.VMEM)
    kernel = functools.partial(_rae_kernel, seq_len=seq_len, emb=emb)
    z, recon = pl.pallas_call(
        kernel,
        out_shape=(jax.ShapeDtypeStruct((n_features, emb), jnp.float32),
                   jax.ShapeDtypeStruct((seq_len, n_features), jnp.float32)),
        in_specs=[vmem] * len(inputs),
        out_specs=(vmem, vmem),
        compiler_params=pltpu.CompilerParams(vmem_limit_bytes=32 * 1024 * 1024),
    )(*inputs)
    return z, recon


# ---------------- deterministic parameter init + pure-JAX reference ----------------

def init_lstm_params(key, in_dim, hidden):
    k = 1.0 / np.sqrt(hidden)
    k0, k1, k2 = jax.random.split(key, 3)
    wih = jax.random.uniform(k0, (4, in_dim, hidden), jnp.float32, -k, k)
    whh = jax.random.uniform(k1, (4, hidden, hidden), jnp.float32, -k, k)
    b = jax.random.uniform(k2, (4, 1, hidden), jnp.float32, -k, k)
    return (wih, whh, b)


def lstm_ref(xs, params):
    wih, whh, b = params
    hidden = whh.shape[1]
    h = jnp.zeros((1, hidden), jnp.float32)
    c = jnp.zeros((1, hidden), jnp.float32)
    hs = []
    for t in range(xs.shape[0]):
        xt = xs[t:t + 1]
        pre = [xt @ wih[g] + h @ whh[g] + b[g] for g in range(4)]
        i = jax.nn.sigmoid(pre[0])
        f = jax.nn.sigmoid(pre[1])
        g_ = jnp.tanh(pre[2])
        o = jax.nn.sigmoid(pre[3])
        c = f * c + i * g_
        h = o * jnp.tanh(c)
        hs.append(h)
    return jnp.concatenate(hs, axis=0), h


def forward_ref(x, params, *, seq_len, n_features, emb):
    e1, e2, d1, d2, out_w, out_b = params
    h1, _ = lstm_ref(x, e1)                 # encoder rnn1
    _, z = lstm_ref(h1, e2)                 # encoder rnn2 -> latent
    dec_in = jnp.tile(z, (seq_len, 1))      # repeat latent over time
    g1, _ = lstm_ref(dec_in, d1)            # decoder rnn1
    g2, _ = lstm_ref(g1, d2)                # decoder rnn2
    recon = g2 @ out_w + out_b              # output layer
    return z, recon


if __name__ == "__main__":
    seq_len, n_features, emb = 8, 1, 32     # hidden_dim = 2*emb = 64
    key = jax.random.PRNGKey(0)
    kx, k1, k2, k3, k4, k5, k6 = jax.random.split(key, 7)

    x = jax.random.normal(kx, (seq_len, n_features), jnp.float32)
    e1 = init_lstm_params(k1, n_features, 2 * emb)   # encoder rnn1
    e2 = init_lstm_params(k2, 2 * emb, emb)          # encoder rnn2
    d1 = init_lstm_params(k3, emb, emb)              # decoder rnn1
    d2 = init_lstm_params(k4, emb, 2 * emb)          # decoder rnn2
    kl = 1.0 / np.sqrt(2 * emb)
    out_w = jax.random.uniform(k5, (2 * emb, n_features), jnp.float32, -kl, kl)
    out_b = jax.random.uniform(k6, (1, n_features), jnp.float32, -kl, kl)
    params = (e1, e2, d1, d2, out_w, out_b)

    z, recon = recurrent_autoencoder(x, params, seq_len=seq_len,
                                     n_features=n_features, emb=emb)
    jax.block_until_ready((z, recon))

    z_ref, recon_ref = forward_ref(x, params, seq_len=seq_len,
                                   n_features=n_features, emb=emb)
    assert z.shape == (n_features, emb)
    assert recon.shape == (seq_len, n_features)
    np.testing.assert_allclose(np.asarray(z), np.asarray(z_ref),
                               rtol=2e-3, atol=2e-3)
    np.testing.assert_allclose(np.asarray(recon), np.asarray(recon_ref),
                               rtol=2e-3, atol=2e-3)
    print("KERNEL_OK")
</pallas_src>

<mosaic_0001>
module attributes {stable_mosaic.version = 11 : i64} {
  func.func @_rae_kernel(%arg0: memref<8x1xf32, #tpu.memory_space<vmem>>, %arg1: memref<1x256xf32, #tpu.memory_space<vmem>>, %arg2: memref<64x256xf32, #tpu.memory_space<vmem>>, %arg3: memref<1x256xf32, #tpu.memory_space<vmem>>, %arg4: memref<64x128xf32, #tpu.memory_space<vmem>>, %arg5: memref<32x128xf32, #tpu.memory_space<vmem>>, %arg6: memref<1x128xf32, #tpu.memory_space<vmem>>, %arg7: memref<32x128xf32, #tpu.memory_space<vmem>>, %arg8: memref<32x128xf32, #tpu.memory_space<vmem>>, %arg9: memref<1x128xf32, #tpu.memory_space<vmem>>, %arg10: memref<32x256xf32, #tpu.memory_space<vmem>>, %arg11: memref<64x256xf32, #tpu.memory_space<vmem>>, %arg12: memref<1x256xf32, #tpu.memory_space<vmem>>, %arg13: memref<1x64xf32, #tpu.memory_space<vmem>>, %arg14: memref<1x1xf32, #tpu.memory_space<vmem>>, %arg15: memref<1x32xf32, #tpu.memory_space<vmem>>, %arg16: memref<8x1xf32, #tpu.memory_space<vmem>>) attributes {dimension_semantics = [], scalar_prefetch = 0 : i64, scratch_operands = 0 : i64, tpu.core_type = #tpu.core_type<tc>} {
    %c0 = arith.constant 0 : index
    %c0_0 = arith.constant 0 : index
    %0 = vector.load %arg0[%c0, %c0_0] : memref<8x1xf32, #tpu.memory_space<vmem>>, vector<8x1xf32>
    %c0_1 = arith.constant 0 : index
    %c0_2 = arith.constant 0 : index
    %1 = vector.load %arg1[%c0_1, %c0_2] : memref<1x256xf32, #tpu.memory_space<vmem>>, vector<1x256xf32>
    %2 = vector.broadcast %0 : vector<8x1xf32> to vector<8x256xf32>
    %3 = vector.broadcast %1 : vector<1x256xf32> to vector<8x256xf32>
    %4 = arith.mulf %2, %3 : vector<8x256xf32>
    %c0_3 = arith.constant 0 : index
    %c0_4 = arith.constant 0 : index
    %5 = vector.load %arg3[%c0_3, %c0_4] : memref<1x256xf32, #tpu.memory_space<vmem>>, vector<1x256xf32>
    %6 = vector.broadcast %5 : vector<1x256xf32> to vector<8x256xf32>
    %7 = arith.addf %4, %6 : vector<8x256xf32>
    %c0_5 = arith.constant 0 : index
    %c0_6 = arith.constant 0 : index
    %8 = vector.load %arg2[%c0_5, %c0_6] : memref<64x256xf32, #tpu.memory_space<vmem>>, vector<64x256xf32>
    %cst = arith.constant 0.000000e+00 : f32
    %9 = vector.broadcast %cst : f32 to vector<1x64xf32>
    %cst_7 = arith.constant 0.000000e+00 : f32
    %10 = vector.broadcast %cst_7 : f32 to vector<1x64xf32>
    %11 = vector.extract_strided_slice %7 {offsets = [0, 0], sizes = [1, 256], strides = [1, 1]} : vector<8x256xf32> to vector<1x256xf32>
    %cst_8 = arith.constant dense<0.000000e+00> : vector<1x256xf32>
    %12 = tpu.matmul %9, %8, %cst_8 {dimension_numbers = #tpu.dot_dimension_numbers<[1], [0], [0], [1], [0, 0, 1, 1], [], []>} : vector<1x64xf32>, vector<64x256xf32>, vector<1x256xf32> -> vector<1x256xf32>
    %13 = arith.addf %11, %12 : vector<1x256xf32>
    %14 = vector.extract_strided_slice %13 {offsets = [0, 0], sizes = [1, 64], strides = [1, 1]} : vector<1x256xf32> to vector<1x64xf32>
    %15 = arith.negf %14 : vector<1x64xf32>
    %16 = math.exp %15 : vector<1x64xf32>
    %cst_9 = arith.constant 1.000000e+00 : f32
    %17 = vector.broadcast %cst_9 : f32 to vector<1x64xf32>
    %18 = arith.addf %17, %16 : vector<1x64xf32>
    %19 = arith.divf %17, %18 : vector<1x64xf32>
    %20 = vector.extract_strided_slice %13 {offsets = [0, 64], sizes = [1, 64], strides = [1, 1]} : vector<1x256xf32> to vector<1x64xf32>
    %21 = arith.negf %20 : vector<1x64xf32>
    %22 = math.exp %21 : vector<1x64xf32>
    %cst_10 = arith.constant 1.000000e+00 : f32
    %23 = vector.broadcast %cst_10 : f32 to vector<1x64xf32>
    %24 = arith.addf %23, %22 : vector<1x64xf32>
    %25 = arith.divf %23, %24 : vector<1x64xf32>
    %26 = vector.extract_strided_slice %13 {offsets = [0, 128], sizes = [1, 64], strides = [1, 1]} : vector<1x256xf32> to vector<1x64xf32>
    %27 = math.tanh %26 : vector<1x64xf32>
    %28 = vector.extract_strided_slice %13 {offsets = [0, 192], sizes = [1, 64], strides = [1, 1]} : vector<1x256xf32> to vector<1x64xf32>
    %29 = arith.negf %28 : vector<1x64xf32>
    %30 = math.exp %29 : vector<1x64xf32>
    %cst_11 = arith.constant 1.000000e+00 : f32
    %31 = vector.broadcast %cst_11 : f32 to vector<1x64xf32>
    %32 = arith.addf %31, %30 : vector<1x64xf32>
    %33 = arith.divf %31, %32 : vector<1x64xf32>
    %34 = arith.mulf %25, %10 : vector<1x64xf32>
    %35 = arith.mulf %19, %27 : vector<1x64xf32>
    %36 = arith.addf %34, %35 : vector<1x64xf32>
    %37 = math.tanh %36 : vector<1x64xf32>
    %38 = arith.mulf %33, %37 : vector<1x64xf32>
    %39 = vector.extract_strided_slice %7 {offsets = [1, 0], sizes = [1, 256], strides = [1, 1]} : vector<8x256xf32> to vector<1x256xf32>
    %cst_12 = arith.constant dense<0.000000e+00> : vector<1x256xf32>
    %40 = tpu.matmul %38, %8, %cst_12 {dimension_numbers = #tpu.dot_dimension_numbers<[1], [0], [0], [1], [0, 0, 1, 1], [], []>} : vector<1x64xf32>, vector<64x256xf32>, vector<1x256xf32> -> vector<1x256xf32>
    %41 = arith.addf %39, %40 : vector<1x256xf32>
    %42 = vector.extract_strided_slice %41 {offsets = [0, 0], sizes = [1, 64], strides = [1, 1]} : vector<1x256xf32> to vector<1x64xf32>
    %43 = arith.negf %42 : vector<1x64xf32>
    %44 = math.exp %43 : vector<1x64xf32>
    %cst_13 = arith.constant 1.000000e+00 : f32
    %45 = vector.broadcast %cst_13 : f32 to vector<1x64xf32>
    %46 = arith.addf %45, %44 : vector<1x64xf32>
    %47 = arith.divf %45, %46 : vector<1x64xf32>
    %48 = vector.extract_strided_slice %41 {offsets = [0, 64], sizes = [1, 64], strides = [1, 1]} : vector<1x256xf32> to vector<1x64xf32>
    %49 = arith.negf %48 : vector<1x64xf32>
    %50 = math.exp %49 : vector<1x64xf32>
    %cst_14 = arith.constant 1.000000e+00 : f32
    %51 = vector.broadcast %cst_14 : f32 to vector<1x64xf32>
    %52 = arith.addf %51, %50 : vector<1x64xf32>
    %53 = arith.divf %51, %52 : vector<1x64xf32>
    %54 = vector.extract_strided_slice %41 {offsets = [0, 128], sizes = [1, 64], strides = [1, 1]} : vector<1x256xf32> to vector<1x64xf32>
    %55 = math.tanh %54 : vector<1x64xf32>
    %56 = vector.extract_strided_slice %41 {offsets = [0, 192], sizes = [1, 64], strides = [1, 1]} : vector<1x256xf32> to vector<1x64xf32>
    %57 = arith.negf %56 : vector<1x64xf32>
    %58 = math.exp %57 : vector<1x64xf32>
    %cst_15 = arith.constant 1.000000e+00 : f32
    %59 = vector.broadcast %cst_15 : f32 to vector<1x64xf32>
    %60 = arith.addf %59, %58 : vector<1x64xf32>
    %61 = arith.divf %59, %60 : vector<1x64xf32>
    %62 = arith.mulf %53, %36 : vector<1x64xf32>
    %63 = arith.mulf %47, %55 : vector<1x64xf32>
    %64 = arith.addf %62, %63 : vector<1x64xf32>
    %65 = math.tanh %64 : vector<1x64xf32>
    %66 = arith.mulf %61, %65 : vector<1x64xf32>
    %67 = vector.extract_strided_slice %7 {offsets = [2, 0], sizes = [1, 256], strides = [1, 1]} : vector<8x256xf32> to vector<1x256xf32>
    %cst_16 = arith.constant dense<0.000000e+00> : vector<1x256xf32>
    %68 = tpu.matmul %66, %8, %cst_16 {dimension_numbers = #tpu.dot_dimension_numbers<[1], [0], [0], [1], [0, 0, 1, 1], [], []>} : vector<1x64xf32>, vector<64x256xf32>, vector<1x256xf32> -> vector<1x256xf32>
    %69 = arith.addf %67, %68 : vector<1x256xf32>
    %70 = vector.extract_strided_slice %69 {offsets = [0, 0], sizes = [1, 64], strides = [1, 1]} : vector<1x256xf32> to vector<1x64xf32>
    %71 = arith.negf %70 : vector<1x64xf32>
    %72 = math.exp %71 : vector<1x64xf32>
    %cst_17 = arith.constant 1.000000e+00 : f32
    %73 = vector.broadcast %cst_17 : f32 to vector<1x64xf32>
    %74 = arith.addf %73, %72 : vector<1x64xf32>
    %75 = arith.divf %73, %74 : vector<1x64xf32>
    %76 = vector.extract_strided_slice %69 {offsets = [0, 64], sizes = [1, 64], strides = [1, 1]} : vector<1x256xf32> to vector<1x64xf32>
    %77 = arith.negf %76 : vector<1x64xf32>
    %78 = math.exp %77 : vector<1x64xf32>
    %cst_18 = arith.constant 1.000000e+00 : f32
    %79 = vector.broadcast %cst_18 : f32 to vector<1x64xf32>
    %80 = arith.addf %79, %78 : vector<1x64xf32>
    %81 = arith.divf %79, %80 : vector<1x64xf32>
    %82 = vector.extract_strided_slice %69 {offsets = [0, 128], sizes = [1, 64], strides = [1, 1]} : vector<1x256xf32> to vector<1x64xf32>
    %83 = math.tanh %82 : vector<1x64xf32>
    %84 = vector.extract_strided_slice %69 {offsets = [0, 192], sizes = [1, 64], strides = [1, 1]} : vector<1x256xf32> to vector<1x64xf32>
    %85 = arith.negf %84 : vector<1x64xf32>
    %86 = math.exp %85 : vector<1x64xf32>
    %cst_19 = arith.constant 1.000000e+00 : f32
    %87 = vector.broadcast %cst_19 : f32 to vector<1x64xf32>
    %88 = arith.addf %87, %86 : vector<1x64xf32>
    %89 = arith.divf %87, %88 : vector<1x64xf32>
    %90 = arith.mulf %81, %64 : vector<1x64xf32>
    %91 = arith.mulf %75, %83 : vector<1x64xf32>
    %92 = arith.addf %90, %91 : vector<1x64xf32>
    %93 = math.tanh %92 : vector<1x64xf32>
    %94 = arith.mulf %89, %93 : vector<1x64xf32>
    %95 = vector.extract_strided_slice %7 {offsets = [3, 0], sizes = [1, 256], strides = [1, 1]} : vector<8x256xf32> to vector<1x256xf32>
    %cst_20 = arith.constant dense<0.000000e+00> : vector<1x256xf32>
    %96 = tpu.matmul %94, %8, %cst_20 {dimension_numbers = #tpu.dot_dimension_numbers<[1], [0], [0], [1], [0, 0, 1, 1], [], []>} : vector<1x64xf32>, vector<64x256xf32>, vector<1x256xf32> -> vector<1x256xf32>
    %97 = arith.addf %95, %96 : vector<1x256xf32>
    %98 = vector.extract_strided_slice %97 {offsets = [0, 0], sizes = [1, 64], strides = [1, 1]} : vector<1x256xf32> to vector<1x64xf32>
    %99 = arith.negf %98 : vector<1x64xf32>
    %100 = math.exp %99 : vector<1x64xf32>
    %cst_21 = arith.constant 1.000000e+00 : f32
    %101 = vector.broadcast %cst_21 : f32 to vector<1x64xf32>
    %102 = arith.addf %101, %100 : vector<1x64xf32>
    %103 = arith.divf %101, %102 : vector<1x64xf32>
    %104 = vector.extract_strided_slice %97 {offsets = [0, 64], sizes = [1, 64], strides = [1, 1]} : vector<1x256xf32> to vector<1x64xf32>
    %105 = arith.negf %104 : vector<1x64xf32>
    %106 = math.exp %105 : vector<1x64xf32>
    %cst_22 = arith.constant 1.000000e+00 : f32
    %107 = vector.broadcast %cst_22 : f32 to vector<1x64xf32>
    %108 = arith.addf %107, %106 : vector<1x64xf32>
    %109 = arith.divf %107, %108 : vector<1x64xf32>
    %110 = vector.extract_strided_slice %97 {offsets = [0, 128], sizes = [1, 64], strides = [1, 1]} : vector<1x256xf32> to vector<1x64xf32>
    %111 = math.tanh %110 : vector<1x64xf32>
    %112 = vector.extract_strided_slice %97 {offsets = [0, 192], sizes = [1, 64], strides = [1, 1]} : vector<1x256xf32> to vector<1x64xf32>
    %113 = arith.negf %112 : vector<1x64xf32>
    %114 = math.exp %113 : vector<1x64xf32>
    %cst_23 = arith.constant 1.000000e+00 : f32
    %115 = vector.broadcast %cst_23 : f32 to vector<1x64xf32>
    %116 = arith.addf %115, %114 : vector<1x64xf32>
    %117 = arith.divf %115, %116 : vector<1x64xf32>
    %118 = arith.mulf %109, %92 : vector<1x64xf32>
    %119 = arith.mulf %103, %111 : vector<1x64xf32>
    %120 = arith.addf %118, %119 : vector<1x64xf32>
    %121 = math.tanh %120 : vector<1x64xf32>
    %122 = arith.mulf %117, %121 : vector<1x64xf32>
    %123 = vector.extract_strided_slice %7 {offsets = [4, 0], sizes = [1, 256], strides = [1, 1]} : vector<8x256xf32> to vector<1x256xf32>
    %cst_24 = arith.constant dense<0.000000e+00> : vector<1x256xf32>
    %124 = tpu.matmul %122, %8, %cst_24 {dimension_numbers = #tpu.dot_dimension_numbers<[1], [0], [0], [1], [0, 0, 1, 1], [], []>} : vector<1x64xf32>, vector<64x256xf32>, vector<1x256xf32> -> vector<1x256xf32>
    %125 = arith.addf %123, %124 : vector<1x256xf32>
    %126 = vector.extract_strided_slice %125 {offsets = [0, 0], sizes = [1, 64], strides = [1, 1]} : vector<1x256xf32> to vector<1x64xf32>
    %127 = arith.negf %126 : vector<1x64xf32>
    %128 = math.exp %127 : vector<1x64xf32>
    %cst_25 = arith.constant 1.000000e+00 : f32
    %129 = vector.broadcast %cst_25 : f32 to vector<1x64xf32>
    %130 = arith.addf %129, %128 : vector<1x64xf32>
    %131 = arith.divf %129, %130 : vector<1x64xf32>
    %132 = vector.extract_strided_slice %125 {offsets = [0, 64], sizes = [1, 64], strides = [1, 1]} : vector<1x256xf32> to vector<1x64xf32>
    %133 = arith.negf %132 : vector<1x64xf32>
    %134 = math.exp %133 : vector<1x64xf32>
    %cst_26 = arith.constant 1.000000e+00 : f32
    %135 = vector.broadcast %cst_26 : f32 to vector<1x64xf32>
    %136 = arith.addf %135, %134 : vector<1x64xf32>
    %137 = arith.divf %135, %136 : vector<1x64xf32>
    %138 = vector.extract_strided_slice %125 {offsets = [0, 128], sizes = [1, 64], strides = [1, 1]} : vector<1x256xf32> to vector<1x64xf32>
    %139 = math.tanh %138 : vector<1x64xf32>
    %140 = vector.extract_strided_slice %125 {offsets = [0, 192], sizes = [1, 64], strides = [1, 1]} : vector<1x256xf32> to vector<1x64xf32>
    %141 = arith.negf %140 : vector<1x64xf32>
    %142 = math.exp %141 : vector<1x64xf32>
    %cst_27 = arith.constant 1.000000e+00 : f32
    %143 = vector.broadcast %cst_27 : f32 to vector<1x64xf32>
    %144 = arith.addf %143, %142 : vector<1x64xf32>
    %145 = arith.divf %143, %144 : vector<1x64xf32>
    %146 = arith.mulf %137, %120 : vector<1x64xf32>
    %147 = arith.mulf %131, %139 : vector<1x64xf32>
    %148 = arith.addf %146, %147 : vector<1x64xf32>
    %149 = math.tanh %148 : vector<1x64xf32>
    %150 = arith.mulf %145, %149 : vector<1x64xf32>
    %151 = vector.extract_strided_slice %7 {offsets = [5, 0], sizes = [1, 256], strides = [1, 1]} : vector<8x256xf32> to vector<1x256xf32>
    %cst_28 = arith.constant dense<0.000000e+00> : vector<1x256xf32>
    %152 = tpu.matmul %150, %8, %cst_28 {dimension_numbers = #tpu.dot_dimension_numbers<[1], [0], [0], [1], [0, 0, 1, 1], [], []>} : vector<1x64xf32>, vector<64x256xf32>, vector<1x256xf32> -> vector<1x256xf32>
    %153 = arith.addf %151, %152 : vector<1x256xf32>
    %154 = vector.extract_strided_slice %153 {offsets = [0, 0], sizes = [1, 64], strides = [1, 1]} : vector<1x256xf32> to vector<1x64xf32>
    %155 = arith.negf %154 : vector<1x64xf32>
    %156 = math.exp %155 : vector<1x64xf32>
    %cst_29 = arith.constant 1.000000e+00 : f32
    %157 = vector.broadcast %cst_29 : f32 to vector<1x64xf32>
    %158 = arith.addf %157, %156 : vector<1x64xf32>
    %159 = arith.divf %157, %158 : vector<1x64xf32>
    %160 = vector.extract_strided_slice %153 {offsets = [0, 64], sizes = [1, 64], strides = [1, 1]} : vector<1x256xf32> to vector<1x64xf32>
    %161 = arith.negf %160 : vector<1x64xf32>
    %162 = math.exp %161 : vector<1x64xf32>
    %cst_30 = arith.constant 1.000000e+00 : f32
    %163 = vector.broadcast %cst_30 : f32 to vector<1x64xf32>
    %164 = arith.addf %163, %162 : vector<1x64xf32>
    %165 = arith.divf %163, %164 : vector<1x64xf32>
    %166 = vector.extract_strided_slice %153 {offsets = [0, 128], sizes = [1, 64], strides = [1, 1]} : vector<1x256xf32> to vector<1x64xf32>
    %167 = math.tanh %166 : vector<1x64xf32>
    %168 = vector.extract_strided_slice %153 {offsets = [0, 192], sizes = [1, 64], strides = [1, 1]} : vector<1x256xf32> to vector<1x64xf32>
    %169 = arith.negf %168 : vector<1x64xf32>
    %170 = math.exp %169 : vector<1x64xf32>
    %cst_31 = arith.constant 1.000000e+00 : f32
    %171 = vector.broadcast %cst_31 : f32 to vector<1x64xf32>
    %172 = arith.addf %171, %170 : vector<1x64xf32>
    %173 = arith.divf %171, %172 : vector<1x64xf32>
    %174 = arith.mulf %165, %148 : vector<1x64xf32>
    %175 = arith.mulf %159, %167 : vector<1x64xf32>
    %176 = arith.addf %174, %175 : vector<1x64xf32>
    %177 = math.tanh %176 : vector<1x64xf32>
    %178 = arith.mulf %173, %177 : vector<1x64xf32>
    %179 = vector.extract_strided_slice %7 {offsets = [6, 0], sizes = [1, 256], strides = [1, 1]} : vector<8x256xf32> to vector<1x256xf32>
    %cst_32 = arith.constant dense<0.000000e+00> : vector<1x256xf32>
    %180 = tpu.matmul %178, %8, %cst_32 {dimension_numbers = #tpu.dot_dimension_numbers<[1], [0], [0], [1], [0, 0, 1, 1], [], []>} : vector<1x64xf32>, vector<64x256xf32>, vector<1x256xf32> -> vector<1x256xf32>
    %181 = arith.addf %179, %180 : vector<1x256xf32>
    %182 = vector.extract_strided_slice %181 {offsets = [0, 0], sizes = [1, 64], strides = [1, 1]} : vector<1x256xf32> to vector<1x64xf32>
    %183 = arith.negf %182 : vector<1x64xf32>
    %184 = math.exp %183 : vector<1x64xf32>
    %cst_33 = arith.constant 1.000000e+00 : f32
    %185 = vector.broadcast %cst_33 : f32 to vector<1x64xf32>
    %186 = arith.addf %185, %184 : vector<1x64xf32>
    %187 = arith.divf %185, %186 : vector<1x64xf32>
    %188 = vector.extract_strided_slice %181 {offsets = [0, 64], sizes = [1, 64], strides = [1, 1]} : vector<1x256xf32> to vector<1x64xf32>
    %189 = arith.negf %188 : vector<1x64xf32>
    %190 = math.exp %189 : vector<1x64xf32>
    %cst_34 = arith.constant 1.000000e+00 : f32
    %191 = vector.broadcast %cst_34 : f32 to vector<1x64xf32>
    %192 = arith.addf %191, %190 : vector<1x64xf32>
    %193 = arith.divf %191, %192 : vector<1x64xf32>
    %194 = vector.extract_strided_slice %181 {offsets = [0, 128], sizes = [1, 64], strides = [1, 1]} : vector<1x256xf32> to vector<1x64xf32>
    %195 = math.tanh %194 : vector<1x64xf32>
    %196 = vector.extract_strided_slice %181 {offsets = [0, 192], sizes = [1, 64], strides = [1, 1]} : vector<1x256xf32> to vector<1x64xf32>
    %197 = arith.negf %196 : vector<1x64xf32>
    %198 = math.exp %197 : vector<1x64xf32>
    %cst_35 = arith.constant 1.000000e+00 : f32
    %199 = vector.broadcast %cst_35 : f32 to vector<1x64xf32>
    %200 = arith.addf %199, %198 : vector<1x64xf32>
    %201 = arith.divf %199, %200 : vector<1x64xf32>
    %202 = arith.mulf %193, %176 : vector<1x64xf32>
    %203 = arith.mulf %187, %195 : vector<1x64xf32>
    %204 = arith.addf %202, %203 : vector<1x64xf32>
    %205 = math.tanh %204 : vector<1x64xf32>
    %206 = arith.mulf %201, %205 : vector<1x64xf32>
    %207 = vector.extract_strided_slice %7 {offsets = [7, 0], sizes = [1, 256], strides = [1, 1]} : vector<8x256xf32> to vector<1x256xf32>
    %cst_36 = arith.constant dense<0.000000e+00> : vector<1x256xf32>
    %208 = tpu.matmul %206, %8, %cst_36 {dimension_numbers = #tpu.dot_dimension_numbers<[1], [0], [0], [1], [0, 0, 1, 1], [], []>} : vector<1x64xf32>, vector<64x256xf32>, vector<1x256xf32> -> vector<1x256xf32>
    %209 = arith.addf %207, %208 : vector<1x256xf32>
    %210 = vector.extract_strided_slice %209 {offsets = [0, 0], sizes = [1, 64], strides = [1, 1]} : vector<1x256xf32> to vector<1x64xf32>
    %211 = arith.negf %210 : vector<1x64xf32>
    %212 = math.exp %211 : vector<1x64xf32>
    %cst_37 = arith.constant 1.000000e+00 : f32
    %213 = vector.broadcast %cst_37 : f32 to vector<1x64xf32>
    %214 = arith.addf %213, %212 : vector<1x64xf32>
    %215 = arith.divf %213, %214 : vector<1x64xf32>
    %216 = vector.extract_strided_slice %209 {offsets = [0, 64], sizes = [1, 64], strides = [1, 1]} : vector<1x256xf32> to vector<1x64xf32>
    %217 = arith.negf %216 : vector<1x64xf32>
    %218 = math.exp %217 : vector<1x64xf32>
    %cst_38 = arith.constant 1.000000e+00 : f32
    %219 = vector.broadcast %cst_38 : f32 to vector<1x64xf32>
    %220 = arith.addf %219, %218 : vector<1x64xf32>
    %221 = arith.divf %219, %220 : vector<1x64xf32>
    %222 = vector.extract_strided_slice %209 {offsets = [0, 128], sizes = [1, 64], strides = [1, 1]} : vector<1x256xf32> to vector<1x64xf32>
    %223 = math.tanh %222 : vector<1x64xf32>
    %224 = vector.extract_strided_slice %209 {offsets = [0, 192], sizes = [1, 64], strides = [1, 1]} : vector<1x256xf32> to vector<1x64xf32>
    %225 = arith.negf %224 : vector<1x64xf32>
    %226 = math.exp %225 : vector<1x64xf32>
    %cst_39 = arith.constant 1.000000e+00 : f32
    %227 = vector.broadcast %cst_39 : f32 to vector<1x64xf32>
    %228 = arith.addf %227, %226 : vector<1x64xf32>
    %229 = arith.divf %227, %228 : vector<1x64xf32>
    %230 = arith.mulf %221, %204 : vector<1x64xf32>
    %231 = arith.mulf %215, %223 : vector<1x64xf32>
    %232 = arith.addf %230, %231 : vector<1x64xf32>
    %233 = math.tanh %232 : vector<1x64xf32>
    %234 = arith.mulf %229, %233 : vector<1x64xf32>
    %235 = tpu.concatenate %38, %66, %94, %122, %150, %178, %206, %234 in 0 : vector<1x64xf32>, vector<1x64xf32>, vector<1x64xf32>, vector<1x64xf32>, vector<1x64xf32>, vector<1x64xf32>, vector<1x64xf32>, vector<1x64xf32> -> vector<8x64xf32>
    %c0_40 = arith.constant 0 : index
    %c0_41 = arith.constant 0 : index
    %236 = vector.load %arg4[%c0_40, %c0_41] : memref<64x128xf32, #tpu.memory_space<vmem>>, vector<64x128xf32>
    %cst_42 = arith.constant dense<0.000000e+00> : vector<8x128xf32>
    %237 = tpu.matmul %235, %236, %cst_42 {dimension_numbers = #tpu.dot_dimension_numbers<[1], [0], [0], [1], [0, 0, 1, 1], [], []>} : vector<8x64xf32>, vector<64x128xf32>, vector<8x128xf32> -> vector<8x128xf32>
    %c0_43 = arith.constant 0 : index
    %c0_44 = arith.constant 0 : index
    %238 = vector.load %arg6[%c0_43, %c0_44] : memref<1x128xf32, #tpu.memory_space<vmem>>, vector<1x128xf32>
    %239 = vector.broadcast %238 : vector<1x128xf32> to vector<8x128xf32>
    %240 = arith.addf %237, %239 : vector<8x128xf32>
    %c0_45 = arith.constant 0 : index
    %c0_46 = arith.constant 0 : index
    %241 = vector.load %arg5[%c0_45, %c0_46] : memref<32x128xf32, #tpu.memory_space<vmem>>, vector<32x128xf32>
    %cst_47 = arith.constant 0.000000e+00 : f32
    %242 = vector.broadcast %cst_47 : f32 to vector<1x32xf32>
    %cst_48 = arith.constant 0.000000e+00 : f32
    %243 = vector.broadcast %cst_48 : f32 to vector<1x32xf32>
    %244 = vector.extract_strided_slice %240 {offsets = [0, 0], sizes = [1, 128], strides = [1, 1]} : vector<8x128xf32> to vector<1x128xf32>
    %cst_49 = arith.constant dense<0.000000e+00> : vector<1x128xf32>
    %245 = tpu.matmul %242, %241, %cst_49 {dimension_numbers = #tpu.dot_dimension_numbers<[1], [0], [0], [1], [0, 0, 1, 1], [], []>} : vector<1x32xf32>, vector<32x128xf32>, vector<1x128xf32> -> vector<1x128xf32>
    %246 = arith.addf %244, %245 : vector<1x128xf32>
    %247 = vector.extract_strided_slice %246 {offsets = [0, 0], sizes = [1, 32], strides = [1, 1]} : vector<1x128xf32> to vector<1x32xf32>
    %248 = arith.negf %247 : vector<1x32xf32>
    %249 = math.exp %248 : vector<1x32xf32>
    %cst_50 = arith.constant 1.000000e+00 : f32
    %250 = vector.broadcast %cst_50 : f32 to vector<1x32xf32>
    %251 = arith.addf %250, %249 : vector<1x32xf32>
    %252 = arith.divf %250, %251 : vector<1x32xf32>
    %253 = vector.extract_strided_slice %246 {offsets = [0, 32], sizes = [1, 32], strides = [1, 1]} : vector<1x128xf32> to vector<1x32xf32>
    %254 = arith.negf %253 : vector<1x32xf32>
    %255 = math.exp %254 : vector<1x32xf32>
    %cst_51 = arith.constant 1.000000e+00 : f32
    %256 = vector.broadcast %cst_51 : f32 to vector<1x32xf32>
    %257 = arith.addf %256, %255 : vector<1x32xf32>
    %258 = arith.divf %256, %257 : vector<1x32xf32>
    %259 = vector.extract_strided_slice %246 {offsets = [0, 64], sizes = [1, 32], strides = [1, 1]} : vector<1x128xf32> to vector<1x32xf32>
    %260 = math.tanh %259 : vector<1x32xf32>
    %261 = vector.extract_strided_slice %246 {offsets = [0, 96], sizes = [1, 32], strides = [1, 1]} : vector<1x128xf32> to vector<1x32xf32>
    %262 = arith.negf %261 : vector<1x32xf32>
    %263 = math.exp %262 : vector<1x32xf32>
    %cst_52 = arith.constant 1.000000e+00 : f32
    %264 = vector.broadcast %cst_52 : f32 to vector<1x32xf32>
    %265 = arith.addf %264, %263 : vector<1x32xf32>
    %266 = arith.divf %264, %265 : vector<1x32xf32>
    %267 = arith.mulf %258, %243 : vector<1x32xf32>
    %268 = arith.mulf %252, %260 : vector<1x32xf32>
    %269 = arith.addf %267, %268 : vector<1x32xf32>
    %270 = math.tanh %269 : vector<1x32xf32>
    %271 = arith.mulf %266, %270 : vector<1x32xf32>
    %272 = vector.extract_strided_slice %240 {offsets = [1, 0], sizes = [1, 128], strides = [1, 1]} : vector<8x128xf32> to vector<1x128xf32>
    %cst_53 = arith.constant dense<0.000000e+00> : vector<1x128xf32>
    %273 = tpu.matmul %271, %241, %cst_53 {dimension_numbers = #tpu.dot_dimension_numbers<[1], [0], [0], [1], [0, 0, 1, 1], [], []>} : vector<1x32xf32>, vector<32x128xf32>, vector<1x128xf32> -> vector<1x128xf32>
    %274 = arith.addf %272, %273 : vector<1x128xf32>
    %275 = vector.extract_strided_slice %274 {offsets = [0, 0], sizes = [1, 32], strides = [1, 1]} : vector<1x128xf32> to vector<1x32xf32>
    %276 = arith.negf %275 : vector<1x32xf32>
    %277 = math.exp %276 : vector<1x32xf32>
    %cst_54 = arith.constant 1.000000e+00 : f32
    %278 = vector.broadcast %cst_54 : f32 to vector<1x32xf32>
    %279 = arith.addf %278, %277 : vector<1x32xf32>
    %280 = arith.divf %278, %279 : vector<1x32xf32>
    %281 = vector.extract_strided_slice %274 {offsets = [0, 32], sizes = [1, 32], strides = [1, 1]} : vector<1x128xf32> to vector<1x32xf32>
    %282 = arith.negf %281 : vector<1x32xf32>
    %283 = math.exp %282 : vector<1x32xf32>
    %cst_55 = arith.constant 1.000000e+00 : f32
    %284 = vector.broadcast %cst_55 : f32 to vector<1x32xf32>
    %285 = arith.addf %284, %283 : vector<1x32xf32>
    %286 = arith.divf %284, %285 : vector<1x32xf32>
    %287 = vector.extract_strided_slice %274 {offsets = [0, 64], sizes = [1, 32], strides = [1, 1]} : vector<1x128xf32> to vector<1x32xf32>
    %288 = math.tanh %287 : vector<1x32xf32>
    %289 = vector.extract_strided_slice %274 {offsets = [0, 96], sizes = [1, 32], strides = [1, 1]} : vector<1x128xf32> to vector<1x32xf32>
    %290 = arith.negf %289 : vector<1x32xf32>
    %291 = math.exp %290 : vector<1x32xf32>
    %cst_56 = arith.constant 1.000000e+00 : f32
    %292 = vector.broadcast %cst_56 : f32 to vector<1x32xf32>
    %293 = arith.addf %292, %291 : vector<1x32xf32>
    %294 = arith.divf %292, %293 : vector<1x32xf32>
    %295 = arith.mulf %286, %269 : vector<1x32xf32>
    %296 = arith.mulf %280, %288 : vector<1x32xf32>
    %297 = arith.addf %295, %296 : vector<1x32xf32>
    %298 = math.tanh %297 : vector<1x32xf32>
    %299 = arith.mulf %294, %298 : vector<1x32xf32>
    %300 = vector.extract_strided_slice %240 {offsets = [2, 0], sizes = [1, 128], strides = [1, 1]} : vector<8x128xf32> to vector<1x128xf32>
    %cst_57 = arith.constant dense<0.000000e+00> : vector<1x128xf32>
    %301 = tpu.matmul %299, %241, %cst_57 {dimension_numbers = #tpu.dot_dimension_numbers<[1], [0], [0], [1], [0, 0, 1, 1], [], []>} : vector<1x32xf32>, vector<32x128xf32>, vector<1x128xf32> -> vector<1x128xf32>
    %302 = arith.addf %300, %301 : vector<1x128xf32>
    %303 = vector.extract_strided_slice %302 {offsets = [0, 0], sizes = [1, 32], strides = [1, 1]} : vector<1x128xf32> to vector<1x32xf32>
    %304 = arith.negf %303 : vector<1x32xf32>
    %305 = math.exp %304 : vector<1x32xf32>
    %cst_58 = arith.constant 1.000000e+00 : f32
    %306 = vector.broadcast %cst_58 : f32 to vector<1x32xf32>
    %307 = arith.addf %306, %305 : vector<1x32xf32>
    %308 = arith.divf %306, %307 : vector<1x32xf32>
    %309 = vector.extract_strided_slice %302 {offsets = [0, 32], sizes = [1, 32], strides = [1, 1]} : vector<1x128xf32> to vector<1x32xf32>
    %310 = arith.negf %309 : vector<1x32xf32>
    %311 = math.exp %310 : vector<1x32xf32>
    %cst_59 = arith.constant 1.000000e+00 : f32
    %312 = vector.broadcast %cst_59 : f32 to vector<1x32xf32>
    %313 = arith.addf %312, %311 : vector<1x32xf32>
    %314 = arith.divf %312, %313 : vector<1x32xf32>
    %315 = vector.extract_strided_slice %302 {offsets = [0, 64], sizes = [1, 32], strides = [1, 1]} : vector<1x128xf32> to vector<1x32xf32>
    %316 = math.tanh %315 : vector<1x32xf32>
    %317 = vector.extract_strided_slice %302 {offsets = [0, 96], sizes = [1, 32], strides = [1, 1]} : vector<1x128xf32> to vector<1x32xf32>
    %318 = arith.negf %317 : vector<1x32xf32>
    %319 = math.exp %318 : vector<1x32xf32>
    %cst_60 = arith.constant 1.000000e+00 : f32
    %320 = vector.broadcast %cst_60 : f32 to vector<1x32xf32>
    %321 = arith.addf %320, %319 : vector<1x32xf32>
    %322 = arith.divf %320, %321 : vector<1x32xf32>
    %323 = arith.mulf %314, %297 : vector<1x32xf32>
    %324 = arith.mulf %308, %316 : vector<1x32xf32>
    %325 = arith.addf %323, %324 : vector<1x32xf32>
    %326 = math.tanh %325 : vector<1x32xf32>
    %327 = arith.mulf %322, %326 : vector<1x32xf32>
    %328 = vector.extract_strided_slice %240 {offsets = [3, 0], sizes = [1, 128], strides = [1, 1]} : vector<8x128xf32> to vector<1x128xf32>
    %cst_61 = arith.constant dense<0.000000e+00> : vector<1x128xf32>
    %329 = tpu.matmul %327, %241, %cst_61 {dimension_numbers = #tpu.dot_dimension_numbers<[1], [0], [0], [1], [0, 0, 1, 1], [], []>} : vector<1x32xf32>, vector<32x128xf32>, vector<1x128xf32> -> vector<1x128xf32>
    %330 = arith.addf %328, %329 : vector<1x128xf32>
    %331 = vector.extract_strided_slice %330 {offsets = [0, 0], sizes = [1, 32], strides = [1, 1]} : vector<1x128xf32> to vector<1x32xf32>
    %332 = arith.negf %331 : vector<1x32xf32>
    %333 = math.exp %332 : vector<1x32xf32>
    %cst_62 = arith.constant 1.000000e+00 : f32
    %334 = vector.broadcast %cst_62 : f32 to vector<1x32xf32>
    %335 = arith.addf %334, %333 : vector<1x32xf32>
    %336 = arith.divf %334, %335 : vector<1x32xf32>
    %337 = vector.extract_strided_slice %330 {offsets = [0, 32], sizes = [1, 32], strides = [1, 1]} : vector<1x128xf32> to vector<1x32xf32>
    %338 = arith.negf %337 : vector<1x32xf32>
    %339 = math.exp %338 : vector<1x32xf32>
    %cst_63 = arith.constant 1.000000e+00 : f32
    %340 = vector.broadcast %cst_63 : f32 to vector<1x32xf32>
    %341 = arith.addf %340, %339 : vector<1x32xf32>
    %342 = arith.divf %340, %341 : vector<1x32xf32>
    %343 = vector.extract_strided_slice %330 {offsets = [0, 64], sizes = [1, 32], strides = [1, 1]} : vector<1x128xf32> to vector<1x32xf32>
    %344 = math.tanh %343 : vector<1x32xf32>
    %345 = vector.extract_strided_slice %330 {offsets = [0, 96], sizes = [1, 32], strides = [1, 1]} : vector<1x128xf32> to vector<1x32xf32>
    %346 = arith.negf %345 : vector<1x32xf32>
    %347 = math.exp %346 : vector<1x32xf32>
    %cst_64 = arith.constant 1.000000e+00 : f32
    %348 = vector.broadcast %cst_64 : f32 to vector<1x32xf32>
    %349 = arith.addf %348, %347 : vector<1x32xf32>
    %350 = arith.divf %348, %349 : vector<1x32xf32>
    %351 = arith.mulf %342, %325 : vector<1x32xf32>
    %352 = arith.mulf %336, %344 : vector<1x32xf32>
    %353 = arith.addf %351, %352 : vector<1x32xf32>
    %354 = math.tanh %353 : vector<1x32xf32>
    %355 = arith.mulf %350, %354 : vector<1x32xf32>
    %356 = vector.extract_strided_slice %240 {offsets = [4, 0], sizes = [1, 128], strides = [1, 1]} : vector<8x128xf32> to vector<1x128xf32>
    %cst_65 = arith.constant dense<0.000000e+00> : vector<1x128xf32>
    %357 = tpu.matmul %355, %241, %cst_65 {dimension_numbers = #tpu.dot_dimension_numbers<[1], [0], [0], [1], [0, 0, 1, 1], [], []>} : vector<1x32xf32>, vector<32x128xf32>, vector<1x128xf32> -> vector<1x128xf32>
    %358 = arith.addf %356, %357 : vector<1x128xf32>
    %359 = vector.extract_strided_slice %358 {offsets = [0, 0], sizes = [1, 32], strides = [1, 1]} : vector<1x128xf32> to vector<1x32xf32>
    %360 = arith.negf %359 : vector<1x32xf32>
    %361 = math.exp %360 : vector<1x32xf32>
    %cst_66 = arith.constant 1.000000e+00 : f32
    %362 = vector.broadcast %cst_66 : f32 to vector<1x32xf32>
    %363 = arith.addf %362, %361 : vector<1x32xf32>
    %364 = arith.divf %362, %363 : vector<1x32xf32>
    %365 = vector.extract_strided_slice %358 {offsets = [0, 32], sizes = [1, 32], strides = [1, 1]} : vector<1x128xf32> to vector<1x32xf32>
    %366 = arith.negf %365 : vector<1x32xf32>
    %367 = math.exp %366 : vector<1x32xf32>
    %cst_67 = arith.constant 1.000000e+00 : f32
    %368 = vector.broadcast %cst_67 : f32 to vector<1x32xf32>
    %369 = arith.addf %368, %367 : vector<1x32xf32>
    %370 = arith.divf %368, %369 : vector<1x32xf32>
    %371 = vector.extract_strided_slice %358 {offsets = [0, 64], sizes = [1, 32], strides = [1, 1]} : vector<1x128xf32> to vector<1x32xf32>
    %372 = math.tanh %371 : vector<1x32xf32>
    %373 = vector.extract_strided_slice %358 {offsets = [0, 96], sizes = [1, 32], strides = [1, 1]} : vector<1x128xf32> to vector<1x32xf32>
    %374 = arith.negf %373 : vector<1x32xf32>
    %375 = math.exp %374 : vector<1x32xf32>
    %cst_68 = arith.constant 1.000000e+00 : f32
    %376 = vector.broadcast %cst_68 : f32 to vector<1x32xf32>
    %377 = arith.addf %376, %375 : vector<1x32xf32>
    %378 = arith.divf %376, %377 : vector<1x32xf32>
    %379 = arith.mulf %370, %353 : vector<1x32xf32>
    %380 = arith.mulf %364, %372 : vector<1x32xf32>
    %381 = arith.addf %379, %380 : vector<1x32xf32>
    %382 = math.tanh %381 : vector<1x32xf32>
    %383 = arith.mulf %378, %382 : vector<1x32xf32>
    %384 = vector.extract_strided_slice %240 {offsets = [5, 0], sizes = [1, 128], strides = [1, 1]} : vector<8x128xf32> to vector<1x128xf32>
    %cst_69 = arith.constant dense<0.000000e+00> : vector<1x128xf32>
    %385 = tpu.matmul %383, %241, %cst_69 {dimension_numbers = #tpu.dot_dimension_numbers<[1], [0], [0], [1], [0, 0, 1, 1], [], []>} : vector<1x32xf32>, vector<32x128xf32>, vector<1x128xf32> -> vector<1x128xf32>
    %386 = arith.addf %384, %385 : vector<1x128xf32>
    %387 = vector.extract_strided_slice %386 {offsets = [0, 0], sizes = [1, 32], strides = [1, 1]} : vector<1x128xf32> to vector<1x32xf32>
    %388 = arith.negf %387 : vector<1x32xf32>
    %389 = math.exp %388 : vector<1x32xf32>
    %cst_70 = arith.constant 1.000000e+00 : f32
    %390 = vector.broadcast %cst_70 : f32 to vector<1x32xf32>
    %391 = arith.addf %390, %389 : vector<1x32xf32>
    %392 = arith.divf %390, %391 : vector<1x32xf32>
    %393 = vector.extract_strided_slice %386 {offsets = [0, 32], sizes = [1, 32], strides = [1, 1]} : vector<1x128xf32> to vector<1x32xf32>
    %394 = arith.negf %393 : vector<1x32xf32>
    %395 = math.exp %394 : vector<1x32xf32>
    %cst_71 = arith.constant 1.000000e+00 : f32
    %396 = vector.broadcast %cst_71 : f32 to vector<1x32xf32>
    %397 = arith.addf %396, %395 : vector<1x32xf32>
    %398 = arith.divf %396, %397 : vector<1x32xf32>
    %399 = vector.extract_strided_slice %386 {offsets = [0, 64], sizes = [1, 32], strides = [1, 1]} : vector<1x128xf32> to vector<1x32xf32>
    %400 = math.tanh %399 : vector<1x32xf32>
    %401 = vector.extract_strided_slice %386 {offsets = [0, 96], sizes = [1, 32], strides = [1, 1]} : vector<1x128xf32> to vector<1x32xf32>
    %402 = arith.negf %401 : vector<1x32xf32>
    %403 = math.exp %402 : vector<1x32xf32>
    %cst_72 = arith.constant 1.000000e+00 : f32
    %404 = vector.broadcast %cst_72 : f32 to vector<1x32xf32>
    %405 = arith.addf %404, %403 : vector<1x32xf32>
    %406 = arith.divf %404, %405 : vector<1x32xf32>
    %407 = arith.mulf %398, %381 : vector<1x32xf32>
    %408 = arith.mulf %392, %400 : vector<1x32xf32>
    %409 = arith.addf %407, %408 : vector<1x32xf32>
    %410 = math.tanh %409 : vector<1x32xf32>
    %411 = arith.mulf %406, %410 : vector<1x32xf32>
    %412 = vector.extract_strided_slice %240 {offsets = [6, 0], sizes = [1, 128], strides = [1, 1]} : vector<8x128xf32> to vector<1x128xf32>
    %cst_73 = arith.constant dense<0.000000e+00> : vector<1x128xf32>
    %413 = tpu.matmul %411, %241, %cst_73 {dimension_numbers = #tpu.dot_dimension_numbers<[1], [0], [0], [1], [0, 0, 1, 1], [], []>} : vector<1x32xf32>, vector<32x128xf32>, vector<1x128xf32> -> vector<1x128xf32>
    %414 = arith.addf %412, %413 : vector<1x128xf32>
    %415 = vector.extract_strided_slice %414 {offsets = [0, 0], sizes = [1, 32], strides = [1, 1]} : vector<1x128xf32> to vector<1x32xf32>
    %416 = arith.negf %415 : vector<1x32xf32>
    %417 = math.exp %416 : vector<1x32xf32>
    %cst_74 = arith.constant 1.000000e+00 : f32
    %418 = vector.broadcast %cst_74 : f32 to vector<1x32xf32>
    %419 = arith.addf %418, %417 : vector<1x32xf32>
    %420 = arith.divf %418, %419 : vector<1x32xf32>
    %421 = vector.extract_strided_slice %414 {offsets = [0, 32], sizes = [1, 32], strides = [1, 1]} : vector<1x128xf32> to vector<1x32xf32>
    %422 = arith.negf %421 : vector<1x32xf32>
    %423 = math.exp %422 : vector<1x32xf32>
    %cst_75 = arith.constant 1.000000e+00 : f32
    %424 = vector.broadcast %cst_75 : f32 to vector<1x32xf32>
    %425 = arith.addf %424, %423 : vector<1x32xf32>
    %426 = arith.divf %424, %425 : vector<1x32xf32>
    %427 = vector.extract_strided_slice %414 {offsets = [0, 64], sizes = [1, 32], strides = [1, 1]} : vector<1x128xf32> to vector<1x32xf32>
    %428 = math.tanh %427 : vector<1x32xf32>
    %429 = vector.extract_strided_slice %414 {offsets = [0, 96], sizes = [1, 32], strides = [1, 1]} : vector<1x128xf32> to vector<1x32xf32>
    %430 = arith.negf %429 : vector<1x32xf32>
    %431 = math.exp %430 : vector<1x32xf32>
    %cst_76 = arith.constant 1.000000e+00 : f32
    %432 = vector.broadcast %cst_76 : f32 to vector<1x32xf32>
    %433 = arith.addf %432, %431 : vector<1x32xf32>
    %434 = arith.divf %432, %433 : vector<1x32xf32>
    %435 = arith.mulf %426, %409 : vector<1x32xf32>
    %436 = arith.mulf %420, %428 : vector<1x32xf32>
    %437 = arith.addf %435, %436 : vector<1x32xf32>
    %438 = math.tanh %437 : vector<1x32xf32>
    %439 = arith.mulf %434, %438 : vector<1x32xf32>
    %440 = vector.extract_strided_slice %240 {offsets = [7, 0], sizes = [1, 128], strides = [1, 1]} : vector<8x128xf32> to vector<1x128xf32>
    %cst_77 = arith.constant dense<0.000000e+00> : vector<1x128xf32>
    %441 = tpu.matmul %439, %241, %cst_77 {dimension_numbers = #tpu.dot_dimension_numbers<[1], [0], [0], [1], [0, 0, 1, 1], [], []>} : vector<1x32xf32>, vector<32x128xf32>, vector<1x128xf32> -> vector<1x128xf32>
    %442 = arith.addf %440, %441 : vector<1x128xf32>
    %443 = vector.extract_strided_slice %442 {offsets = [0, 0], sizes = [1, 32], strides = [1, 1]} : vector<1x128xf32> to vector<1x32xf32>
    %444 = arith.negf %443 : vector<1x32xf32>
    %445 = math.exp %444 : vector<1x32xf32>
    %cst_78 = arith.constant 1.000000e+00 : f32
    %446 = vector.broadcast %cst_78 : f32 to vector<1x32xf32>
    %447 = arith.addf %446, %445 : vector<1x32xf32>
    %448 = arith.divf %446, %447 : vector<1x32xf32>
    %449 = vector.extract_strided_slice %442 {offsets = [0, 32], sizes = [1, 32], strides = [1, 1]} : vector<1x128xf32> to vector<1x32xf32>
    %450 = arith.negf %449 : vector<1x32xf32>
    %451 = math.exp %450 : vector<1x32xf32>
    %cst_79 = arith.constant 1.000000e+00 : f32
    %452 = vector.broadcast %cst_79 : f32 to vector<1x32xf32>
    %453 = arith.addf %452, %451 : vector<1x32xf32>
    %454 = arith.divf %452, %453 : vector<1x32xf32>
    %455 = vector.extract_strided_slice %442 {offsets = [0, 64], sizes = [1, 32], strides = [1, 1]} : vector<1x128xf32> to vector<1x32xf32>
    %456 = math.tanh %455 : vector<1x32xf32>
    %457 = vector.extract_strided_slice %442 {offsets = [0, 96], sizes = [1, 32], strides = [1, 1]} : vector<1x128xf32> to vector<1x32xf32>
    %458 = arith.negf %457 : vector<1x32xf32>
    %459 = math.exp %458 : vector<1x32xf32>
    %cst_80 = arith.constant 1.000000e+00 : f32
    %460 = vector.broadcast %cst_80 : f32 to vector<1x32xf32>
    %461 = arith.addf %460, %459 : vector<1x32xf32>
    %462 = arith.divf %460, %461 : vector<1x32xf32>
    %463 = arith.mulf %454, %437 : vector<1x32xf32>
    %464 = arith.mulf %448, %456 : vector<1x32xf32>
    %465 = arith.addf %463, %464 : vector<1x32xf32>
    %466 = math.tanh %465 : vector<1x32xf32>
    %467 = arith.mulf %462, %466 : vector<1x32xf32>
    %c0_81 = arith.constant 0 : index
    %c0_82 = arith.constant 0 : index
    %468 = vector.load %arg15[%c0_81, %c0_82] : memref<1x32xf32, #tpu.memory_space<vmem>>, vector<1x32xf32>
    tpu.vector_store %arg15[%c0_81, %c0_82], %467 {strides = array<i32>} : memref<1x32xf32, #tpu.memory_space<vmem>>, vector<1x32xf32>,
    %c0_83 = arith.constant 0 : index
    %c0_84 = arith.constant 0 : index
    %469 = vector.load %arg7[%c0_83, %c0_84] : memref<32x128xf32, #tpu.memory_space<vmem>>, vector<32x128xf32>
    %cst_85 = arith.constant dense<0.000000e+00> : vector<1x128xf32>
    %470 = tpu.matmul %467, %469, %cst_85 {dimension_numbers = #tpu.dot_dimension_numbers<[1], [0], [0], [1], [0, 0, 1, 1], [], []>} : vector<1x32xf32>, vector<32x128xf32>, vector<1x128xf32> -> vector<1x128xf32>
    %c0_86 = arith.constant 0 : index
    %c0_87 = arith.constant 0 : index
    %471 = vector.load %arg9[%c0_86, %c0_87] : memref<1x128xf32, #tpu.memory_space<vmem>>, vector<1x128xf32>
    %472 = arith.addf %470, %471 : vector<1x128xf32>
    %c0_88 = arith.constant 0 : index
    %c0_89 = arith.constant 0 : index
    %473 = vector.load %arg8[%c0_88, %c0_89] : memref<32x128xf32, #tpu.memory_space<vmem>>, vector<32x128xf32>
    %cst_90 = arith.constant 0.000000e+00 : f32
    %474 = vector.broadcast %cst_90 : f32 to vector<1x32xf32>
    %cst_91 = arith.constant 0.000000e+00 : f32
    %475 = vector.broadcast %cst_91 : f32 to vector<1x32xf32>
    %cst_92 = arith.constant dense<0.000000e+00> : vector<1x128xf32>
    %476 = tpu.matmul %474, %473, %cst_92 {dimension_numbers = #tpu.dot_dimension_numbers<[1], [0], [0], [1], [0, 0, 1, 1], [], []>} : vector<1x32xf32>, vector<32x128xf32>, vector<1x128xf32> -> vector<1x128xf32>
    %477 = arith.addf %472, %476 : vector<1x128xf32>
    %478 = vector.extract_strided_slice %477 {offsets = [0, 0], sizes = [1, 32], strides = [1, 1]} : vector<1x128xf32> to vector<1x32xf32>
    %479 = arith.negf %478 : vector<1x32xf32>
    %480 = math.exp %479 : vector<1x32xf32>
    %cst_93 = arith.constant 1.000000e+00 : f32
    %481 = vector.broadcast %cst_93 : f32 to vector<1x32xf32>
    %482 = arith.addf %481, %480 : vector<1x32xf32>
    %483 = arith.divf %481, %482 : vector<1x32xf32>
    %484 = vector.extract_strided_slice %477 {offsets = [0, 32], sizes = [1, 32], strides = [1, 1]} : vector<1x128xf32> to vector<1x32xf32>
    %485 = arith.negf %484 : vector<1x32xf32>
    %486 = math.exp %485 : vector<1x32xf32>
    %cst_94 = arith.constant 1.000000e+00 : f32
    %487 = vector.broadcast %cst_94 : f32 to vector<1x32xf32>
    %488 = arith.addf %487, %486 : vector<1x32xf32>
    %489 = arith.divf %487, %488 : vector<1x32xf32>
    %490 = vector.extract_strided_slice %477 {offsets = [0, 64], sizes = [1, 32], strides = [1, 1]} : vector<1x128xf32> to vector<1x32xf32>
    %491 = math.tanh %490 : vector<1x32xf32>
    %492 = vector.extract_strided_slice %477 {offsets = [0, 96], sizes = [1, 32], strides = [1, 1]} : vector<1x128xf32> to vector<1x32xf32>
    %493 = arith.negf %492 : vector<1x32xf32>
    %494 = math.exp %493 : vector<1x32xf32>
    %cst_95 = arith.constant 1.000000e+00 : f32
    %495 = vector.broadcast %cst_95 : f32 to vector<1x32xf32>
    %496 = arith.addf %495, %494 : vector<1x32xf32>
    %497 = arith.divf %495, %496 : vector<1x32xf32>
    %498 = arith.mulf %489, %475 : vector<1x32xf32>
    %499 = arith.mulf %483, %491 : vector<1x32xf32>
    %500 = arith.addf %498, %499 : vector<1x32xf32>
    %501 = math.tanh %500 : vector<1x32xf32>
    %502 = arith.mulf %497, %501 : vector<1x32xf32>
    %cst_96 = arith.constant dense<0.000000e+00> : vector<1x128xf32>
    %503 = tpu.matmul %502, %473, %cst_96 {dimension_numbers = #tpu.dot_dimension_numbers<[1], [0], [0], [1], [0, 0, 1, 1], [], []>} : vector<1x32xf32>, vector<32x128xf32>, vector<1x128xf32> -> vector<1x128xf32>
    %504 = arith.addf %472, %503 : vector<1x128xf32>
    %505 = vector.extract_strided_slice %504 {offsets = [0, 0], sizes = [1, 32], strides = [1, 1]} : vector<1x128xf32> to vector<1x32xf32>
    %506 = arith.negf %505 : vector<1x32xf32>
    %507 = math.exp %506 : vector<1x32xf32>
    %cst_97 = arith.constant 1.000000e+00 : f32
    %508 = vector.broadcast %cst_97 : f32 to vector<1x32xf32>
    %509 = arith.addf %508, %507 : vector<1x32xf32>
    %510 = arith.divf %508, %509 : vector<1x32xf32>
    %511 = vector.extract_strided_slice %504 {offsets = [0, 32], sizes = [1, 32], strides = [1, 1]} : vector<1x128xf32> to vector<1x32xf32>
    %512 = arith.negf %511 : vector<1x32xf32>
    %513 = math.exp %512 : vector<1x32xf32>
    %cst_98 = arith.constant 1.000000e+00 : f32
    %514 = vector.broadcast %cst_98 : f32 to vector<1x32xf32>
    %515 = arith.addf %514, %513 : vector<1x32xf32>
    %516 = arith.divf %514, %515 : vector<1x32xf32>
    %517 = vector.extract_strided_slice %504 {offsets = [0, 64], sizes = [1, 32], strides = [1, 1]} : vector<1x128xf32> to vector<1x32xf32>
    %518 = math.tanh %517 : vector<1x32xf32>
    %519 = vector.extract_strided_slice %504 {offsets = [0, 96], sizes = [1, 32], strides = [1, 1]} : vector<1x128xf32> to vector<1x32xf32>
    %520 = arith.negf %519 : vector<1x32xf32>
    %521 = math.exp %520 : vector<1x32xf32>
    %cst_99 = arith.constant 1.000000e+00 : f32
    %522 = vector.broadcast %cst_99 : f32 to vector<1x32xf32>
    %523 = arith.addf %522, %521 : vector<1x32xf32>
    %524 = arith.divf %522, %523 : vector<1x32xf32>
    %525 = arith.mulf %516, %500 : vector<1x32xf32>
    %526 = arith.mulf %510, %518 : vector<1x32xf32>
    %527 = arith.addf %525, %526 : vector<1x32xf32>
    %528 = math.tanh %527 : vector<1x32xf32>
    %529 = arith.mulf %524, %528 : vector<1x32xf32>
    %cst_100 = arith.constant dense<0.000000e+00> : vector<1x128xf32>
    %530 = tpu.matmul %529, %473, %cst_100 {dimension_numbers = #tpu.dot_dimension_numbers<[1], [0], [0], [1], [0, 0, 1, 1], [], []>} : vector<1x32xf32>, vector<32x128xf32>, vector<1x128xf32> -> vector<1x128xf32>
    %531 = arith.addf %472, %530 : vector<1x128xf32>
    %532 = vector.extract_strided_slice %531 {offsets = [0, 0], sizes = [1, 32], strides = [1, 1]} : vector<1x128xf32> to vector<1x32xf32>
    %533 = arith.negf %532 : vector<1x32xf32>
    %534 = math.exp %533 : vector<1x32xf32>
    %cst_101 = arith.constant 1.000000e+00 : f32
    %535 = vector.broadcast %cst_101 : f32 to vector<1x32xf32>
    %536 = arith.addf %535, %534 : vector<1x32xf32>
    %537 = arith.divf %535, %536 : vector<1x32xf32>
    %538 = vector.extract_strided_slice %531 {offsets = [0, 32], sizes = [1, 32], strides = [1, 1]} : vector<1x128xf32> to vector<1x32xf32>
    %539 = arith.negf %538 : vector<1x32xf32>
    %540 = math.exp %539 : vector<1x32xf32>
    %cst_102 = arith.constant 1.000000e+00 : f32
    %541 = vector.broadcast %cst_102 : f32 to vector<1x32xf32>
    %542 = arith.addf %541, %540 : vector<1x32xf32>
    %543 = arith.divf %541, %542 : vector<1x32xf32>
    %544 = vector.extract_strided_slice %531 {offsets = [0, 64], sizes = [1, 32], strides = [1, 1]} : vector<1x128xf32> to vector<1x32xf32>
    %545 = math.tanh %544 : vector<1x32xf32>
    %546 = vector.extract_strided_slice %531 {offsets = [0, 96], sizes = [1, 32], strides = [1, 1]} : vector<1x128xf32> to vector<1x32xf32>
    %547 = arith.negf %546 : vector<1x32xf32>
    %548 = math.exp %547 : vector<1x32xf32>
    %cst_103 = arith.constant 1.000000e+00 : f32
    %549 = vector.broadcast %cst_103 : f32 to vector<1x32xf32>
    %550 = arith.addf %549, %548 : vector<1x32xf32>
    %551 = arith.divf %549, %550 : vector<1x32xf32>
    %552 = arith.mulf %543, %527 : vector<1x32xf32>
    %553 = arith.mulf %537, %545 : vector<1x32xf32>
    %554 = arith.addf %552, %553 : vector<1x32xf32>
    %555 = math.tanh %554 : vector<1x32xf32>
    %556 = arith.mulf %551, %555 : vector<1x32xf32>
    %cst_104 = arith.constant dense<0.000000e+00> : vector<1x128xf32>
    %557 = tpu.matmul %556, %473, %cst_104 {dimension_numbers = #tpu.dot_dimension_numbers<[1], [0], [0], [1], [0, 0, 1, 1], [], []>} : vector<1x32xf32>, vector<32x128xf32>, vector<1x128xf32> -> vector<1x128xf32>
    %558 = arith.addf %472, %557 : vector<1x128xf32>
    %559 = vector.extract_strided_slice %558 {offsets = [0, 0], sizes = [1, 32], strides = [1, 1]} : vector<1x128xf32> to vector<1x32xf32>
    %560 = arith.negf %559 : vector<1x32xf32>
    %561 = math.exp %560 : vector<1x32xf32>
    %cst_105 = arith.constant 1.000000e+00 : f32
    %562 = vector.broadcast %cst_105 : f32 to vector<1x32xf32>
    %563 = arith.addf %562, %561 : vector<1x32xf32>
    %564 = arith.divf %562, %563 : vector<1x32xf32>
    %565 = vector.extract_strided_slice %558 {offsets = [0, 32], sizes = [1, 32], strides = [1, 1]} : vector<1x128xf32> to vector<1x32xf32>
    %566 = arith.negf %565 : vector<1x32xf32>
    %567 = math.exp %566 : vector<1x32xf32>
    %cst_106 = arith.constant 1.000000e+00 : f32
    %568 = vector.broadcast %cst_106 : f32 to vector<1x32xf32>
    %569 = arith.addf %568, %567 : vector<1x32xf32>
    %570 = arith.divf %568, %569 : vector<1x32xf32>
    %571 = vector.extract_strided_slice %558 {offsets = [0, 64], sizes = [1, 32], strides = [1, 1]} : vector<1x128xf32> to vector<1x32xf32>
    %572 = math.tanh %571 : vector<1x32xf32>
    %573 = vector.extract_strided_slice %558 {offsets = [0, 96], sizes = [1, 32], strides = [1, 1]} : vector<1x128xf32> to vector<1x32xf32>
    %574 = arith.negf %573 : vector<1x32xf32>
    %575 = math.exp %574 : vector<1x32xf32>
    %cst_107 = arith.constant 1.000000e+00 : f32
    %576 = vector.broadcast %cst_107 : f32 to vector<1x32xf32>
    %577 = arith.addf %576, %575 : vector<1x32xf32>
    %578 = arith.divf %576, %577 : vector<1x32xf32>
    %579 = arith.mulf %570, %554 : vector<1x32xf32>
    %580 = arith.mulf %564, %572 : vector<1x32xf32>
    %581 = arith.addf %579, %580 : vector<1x32xf32>
    %582 = math.tanh %581 : vector<1x32xf32>
    %583 = arith.mulf %578, %582 : vector<1x32xf32>
    %cst_108 = arith.constant dense<0.000000e+00> : vector<1x128xf32>
    %584 = tpu.matmul %583, %473, %cst_108 {dimension_numbers = #tpu.dot_dimension_numbers<[1], [0], [0], [1], [0, 0, 1, 1], [], []>} : vector<1x32xf32>, vector<32x128xf32>, vector<1x128xf32> -> vector<1x128xf32>
    %585 = arith.addf %472, %584 : vector<1x128xf32>
    %586 = vector.extract_strided_slice %585 {offsets = [0, 0], sizes = [1, 32], strides = [1, 1]} : vector<1x128xf32> to vector<1x32xf32>
    %587 = arith.negf %586 : vector<1x32xf32>
    %588 = math.exp %587 : vector<1x32xf32>
    %cst_109 = arith.constant 1.000000e+00 : f32
    %589 = vector.broadcast %cst_109 : f32 to vector<1x32xf32>
    %590 = arith.addf %589, %588 : vector<1x32xf32>
    %591 = arith.divf %589, %590 : vector<1x32xf32>
    %592 = vector.extract_strided_slice %585 {offsets = [0, 32], sizes = [1, 32], strides = [1, 1]} : vector<1x128xf32> to vector<1x32xf32>
    %593 = arith.negf %592 : vector<1x32xf32>
    %594 = math.exp %593 : vector<1x32xf32>
    %cst_110 = arith.constant 1.000000e+00 : f32
    %595 = vector.broadcast %cst_110 : f32 to vector<1x32xf32>
    %596 = arith.addf %595, %594 : vector<1x32xf32>
    %597 = arith.divf %595, %596 : vector<1x32xf32>
    %598 = vector.extract_strided_slice %585 {offsets = [0, 64], sizes = [1, 32], strides = [1, 1]} : vector<1x128xf32> to vector<1x32xf32>
    %599 = math.tanh %598 : vector<1x32xf32>
    %600 = vector.extract_strided_slice %585 {offsets = [0, 96], sizes = [1, 32], strides = [1, 1]} : vector<1x128xf32> to vector<1x32xf32>
    %601 = arith.negf %600 : vector<1x32xf32>
    %602 = math.exp %601 : vector<1x32xf32>
    %cst_111 = arith.constant 1.000000e+00 : f32
    %603 = vector.broadcast %cst_111 : f32 to vector<1x32xf32>
    %604 = arith.addf %603, %602 : vector<1x32xf32>
    %605 = arith.divf %603, %604 : vector<1x32xf32>
    %606 = arith.mulf %597, %581 : vector<1x32xf32>
    %607 = arith.mulf %591, %599 : vector<1x32xf32>
    %608 = arith.addf %606, %607 : vector<1x32xf32>
    %609 = math.tanh %608 : vector<1x32xf32>
    %610 = arith.mulf %605, %609 : vector<1x32xf32>
    %cst_112 = arith.constant dense<0.000000e+00> : vector<1x128xf32>
    %611 = tpu.matmul %610, %473, %cst_112 {dimension_numbers = #tpu.dot_dimension_numbers<[1], [0], [0], [1], [0, 0, 1, 1], [], []>} : vector<1x32xf32>, vector<32x128xf32>, vector<1x128xf32> -> vector<1x128xf32>
    %612 = arith.addf %472, %611 : vector<1x128xf32>
    %613 = vector.extract_strided_slice %612 {offsets = [0, 0], sizes = [1, 32], strides = [1, 1]} : vector<1x128xf32> to vector<1x32xf32>
    %614 = arith.negf %613 : vector<1x32xf32>
    %615 = math.exp %614 : vector<1x32xf32>
    %cst_113 = arith.constant 1.000000e+00 : f32
    %616 = vector.broadcast %cst_113 : f32 to vector<1x32xf32>
    %617 = arith.addf %616, %615 : vector<1x32xf32>
    %618 = arith.divf %616, %617 : vector<1x32xf32>
    %619 = vector.extract_strided_slice %612 {offsets = [0, 32], sizes = [1, 32], strides = [1, 1]} : vector<1x128xf32> to vector<1x32xf32>
    %620 = arith.negf %619 : vector<1x32xf32>
    %621 = math.exp %620 : vector<1x32xf32>
    %cst_114 = arith.constant 1.000000e+00 : f32
    %622 = vector.broadcast %cst_114 : f32 to vector<1x32xf32>
    %623 = arith.addf %622, %621 : vector<1x32xf32>
    %624 = arith.divf %622, %623 : vector<1x32xf32>
    %625 = vector.extract_strided_slice %612 {offsets = [0, 64], sizes = [1, 32], strides = [1, 1]} : vector<1x128xf32> to vector<1x32xf32>
    %626 = math.tanh %625 : vector<1x32xf32>
    %627 = vector.extract_strided_slice %612 {offsets = [0, 96], sizes = [1, 32], strides = [1, 1]} : vector<1x128xf32> to vector<1x32xf32>
    %628 = arith.negf %627 : vector<1x32xf32>
    %629 = math.exp %628 : vector<1x32xf32>
    %cst_115 = arith.constant 1.000000e+00 : f32
    %630 = vector.broadcast %cst_115 : f32 to vector<1x32xf32>
    %631 = arith.addf %630, %629 : vector<1x32xf32>
    %632 = arith.divf %630, %631 : vector<1x32xf32>
    %633 = arith.mulf %624, %608 : vector<1x32xf32>
    %634 = arith.mulf %618, %626 : vector<1x32xf32>
    %635 = arith.addf %633, %634 : vector<1x32xf32>
    %636 = math.tanh %635 : vector<1x32xf32>
    %637 = arith.mulf %632, %636 : vector<1x32xf32>
    %cst_116 = arith.constant dense<0.000000e+00> : vector<1x128xf32>
    %638 = tpu.matmul %637, %473, %cst_116 {dimension_numbers = #tpu.dot_dimension_numbers<[1], [0], [0], [1], [0, 0, 1, 1], [], []>} : vector<1x32xf32>, vector<32x128xf32>, vector<1x128xf32> -> vector<1x128xf32>
    %639 = arith.addf %472, %638 : vector<1x128xf32>
    %640 = vector.extract_strided_slice %639 {offsets = [0, 0], sizes = [1, 32], strides = [1, 1]} : vector<1x128xf32> to vector<1x32xf32>
    %641 = arith.negf %640 : vector<1x32xf32>
    %642 = math.exp %641 : vector<1x32xf32>
    %cst_117 = arith.constant 1.000000e+00 : f32
    %643 = vector.broadcast %cst_117 : f32 to vector<1x32xf32>
    %644 = arith.addf %643, %642 : vector<1x32xf32>
    %645 = arith.divf %643, %644 : vector<1x32xf32>
    %646 = vector.extract_strided_slice %639 {offsets = [0, 32], sizes = [1, 32], strides = [1, 1]} : vector<1x128xf32> to vector<1x32xf32>
    %647 = arith.negf %646 : vector<1x32xf32>
    %648 = math.exp %647 : vector<1x32xf32>
    %cst_118 = arith.constant 1.000000e+00 : f32
    %649 = vector.broadcast %cst_118 : f32 to vector<1x32xf32>
    %650 = arith.addf %649, %648 : vector<1x32xf32>
    %651 = arith.divf %649, %650 : vector<1x32xf32>
    %652 = vector.extract_strided_slice %639 {offsets = [0, 64], sizes = [1, 32], strides = [1, 1]} : vector<1x128xf32> to vector<1x32xf32>
    %653 = math.tanh %652 : vector<1x32xf32>
    %654 = vector.extract_strided_slice %639 {offsets = [0, 96], sizes = [1, 32], strides = [1, 1]} : vector<1x128xf32> to vector<1x32xf32>
    %655 = arith.negf %654 : vector<1x32xf32>
    %656 = math.exp %655 : vector<1x32xf32>
    %cst_119 = arith.constant 1.000000e+00 : f32
    %657 = vector.broadcast %cst_119 : f32 to vector<1x32xf32>
    %658 = arith.addf %657, %656 : vector<1x32xf32>
    %659 = arith.divf %657, %658 : vector<1x32xf32>
    %660 = arith.mulf %651, %635 : vector<1x32xf32>
    %661 = arith.mulf %645, %653 : vector<1x32xf32>
    %662 = arith.addf %660, %661 : vector<1x32xf32>
    %663 = math.tanh %662 : vector<1x32xf32>
    %664 = arith.mulf %659, %663 : vector<1x32xf32>
    %cst_120 = arith.constant dense<0.000000e+00> : vector<1x128xf32>
    %665 = tpu.matmul %664, %473, %cst_120 {dimension_numbers = #tpu.dot_dimension_numbers<[1], [0], [0], [1], [0, 0, 1, 1], [], []>} : vector<1x32xf32>, vector<32x128xf32>, vector<1x128xf32> -> vector<1x128xf32>
    %666 = arith.addf %472, %665 : vector<1x128xf32>
    %667 = vector.extract_strided_slice %666 {offsets = [0, 0], sizes = [1, 32], strides = [1, 1]} : vector<1x128xf32> to vector<1x32xf32>
    %668 = arith.negf %667 : vector<1x32xf32>
    %669 = math.exp %668 : vector<1x32xf32>
    %cst_121 = arith.constant 1.000000e+00 : f32
    %670 = vector.broadcast %cst_121 : f32 to vector<1x32xf32>
    %671 = arith.addf %670, %669 : vector<1x32xf32>
    %672 = arith.divf %670, %671 : vector<1x32xf32>
    %673 = vector.extract_strided_slice %666 {offsets = [0, 32], sizes = [1, 32], strides = [1, 1]} : vector<1x128xf32> to vector<1x32xf32>
    %674 = arith.negf %673 : vector<1x32xf32>
    %675 = math.exp %674 : vector<1x32xf32>
    %cst_122 = arith.constant 1.000000e+00 : f32
    %676 = vector.broadcast %cst_122 : f32 to vector<1x32xf32>
    %677 = arith.addf %676, %675 : vector<1x32xf32>
    %678 = arith.divf %676, %677 : vector<1x32xf32>
    %679 = vector.extract_strided_slice %666 {offsets = [0, 64], sizes = [1, 32], strides = [1, 1]} : vector<1x128xf32> to vector<1x32xf32>
    %680 = math.tanh %679 : vector<1x32xf32>
    %681 = vector.extract_strided_slice %666 {offsets = [0, 96], sizes = [1, 32], strides = [1, 1]} : vector<1x128xf32> to vector<1x32xf32>
    %682 = arith.negf %681 : vector<1x32xf32>
    %683 = math.exp %682 : vector<1x32xf32>
    %cst_123 = arith.constant 1.000000e+00 : f32
    %684 = vector.broadcast %cst_123 : f32 to vector<1x32xf32>
    %685 = arith.addf %684, %683 : vector<1x32xf32>
    %686 = arith.divf %684, %685 : vector<1x32xf32>
    %687 = arith.mulf %678, %662 : vector<1x32xf32>
    %688 = arith.mulf %672, %680 : vector<1x32xf32>
    %689 = arith.addf %687, %688 : vector<1x32xf32>
    %690 = math.tanh %689 : vector<1x32xf32>
    %691 = arith.mulf %686, %690 : vector<1x32xf32>
    %692 = tpu.concatenate %502, %529, %556, %583, %610, %637, %664, %691 in 0 : vector<1x32xf32>, vector<1x32xf32>, vector<1x32xf32>, vector<1x32xf32>, vector<1x32xf32>, vector<1x32xf32>, vector<1x32xf32>, vector<1x32xf32> -> vector<8x32xf32>
    %c0_124 = arith.constant 0 : index
    %c0_125 = arith.constant 0 : index
    %693 = vector.load %arg10[%c0_124, %c0_125] : memref<32x256xf32, #tpu.memory_space<vmem>>, vector<32x256xf32>
    %cst_126 = arith.constant dense<0.000000e+00> : vector<8x256xf32>
    %694 = tpu.matmul %692, %693, %cst_126 {dimension_numbers = #tpu.dot_dimension_numbers<[1], [0], [0], [1], [0, 0, 1, 1], [], []>} : vector<8x32xf32>, vector<32x256xf32>, vector<8x256xf32> -> vector<8x256xf32>
    %c0_127 = arith.constant 0 : index
    %c0_128 = arith.constant 0 : index
    %695 = vector.load %arg12[%c0_127, %c0_128] : memref<1x256xf32, #tpu.memory_space<vmem>>, vector<1x256xf32>
    %696 = vector.broadcast %695 : vector<1x256xf32> to vector<8x256xf32>
    %697 = arith.addf %694, %696 : vector<8x256xf32>
    %c0_129 = arith.constant 0 : index
    %c0_130 = arith.constant 0 : index
    %698 = vector.load %arg11[%c0_129, %c0_130] : memref<64x256xf32, #tpu.memory_space<vmem>>, vector<64x256xf32>
    %cst_131 = arith.constant 0.000000e+00 : f32
    %699 = vector.broadcast %cst_131 : f32 to vector<1x64xf32>
    %cst_132 = arith.constant 0.000000e+00 : f32
    %700 = vector.broadcast %cst_132 : f32 to vector<1x64xf32>
    %701 = vector.extract_strided_slice %697 {offsets = [0, 0], sizes = [1, 256], strides = [1, 1]} : vector<8x256xf32> to vector<1x256xf32>
    %cst_133 = arith.constant dense<0.000000e+00> : vector<1x256xf32>
    %702 = tpu.matmul %699, %698, %cst_133 {dimension_numbers = #tpu.dot_dimension_numbers<[1], [0], [0], [1], [0, 0, 1, 1], [], []>} : vector<1x64xf32>, vector<64x256xf32>, vector<1x256xf32> -> vector<1x256xf32>
    %703 = arith.addf %701, %702 : vector<1x256xf32>
    %704 = vector.extract_strided_slice %703 {offsets = [0, 0], sizes = [1, 64], strides = [1, 1]} : vector<1x256xf32> to vector<1x64xf32>
    %705 = arith.negf %704 : vector<1x64xf32>
    %706 = math.exp %705 : vector<1x64xf32>
    %cst_134 = arith.constant 1.000000e+00 : f32
    %707 = vector.broadcast %cst_134 : f32 to vector<1x64xf32>
    %708 = arith.addf %707, %706 : vector<1x64xf32>
    %709 = arith.divf %707, %708 : vector<1x64xf32>
    %710 = vector.extract_strided_slice %703 {offsets = [0, 64], sizes = [1, 64], strides = [1, 1]} : vector<1x256xf32> to vector<1x64xf32>
    %711 = arith.negf %710 : vector<1x64xf32>
    %712 = math.exp %711 : vector<1x64xf32>
    %cst_135 = arith.constant 1.000000e+00 : f32
    %713 = vector.broadcast %cst_135 : f32 to vector<1x64xf32>
    %714 = arith.addf %713, %712 : vector<1x64xf32>
    %715 = arith.divf %713, %714 : vector<1x64xf32>
    %716 = vector.extract_strided_slice %703 {offsets = [0, 128], sizes = [1, 64], strides = [1, 1]} : vector<1x256xf32> to vector<1x64xf32>
    %717 = math.tanh %716 : vector<1x64xf32>
    %718 = vector.extract_strided_slice %703 {offsets = [0, 192], sizes = [1, 64], strides = [1, 1]} : vector<1x256xf32> to vector<1x64xf32>
    %719 = arith.negf %718 : vector<1x64xf32>
    %720 = math.exp %719 : vector<1x64xf32>
    %cst_136 = arith.constant 1.000000e+00 : f32
    %721 = vector.broadcast %cst_136 : f32 to vector<1x64xf32>
    %722 = arith.addf %721, %720 : vector<1x64xf32>
    %723 = arith.divf %721, %722 : vector<1x64xf32>
    %724 = arith.mulf %715, %700 : vector<1x64xf32>
    %725 = arith.mulf %709, %717 : vector<1x64xf32>
    %726 = arith.addf %724, %725 : vector<1x64xf32>
    %727 = math.tanh %726 : vector<1x64xf32>
    %728 = arith.mulf %723, %727 : vector<1x64xf32>
    %729 = vector.extract_strided_slice %697 {offsets = [1, 0], sizes = [1, 256], strides = [1, 1]} : vector<8x256xf32> to vector<1x256xf32>
    %cst_137 = arith.constant dense<0.000000e+00> : vector<1x256xf32>
    %730 = tpu.matmul %728, %698, %cst_137 {dimension_numbers = #tpu.dot_dimension_numbers<[1], [0], [0], [1], [0, 0, 1, 1], [], []>} : vector<1x64xf32>, vector<64x256xf32>, vector<1x256xf32> -> vector<1x256xf32>
    %731 = arith.addf %729, %730 : vector<1x256xf32>
    %732 = vector.extract_strided_slice %731 {offsets = [0, 0], sizes = [1, 64], strides = [1, 1]} : vector<1x256xf32> to vector<1x64xf32>
    %733 = arith.negf %732 : vector<1x64xf32>
    %734 = math.exp %733 : vector<1x64xf32>
    %cst_138 = arith.constant 1.000000e+00 : f32
    %735 = vector.broadcast %cst_138 : f32 to vector<1x64xf32>
    %736 = arith.addf %735, %734 : vector<1x64xf32>
    %737 = arith.divf %735, %736 : vector<1x64xf32>
    %738 = vector.extract_strided_slice %731 {offsets = [0, 64], sizes = [1, 64], strides = [1, 1]} : vector<1x256xf32> to vector<1x64xf32>
    %739 = arith.negf %738 : vector<1x64xf32>
    %740 = math.exp %739 : vector<1x64xf32>
    %cst_139 = arith.constant 1.000000e+00 : f32
    %741 = vector.broadcast %cst_139 : f32 to vector<1x64xf32>
    %742 = arith.addf %741, %740 : vector<1x64xf32>
    %743 = arith.divf %741, %742 : vector<1x64xf32>
    %744 = vector.extract_strided_slice %731 {offsets = [0, 128], sizes = [1, 64], strides = [1, 1]} : vector<1x256xf32> to vector<1x64xf32>
    %745 = math.tanh %744 : vector<1x64xf32>
    %746 = vector.extract_strided_slice %731 {offsets = [0, 192], sizes = [1, 64], strides = [1, 1]} : vector<1x256xf32> to vector<1x64xf32>
    %747 = arith.negf %746 : vector<1x64xf32>
    %748 = math.exp %747 : vector<1x64xf32>
    %cst_140 = arith.constant 1.000000e+00 : f32
    %749 = vector.broadcast %cst_140 : f32 to vector<1x64xf32>
    %750 = arith.addf %749, %748 : vector<1x64xf32>
    %751 = arith.divf %749, %750 : vector<1x64xf32>
    %752 = arith.mulf %743, %726 : vector<1x64xf32>
    %753 = arith.mulf %737, %745 : vector<1x64xf32>
    %754 = arith.addf %752, %753 : vector<1x64xf32>
    %755 = math.tanh %754 : vector<1x64xf32>
    %756 = arith.mulf %751, %755 : vector<1x64xf32>
    %757 = vector.extract_strided_slice %697 {offsets = [2, 0], sizes = [1, 256], strides = [1, 1]} : vector<8x256xf32> to vector<1x256xf32>
    %cst_141 = arith.constant dense<0.000000e+00> : vector<1x256xf32>
    %758 = tpu.matmul %756, %698, %cst_141 {dimension_numbers = #tpu.dot_dimension_numbers<[1], [0], [0], [1], [0, 0, 1, 1], [], []>} : vector<1x64xf32>, vector<64x256xf32>, vector<1x256xf32> -> vector<1x256xf32>
    %759 = arith.addf %757, %758 : vector<1x256xf32>
    %760 = vector.extract_strided_slice %759 {offsets = [0, 0], sizes = [1, 64], strides = [1, 1]} : vector<1x256xf32> to vector<1x64xf32>
    %761 = arith.negf %760 : vector<1x64xf32>
    %762 = math.exp %761 : vector<1x64xf32>
    %cst_142 = arith.constant 1.000000e+00 : f32
    %763 = vector.broadcast %cst_142 : f32 to vector<1x64xf32>
    %764 = arith.addf %763, %762 : vector<1x64xf32>
    %765 = arith.divf %763, %764 : vector<1x64xf32>
    %766 = vector.extract_strided_slice %759 {offsets = [0, 64], sizes = [1, 64], strides = [1, 1]} : vector<1x256xf32> to vector<1x64xf32>
    %767 = arith.negf %766 : vector<1x64xf32>
    %768 = math.exp %767 : vector<1x64xf32>
    %cst_143 = arith.constant 1.000000e+00 : f32
    %769 = vector.broadcast %cst_143 : f32 to vector<1x64xf32>
    %770 = arith.addf %769, %768 : vector<1x64xf32>
    %771 = arith.divf %769, %770 : vector<1x64xf32>
    %772 = vector.extract_strided_slice %759 {offsets = [0, 128], sizes = [1, 64], strides = [1, 1]} : vector<1x256xf32> to vector<1x64xf32>
    %773 = math.tanh %772 : vector<1x64xf32>
    %774 = vector.extract_strided_slice %759 {offsets = [0, 192], sizes = [1, 64], strides = [1, 1]} : vector<1x256xf32> to vector<1x64xf32>
    %775 = arith.negf %774 : vector<1x64xf32>
    %776 = math.exp %775 : vector<1x64xf32>
    %cst_144 = arith.constant 1.000000e+00 : f32
    %777 = vector.broadcast %cst_144 : f32 to vector<1x64xf32>
    %778 = arith.addf %777, %776 : vector<1x64xf32>
    %779 = arith.divf %777, %778 : vector<1x64xf32>
    %780 = arith.mulf %771, %754 : vector<1x64xf32>
    %781 = arith.mulf %765, %773 : vector<1x64xf32>
    %782 = arith.addf %780, %781 : vector<1x64xf32>
    %783 = math.tanh %782 : vector<1x64xf32>
    %784 = arith.mulf %779, %783 : vector<1x64xf32>
    %785 = vector.extract_strided_slice %697 {offsets = [3, 0], sizes = [1, 256], strides = [1, 1]} : vector<8x256xf32> to vector<1x256xf32>
    %cst_145 = arith.constant dense<0.000000e+00> : vector<1x256xf32>
    %786 = tpu.matmul %784, %698, %cst_145 {dimension_numbers = #tpu.dot_dimension_numbers<[1], [0], [0], [1], [0, 0, 1, 1], [], []>} : vector<1x64xf32>, vector<64x256xf32>, vector<1x256xf32> -> vector<1x256xf32>
    %787 = arith.addf %785, %786 : vector<1x256xf32>
    %788 = vector.extract_strided_slice %787 {offsets = [0, 0], sizes = [1, 64], strides = [1, 1]} : vector<1x256xf32> to vector<1x64xf32>
    %789 = arith.negf %788 : vector<1x64xf32>
    %790 = math.exp %789 : vector<1x64xf32>
    %cst_146 = arith.constant 1.000000e+00 : f32
    %791 = vector.broadcast %cst_146 : f32 to vector<1x64xf32>
    %792 = arith.addf %791, %790 : vector<1x64xf32>
    %793 = arith.divf %791, %792 : vector<1x64xf32>
    %794 = vector.extract_strided_slice %787 {offsets = [0, 64], sizes = [1, 64], strides = [1, 1]} : vector<1x256xf32> to vector<1x64xf32>
    %795 = arith.negf %794 : vector<1x64xf32>
    %796 = math.exp %795 : vector<1x64xf32>
    %cst_147 = arith.constant 1.000000e+00 : f32
    %797 = vector.broadcast %cst_147 : f32 to vector<1x64xf32>
    %798 = arith.addf %797, %796 : vector<1x64xf32>
    %799 = arith.divf %797, %798 : vector<1x64xf32>
    %800 = vector.extract_strided_slice %787 {offsets = [0, 128], sizes = [1, 64], strides = [1, 1]} : vector<1x256xf32> to vector<1x64xf32>
    %801 = math.tanh %800 : vector<1x64xf32>
    %802 = vector.extract_strided_slice %787 {offsets = [0, 192], sizes = [1, 64], strides = [1, 1]} : vector<1x256xf32> to vector<1x64xf32>
    %803 = arith.negf %802 : vector<1x64xf32>
    %804 = math.exp %803 : vector<1x64xf32>
    %cst_148 = arith.constant 1.000000e+00 : f32
    %805 = vector.broadcast %cst_148 : f32 to vector<1x64xf32>
    %806 = arith.addf %805, %804 : vector<1x64xf32>
    %807 = arith.divf %805, %806 : vector<1x64xf32>
    %808 = arith.mulf %799, %782 : vector<1x64xf32>
    %809 = arith.mulf %793, %801 : vector<1x64xf32>
    %810 = arith.addf %808, %809 : vector<1x64xf32>
    %811 = math.tanh %810 : vector<1x64xf32>
    %812 = arith.mulf %807, %811 : vector<1x64xf32>
    %813 = vector.extract_strided_slice %697 {offsets = [4, 0], sizes = [1, 256], strides = [1, 1]} : vector<8x256xf32> to vector<1x256xf32>
    %cst_149 = arith.constant dense<0.000000e+00> : vector<1x256xf32>
    %814 = tpu.matmul %812, %698, %cst_149 {dimension_numbers = #tpu.dot_dimension_numbers<[1], [0], [0], [1], [0, 0, 1, 1], [], []>} : vector<1x64xf32>, vector<64x256xf32>, vector<1x256xf32> -> vector<1x256xf32>
    %815 = arith.addf %813, %814 : vector<1x256xf32>
    %816 = vector.extract_strided_slice %815 {offsets = [0, 0], sizes = [1, 64], strides = [1, 1]} : vector<1x256xf32> to vector<1x64xf32>
    %817 = arith.negf %816 : vector<1x64xf32>
    %818 = math.exp %817 : vector<1x64xf32>
    %cst_150 = arith.constant 1.000000e+00 : f32
    %819 = vector.broadcast %cst_150 : f32 to vector<1x64xf32>
    %820 = arith.addf %819, %818 : vector<1x64xf32>
    %821 = arith.divf %819, %820 : vector<1x64xf32>
    %822 = vector.extract_strided_slice %815 {offsets = [0, 64], sizes = [1, 64], strides = [1, 1]} : vector<1x256xf32> to vector<1x64xf32>
    %823 = arith.negf %822 : vector<1x64xf32>
    %824 = math.exp %823 : vector<1x64xf32>
    %cst_151 = arith.constant 1.000000e+00 : f32
    %825 = vector.broadcast %cst_151 : f32 to vector<1x64xf32>
    %826 = arith.addf %825, %824 : vector<1x64xf32>
    %827 = arith.divf %825, %826 : vector<1x64xf32>
    %828 = vector.extract_strided_slice %815 {offsets = [0, 128], sizes = [1, 64], strides = [1, 1]} : vector<1x256xf32> to vector<1x64xf32>
    %829 = math.tanh %828 : vector<1x64xf32>
    %830 = vector.extract_strided_slice %815 {offsets = [0, 192], sizes = [1, 64], strides = [1, 1]} : vector<1x256xf32> to vector<1x64xf32>
    %831 = arith.negf %830 : vector<1x64xf32>
    %832 = math.exp %831 : vector<1x64xf32>
    %cst_152 = arith.constant 1.000000e+00 : f32
    %833 = vector.broadcast %cst_152 : f32 to vector<1x64xf32>
    %834 = arith.addf %833, %832 : vector<1x64xf32>
    %835 = arith.divf %833, %834 : vector<1x64xf32>
    %836 = arith.mulf %827, %810 : vector<1x64xf32>
    %837 = arith.mulf %821, %829 : vector<1x64xf32>
    %838 = arith.addf %836, %837 : vector<1x64xf32>
    %839 = math.tanh %838 : vector<1x64xf32>
    %840 = arith.mulf %835, %839 : vector<1x64xf32>
    %841 = vector.extract_strided_slice %697 {offsets = [5, 0], sizes = [1, 256], strides = [1, 1]} : vector<8x256xf32> to vector<1x256xf32>
    %cst_153 = arith.constant dense<0.000000e+00> : vector<1x256xf32>
    %842 = tpu.matmul %840, %698, %cst_153 {dimension_numbers = #tpu.dot_dimension_numbers<[1], [0], [0], [1], [0, 0, 1, 1], [], []>} : vector<1x64xf32>, vector<64x256xf32>, vector<1x256xf32> -> vector<1x256xf32>
    %843 = arith.addf %841, %842 : vector<1x256xf32>
    %844 = vector.extract_strided_slice %843 {offsets = [0, 0], sizes = [1, 64], strides = [1, 1]} : vector<1x256xf32> to vector<1x64xf32>
    %845 = arith.negf %844 : vector<1x64xf32>
    %846 = math.exp %845 : vector<1x64xf32>
    %cst_154 = arith.constant 1.000000e+00 : f32
    %847 = vector.broadcast %cst_154 : f32 to vector<1x64xf32>
    %848 = arith.addf %847, %846 : vector<1x64xf32>
    %849 = arith.divf %847, %848 : vector<1x64xf32>
    %850 = vector.extract_strided_slice %843 {offsets = [0, 64], sizes = [1, 64], strides = [1, 1]} : vector<1x256xf32> to vector<1x64xf32>
    %851 = arith.negf %850 : vector<1x64xf32>
    %852 = math.exp %851 : vector<1x64xf32>
    %cst_155 = arith.constant 1.000000e+00 : f32
    %853 = vector.broadcast %cst_155 : f32 to vector<1x64xf32>
    %854 = arith.addf %853, %852 : vector<1x64xf32>
    %855 = arith.divf %853, %854 : vector<1x64xf32>
    %856 = vector.extract_strided_slice %843 {offsets = [0, 128], sizes = [1, 64], strides = [1, 1]} : vector<1x256xf32> to vector<1x64xf32>
    %857 = math.tanh %856 : vector<1x64xf32>
    %858 = vector.extract_strided_slice %843 {offsets = [0, 192], sizes = [1, 64], strides = [1, 1]} : vector<1x256xf32> to vector<1x64xf32>
    %859 = arith.negf %858 : vector<1x64xf32>
    %860 = math.exp %859 : vector<1x64xf32>
    %cst_156 = arith.constant 1.000000e+00 : f32
    %861 = vector.broadcast %cst_156 : f32 to vector<1x64xf32>
    %862 = arith.addf %861, %860 : vector<1x64xf32>
    %863 = arith.divf %861, %862 : vector<1x64xf32>
    %864 = arith.mulf %855, %838 : vector<1x64xf32>
    %865 = arith.mulf %849, %857 : vector<1x64xf32>
    %866 = arith.addf %864, %865 : vector<1x64xf32>
    %867 = math.tanh %866 : vector<1x64xf32>
    %868 = arith.mulf %863, %867 : vector<1x64xf32>
    %869 = vector.extract_strided_slice %697 {offsets = [6, 0], sizes = [1, 256], strides = [1, 1]} : vector<8x256xf32> to vector<1x256xf32>
    %cst_157 = arith.constant dense<0.000000e+00> : vector<1x256xf32>
    %870 = tpu.matmul %868, %698, %cst_157 {dimension_numbers = #tpu.dot_dimension_numbers<[1], [0], [0], [1], [0, 0, 1, 1], [], []>} : vector<1x64xf32>, vector<64x256xf32>, vector<1x256xf32> -> vector<1x256xf32>
    %871 = arith.addf %869, %870 : vector<1x256xf32>
    %872 = vector.extract_strided_slice %871 {offsets = [0, 0], sizes = [1, 64], strides = [1, 1]} : vector<1x256xf32> to vector<1x64xf32>
    %873 = arith.negf %872 : vector<1x64xf32>
    %874 = math.exp %873 : vector<1x64xf32>
    %cst_158 = arith.constant 1.000000e+00 : f32
    %875 = vector.broadcast %cst_158 : f32 to vector<1x64xf32>
    %876 = arith.addf %875, %874 : vector<1x64xf32>
    %877 = arith.divf %875, %876 : vector<1x64xf32>
    %878 = vector.extract_strided_slice %871 {offsets = [0, 64], sizes = [1, 64], strides = [1, 1]} : vector<1x256xf32> to vector<1x64xf32>
    %879 = arith.negf %878 : vector<1x64xf32>
    %880 = math.exp %879 : vector<1x64xf32>
    %cst_159 = arith.constant 1.000000e+00 : f32
    %881 = vector.broadcast %cst_159 : f32 to vector<1x64xf32>
    %882 = arith.addf %881, %880 : vector<1x64xf32>
    %883 = arith.divf %881, %882 : vector<1x64xf32>
    %884 = vector.extract_strided_slice %871 {offsets = [0, 128], sizes = [1, 64], strides = [1, 1]} : vector<1x256xf32> to vector<1x64xf32>
    %885 = math.tanh %884 : vector<1x64xf32>
    %886 = vector.extract_strided_slice %871 {offsets = [0, 192], sizes = [1, 64], strides = [1, 1]} : vector<1x256xf32> to vector<1x64xf32>
    %887 = arith.negf %886 : vector<1x64xf32>
    %888 = math.exp %887 : vector<1x64xf32>
    %cst_160 = arith.constant 1.000000e+00 : f32
    %889 = vector.broadcast %cst_160 : f32 to vector<1x64xf32>
    %890 = arith.addf %889, %888 : vector<1x64xf32>
    %891 = arith.divf %889, %890 : vector<1x64xf32>
    %892 = arith.mulf %883, %866 : vector<1x64xf32>
    %893 = arith.mulf %877, %885 : vector<1x64xf32>
    %894 = arith.addf %892, %893 : vector<1x64xf32>
    %895 = math.tanh %894 : vector<1x64xf32>
    %896 = arith.mulf %891, %895 : vector<1x64xf32>
    %897 = vector.extract_strided_slice %697 {offsets = [7, 0], sizes = [1, 256], strides = [1, 1]} : vector<8x256xf32> to vector<1x256xf32>
    %cst_161 = arith.constant dense<0.000000e+00> : vector<1x256xf32>
    %898 = tpu.matmul %896, %698, %cst_161 {dimension_numbers = #tpu.dot_dimension_numbers<[1], [0], [0], [1], [0, 0, 1, 1], [], []>} : vector<1x64xf32>, vector<64x256xf32>, vector<1x256xf32> -> vector<1x256xf32>
    %899 = arith.addf %897, %898 : vector<1x256xf32>
    %900 = vector.extract_strided_slice %899 {offsets = [0, 0], sizes = [1, 64], strides = [1, 1]} : vector<1x256xf32> to vector<1x64xf32>
    %901 = arith.negf %900 : vector<1x64xf32>
    %902 = math.exp %901 : vector<1x64xf32>
    %cst_162 = arith.constant 1.000000e+00 : f32
    %903 = vector.broadcast %cst_162 : f32 to vector<1x64xf32>
    %904 = arith.addf %903, %902 : vector<1x64xf32>
    %905 = arith.divf %903, %904 : vector<1x64xf32>
    %906 = vector.extract_strided_slice %899 {offsets = [0, 64], sizes = [1, 64], strides = [1, 1]} : vector<1x256xf32> to vector<1x64xf32>
    %907 = arith.negf %906 : vector<1x64xf32>
    %908 = math.exp %907 : vector<1x64xf32>
    %cst_163 = arith.constant 1.000000e+00 : f32
    %909 = vector.broadcast %cst_163 : f32 to vector<1x64xf32>
    %910 = arith.addf %909, %908 : vector<1x64xf32>
    %911 = arith.divf %909, %910 : vector<1x64xf32>
    %912 = vector.extract_strided_slice %899 {offsets = [0, 128], sizes = [1, 64], strides = [1, 1]} : vector<1x256xf32> to vector<1x64xf32>
    %913 = math.tanh %912 : vector<1x64xf32>
    %914 = vector.extract_strided_slice %899 {offsets = [0, 192], sizes = [1, 64], strides = [1, 1]} : vector<1x256xf32> to vector<1x64xf32>
    %915 = arith.negf %914 : vector<1x64xf32>
    %916 = math.exp %915 : vector<1x64xf32>
    %cst_164 = arith.constant 1.000000e+00 : f32
    %917 = vector.broadcast %cst_164 : f32 to vector<1x64xf32>
    %918 = arith.addf %917, %916 : vector<1x64xf32>
    %919 = arith.divf %917, %918 : vector<1x64xf32>
    %920 = arith.mulf %911, %894 : vector<1x64xf32>
    %921 = arith.mulf %905, %913 : vector<1x64xf32>
    %922 = arith.addf %920, %921 : vector<1x64xf32>
    %923 = math.tanh %922 : vector<1x64xf32>
    %924 = arith.mulf %919, %923 : vector<1x64xf32>
    %925 = tpu.concatenate %728, %756, %784, %812, %840, %868, %896, %924 in 0 : vector<1x64xf32>, vector<1x64xf32>, vector<1x64xf32>, vector<1x64xf32>, vector<1x64xf32>, vector<1x64xf32>, vector<1x64xf32>, vector<1x64xf32> -> vector<8x64xf32>
    %c0_165 = arith.constant 0 : index
    %c0_166 = arith.constant 0 : index
    %926 = vector.load %arg13[%c0_165, %c0_166] : memref<1x64xf32, #tpu.memory_space<vmem>>, vector<1x64xf32>
    %927 = vector.broadcast %926 : vector<1x64xf32> to vector<8x64xf32>
    %928 = arith.mulf %925, %927 : vector<8x64xf32>
    %cst_167 = arith.constant dense<0.000000e+00> : vector<8xf32>
    %929 = vector.multi_reduction <add>, %928, %cst_167 [1] : vector<8x64xf32> to vector<8xf32>
    %930 = vector.shape_cast %929 : vector<8xf32> to vector<8x1xf32>
    %c0_168 = arith.constant 0 : index
    %c0_169 = arith.constant 0 : index
    %931 = vector.load %arg14[%c0_168, %c0_169] : memref<1x1xf32, #tpu.memory_space<vmem>>, vector<1x1xf32>
    %932 = vector.broadcast %931 : vector<1x1xf32> to vector<8x1xf32>
    %933 = arith.addf %930, %932 : vector<8x1xf32>
    %c0_170 = arith.constant 0 : index
    %c0_171 = arith.constant 0 : index
    %934 = vector.load %arg16[%c0_170, %c0_171] : memref<8x1xf32, #tpu.memory_space<vmem>>, vector<8x1xf32>
    tpu.vector_store %arg16[%c0_170, %c0_171], %933 {strides = array<i32>} : memref<8x1xf32, #tpu.memory_space<vmem>>, vector<8x1xf32>,
    return
  }
}

</mosaic_0001>

<llo_original>
// kernel: tpu_custom_call.1
$region0: #{tpu_custom_call.1}
  #allocation0 [shape = 'u32[]', space=smem, size = 0x4, offset = 0x4, fixed_abs, tag = 'smem constant byte address 0x4 - core index']
  #allocation1 [shape = 'u32[144,128]{1,0:T(1,128)}', space=vmem, size = 0x12000, scoped, tag = 'internal scratch']
  #allocation2 [shape = 'f32[1,1]{1,0:T(1,128)S(1)}', space=vmem, size = 0x200, scoped, tag = 'scoped memory for tpu_custom_call.1']
  %s0 = inlined_call_operand.vmem [shape: f32[8,1], index: 0, kind: input, shape index: {}]
  %s1 = inlined_call_operand.vmem [shape: f32[1,256], index: 1, kind: input, shape index: {}]
  %s2 = inlined_call_operand.hbm [shape: f32[64,256], index: 2, kind: input, shape index: {}]
  %s3 = inlined_call_operand.vmem [shape: f32[1,256], index: 3, kind: input, shape index: {}]
  %s4 = inlined_call_operand.hbm [shape: f32[64,128], index: 4, kind: input, shape index: {}]
  %s5 = inlined_call_operand.hbm [shape: f32[32,128], index: 5, kind: input, shape index: {}]
  %s6 = inlined_call_operand.vmem [shape: f32[1,128], index: 6, kind: input, shape index: {}]
  %s7 = inlined_call_operand.hbm [shape: f32[32,128], index: 7, kind: input, shape index: {}]
  %s8 = inlined_call_operand.hbm [shape: f32[32,128], index: 8, kind: input, shape index: {}]
  %s9 = inlined_call_operand.vmem [shape: f32[1,128], index: 9, kind: input, shape index: {}]
  %s10 = inlined_call_operand.hbm [shape: f32[32,256], index: 10, kind: input, shape index: {}]
  %s11 = inlined_call_operand.hbm [shape: f32[64,256], index: 11, kind: input, shape index: {}]
  %s12 = inlined_call_operand.vmem [shape: f32[1,256], index: 12, kind: input, shape index: {}]
  %s13 = inlined_call_operand.vmem [shape: f32[1,64], index: 13, kind: input, shape index: {}]
  %s14 = inlined_call_operand.<no memory space> [shape: f32[1,1], index: 14, kind: input, shape index: {}]
  %s15 = inlined_call_operand.hbm [shape: f32[1,32], index: 15, kind: output, shape index: {0}]
  %s16 = inlined_call_operand.vmem [shape: f32[8,1], index: 16, kind: output, shape index: {1}]
  %17 = xla_tuple %s15, %s16
  %s18 = sld [smem:[#allocation0]]
  $region106: #{tpu_custom_call.1} parent=0
    _
  %s20 = ssub.s32 1, %s18
  %s21 = scalar_select 0, %s20, %s18
  %v22 = vstv %s14
  %23 = vst [vmem:[#allocation2] sm:$0x1] %v22
  $region1: #{tpu_custom_call.1} parent=0
    #allocation3 [shape = 'u8[65536]{0}', space=vmem, size = 0x10000, scoped, tag = 'input window, operand 2, single buffered']
    #allocation4 [shape = 's32[1]{0}', space=sflag, size = 0x4, scoped, tag = 'scoped memory for tpu_custom_call.1']
    #allocation5 [shape = 's32[1]{0}', space=sflag, size = 0x4, scoped, tag = 'scoped memory for tpu_custom_call.1']
    #allocation6 [shape = 'u8[32768]{0}', space=vmem, size = 0x8000, scoped, tag = 'input window, operand 4, single buffered']
    #allocation7 [shape = 's32[1]{0}', space=sflag, size = 0x4, scoped, tag = 'scoped memory for tpu_custom_call.1']
    #allocation8 [shape = 'u8[16384]{0}', space=vmem, size = 0x4000, scoped, tag = 'input window, operand 5, single buffered']
    #allocation9 [shape = 'u8[16384]{0}', space=vmem, size = 0x4000, scoped, tag = 'input window, operand 7, single buffered']
    #allocation10 [shape = 's32[1]{0}', space=sflag, size = 0x4, scoped, tag = 'scoped memory for tpu_custom_call.1']
    #allocation11 [shape = 'u8[16384]{0}', space=vmem, size = 0x4000, scoped, tag = 'input window, operand 8, single buffered']
    #allocation12 [shape = 'u8[32768]{0}', space=vmem, size = 0x8000, scoped, tag = 'input window, operand 10, single buffered']
    #allocation13 [shape = 's32[1]{0}', space=sflag, size = 0x4, scoped, tag = 'scoped memory for tpu_custom_call.1']
    #allocation14 [shape = 'u8[65536]{0}', space=vmem, size = 0x10000, scoped, tag = 'input window, operand 11, single buffered']
    #allocation15 [shape = 'u8[512]{0}', space=vmem, size = 0x400, scoped, tag = 'output window, operand 0, single buffered']
    %24 = vsyncpa [#allocation4], 0
    %25 = vsyncpa [#allocation7], 0
    %26 = vsyncpa [#allocation10], 0
    %27 = vsyncpa [#allocation13], 0
    %28 = vsyncpa [#allocation5], 0
    // Predicated region
    $region2: #{tpu_custom_call.1} parent=1 // pred_check
      _
    $region3: #{tpu_custom_call.1} parent=1 // pred_check_branch
      %30 = sbr.rel (0) target = $region5
    $region4: #{tpu_custom_call.1} parent=1 // pred_region
      _
    $region5: #{tpu_custom_call.1} parent=1 // pred_fallthru
      _
    // Predicated region
    $region6: #{tpu_custom_call.1} parent=1 // pred_check
      _
    $region7: #{tpu_custom_call.1} parent=1 // pred_check_branch
      %32 = sbr.rel (0) target = $region9
    $region8: #{tpu_custom_call.1} parent=1 // pred_region
      _
    $region9: #{tpu_custom_call.1} parent=1 // pred_fallthru
      _
    // Predicated region
    $region10: #{tpu_custom_call.1} parent=1 // pred_check
      _
    $region11: #{tpu_custom_call.1} parent=1 // pred_check_branch
      %34 = sbr.rel (0) target = $region13
    $region12: #{tpu_custom_call.1} parent=1 // pred_region
      %s36 = ssub.s32 2048, 2048
      %37 = vsyncadd [#allocation4], %s36
      %s38 = sshll.u32 [#allocation3], 4
      %s39 = int_to_ptr.vmem [resolvable:$true] %s38
      %44 = dma.hbm_to_vmem [thread:$0]  %s2, 2048, %s39, [#allocation4], 256, 256, 16
    $region13: #{tpu_custom_call.1} parent=1 // pred_fallthru
      _
    // Predicated region
    $region14: #{tpu_custom_call.1} parent=1 // pred_check
      _
    $region15: #{tpu_custom_call.1} parent=1 // pred_check_branch
      %46 = sbr.rel (0) target = $region17
    $region16: #{tpu_custom_call.1} parent=1 // pred_region
      _
    $region17: #{tpu_custom_call.1} parent=1 // pred_fallthru
      _
    // Predicated region
    $region18: #{tpu_custom_call.1} parent=1 // pred_check
      _
    $region19: #{tpu_custom_call.1} parent=1 // pred_check_branch
      %48 = sbr.rel (0) target = $region21
    $region20: #{tpu_custom_call.1} parent=1 // pred_region
      %s50 = ssub.s32 1024, 1024
      %51 = vsyncadd [#allocation7], %s50
      %s52 = sshll.u32 [#allocation6], 4
      %s53 = int_to_ptr.vmem [resolvable:$true] %s52
      %58 = dma.hbm_to_vmem [thread:$0]  %s4, 1024, %s53, [#allocation7], 128, 128, 8
    $region21: #{tpu_custom_call.1} parent=1 // pred_fallthru
      _
    // Predicated region
    $region22: #{tpu_custom_call.1} parent=1 // pred_check
      _
    $region23: #{tpu_custom_call.1} parent=1 // pred_check_branch
      %60 = sbr.rel (0) target = $region25
    $region24: #{tpu_custom_call.1} parent=1 // pred_region
      %s62 = ssub.s32 512, 512
      %63 = vsyncadd [#allocation7], %s62
      %s64 = sshll.u32 [#allocation8], 4
      %s65 = int_to_ptr.vmem [resolvable:$true] %s64
      %70 = dma.hbm_to_vmem [thread:$0]  %s5, 512, %s65, [#allocation7], 128, 128, 8
    $region25: #{tpu_custom_call.1} parent=1 // pred_fallthru
      _
    // Predicated region
    $region26: #{tpu_custom_call.1} parent=1 // pred_check
      _
    $region27: #{tpu_custom_call.1} parent=1 // pred_check_branch
      %72 = sbr.rel (0) target = $region29
    $region28: #{tpu_custom_call.1} parent=1 // pred_region
      _
    $region29: #{tpu_custom_call.1} parent=1 // pred_fallthru
      _
    // Predicated region
    $region30: #{tpu_custom_call.1} parent=1 // pred_check
      _
    $region31: #{tpu_custom_call.1} parent=1 // pred_check_branch
      %74 = sbr.rel (0) target = $region33
    $region32: #{tpu_custom_call.1} parent=1 // pred_region
      %s76 = ssub.s32 512, 512
      %77 = vsyncadd [#allocation10], %s76
      %s78 = sshll.u32 [#allocation9], 4
      %s79 = int_to_ptr.vmem [resolvable:$true] %s78
      %84 = dma.hbm_to_vmem [thread:$0]  %s7, 512, %s79, [#allocation10], 128, 128, 8
    $region33: #{tpu_custom_call.1} parent=1 // pred_fallthru
      _
    // Predicated region
    $region34: #{tpu_custom_call.1} parent=1 // pred_check
      _
    $region35: #{tpu_custom_call.1} parent=1 // pred_check_branch
      %86 = sbr.rel (0) target = $region37
    $region36: #{tpu_custom_call.1} parent=1 // pred_region
      %s88 = ssub.s32 512, 512
      %89 = vsyncadd [#allocation10], %s88
      %s90 = sshll.u32 [#allocation11], 4
      %s91 = int_to_ptr.vmem [resolvable:$true] %s90
      %96 = dma.hbm_to_vmem [thread:$0]  %s8, 512, %s91, [#allocation10], 128, 128, 8
    $region37: #{tpu_custom_call.1} parent=1 // pred_fallthru
      _
    // Predicated region
    $region38: #{tpu_custom_call.1} parent=1 // pred_check
      _
    $region39: #{tpu_custom_call.1} parent=1 // pred_check_branch
      %98 = sbr.rel (0) target = $region41
    $region40: #{tpu_custom_call.1} parent=1 // pred_region
      _
    $region41: #{tpu_custom_call.1} parent=1 // pred_fallthru
      _
    // Predicated region
    $region42: #{tpu_custom_call.1} parent=1 // pred_check
      _
    $region43: #{tpu_custom_call.1} parent=1 // pred_check_branch
      %100 = sbr.rel (0) target = $region45
    $region44: #{tpu_custom_call.1} parent=1 // pred_region
      %s102 = ssub.s32 1024, 1024
      %103 = vsyncadd [#allocation13], %s102
      %s104 = sshll.u32 [#allocation12], 4
      %s105 = int_to_ptr.vmem [resolvable:$true] %s104
      %110 = dma.hbm_to_vmem [thread:$0]  %s10, 1024, %s105, [#allocation13], 256, 256, 16
    $region45: #{tpu_custom_call.1} parent=1 // pred_fallthru
      _
    // Predicated region
    $region46: #{tpu_custom_call.1} parent=1 // pred_check
      _
    $region47: #{tpu_custom_call.1} parent=1 // pred_check_branch
      %112 = sbr.rel (0) target = $region49
    $region48: #{tpu_custom_call.1} parent=1 // pred_region
      %s114 = ssub.s32 2048, 2048
      %115 = vsyncadd [#allocation13], %s114
      %s116 = sshll.u32 [#allocation14], 4
      %s117 = int_to_ptr.vmem [resolvable:$true] %s116
      %122 = dma.hbm_to_vmem [thread:$0]  %s11, 2048, %s117, [#allocation13], 256, 256, 16
    $region49: #{tpu_custom_call.1} parent=1 // pred_fallthru
      _
    // Predicated region
    $region50: #{tpu_custom_call.1} parent=1 // pred_check
      _
    $region51: #{tpu_custom_call.1} parent=1 // pred_check_branch
      %124 = sbr.rel (0) target = $region53
    $region52: #{tpu_custom_call.1} parent=1 // pred_region
      _
    $region53: #{tpu_custom_call.1} parent=1 // pred_fallthru
      _
    // Predicated region
    $region54: #{tpu_custom_call.1} parent=1 // pred_check
      _
    $region55: #{tpu_custom_call.1} parent=1 // pred_check_branch
      %126 = sbr.rel (0) target = $region57
    $region56: #{tpu_custom_call.1} parent=1 // pred_region
      _
    $region57: #{tpu_custom_call.1} parent=1 // pred_fallthru
      _
    // Predicated region
    $region58: #{tpu_custom_call.1} parent=1 // pred_check
      _
    $region59: #{tpu_custom_call.1} parent=1 // pred_check_branch
      %128 = sbr.rel (0) target = $region61
    $region60: #{tpu_custom_call.1} parent=1 // pred_region
      _
    $region61: #{tpu_custom_call.1} parent=1 // pred_fallthru
      _
    // Predicated region
    $region62: #{tpu_custom_call.1} parent=1 // pred_check
      _
    $region63: #{tpu_custom_call.1} parent=1 // pred_check_branch
      %130 = sbr.rel (0) target = $region65
    $region64: #{tpu_custom_call.1} parent=1 // pred_region
      %131 = dma.done [#allocation4], 2048
    $region65: #{tpu_custom_call.1} parent=1 // pred_fallthru
      _
    // Predicated region
    $region66: #{tpu_custom_call.1} parent=1 // pred_check
      _
    $region67: #{tpu_custom_call.1} parent=1 // pred_check_branch
      %133 = sbr.rel (0) target = $region69
    $region68: #{tpu_custom_call.1} parent=1 // pred_region
      %134 = dma.done [#allocation7], 1024
    $region69: #{tpu_custom_call.1} parent=1 // pred_fallthru
      _
    // Predicated region
    $region70: #{tpu_custom_call.1} parent=1 // pred_check
      _
    $region71: #{tpu_custom_call.1} parent=1 // pred_check_branch
      %136 = sbr.rel (0) target = $region73
    $region72: #{tpu_custom_call.1} parent=1 // pred_region
      %137 = dma.done [#allocation7], 512
    $region73: #{tpu_custom_call.1} parent=1 // pred_fallthru
      _
    // Predicated region
    $region74: #{tpu_custom_call.1} parent=1 // pred_check
      _
    $region75: #{tpu_custom_call.1} parent=1 // pred_check_branch
      %139 = sbr.rel (0) target = $region77
    $region76: #{tpu_custom_call.1} parent=1 // pred_region
      %140 = dma.done [#allocation10], 512
    $region77: #{tpu_custom_call.1} parent=1 // pred_fallthru
      _
    // Predicated region
    $region78: #{tpu_custom_call.1} parent=1 // pred_check
      _
    $region79: #{tpu_custom_call.1} parent=1 // pred_check_branch
      %142 = sbr.rel (0) target = $region81
    $region80: #{tpu_custom_call.1} parent=1 // pred_region
      %143 = dma.done [#allocation10], 512
    $region81: #{tpu_custom_call.1} parent=1 // pred_fallthru
      _
    // Predicated region
    $region82: #{tpu_custom_call.1} parent=1 // pred_check
      _
    $region83: #{tpu_custom_call.1} parent=1 // pred_check_branch
      %145 = sbr.rel (0) target = $region85
    $region84: #{tpu_custom_call.1} parent=1 // pred_region
      %146 = dma.done [#allocation13], 1024
    $region85: #{tpu_custom_call.1} parent=1 // pred_fallthru
      _
    // Predicated region
    $region86: #{tpu_custom_call.1} parent=1 // pred_check
      _
    $region87: #{tpu_custom_call.1} parent=1 // pred_check_branch
      %148 = sbr.rel (0) target = $region89
    $region88: #{tpu_custom_call.1} parent=1 // pred_region
      %149 = dma.done [#allocation13], 2048
    $region89: #{tpu_custom_call.1} parent=1 // pred_fallthru
      _
    %v150 = vld [vmem:[%s0] sm:$0xff]
    %v151 = vld [vmem:[%s1] sm:$0x3]
    %153 = vset.pattern.permute.xlu0 0
    %154 = vperm.xlu0 %153, %v150
    %v155 = vpop.permute.xlu0 %154
    %v158 = vlaneseq
    %v159 = vshrl.u32 %v158, 7
    %v160 = vsub.s32 0, %v159
    %v161 = vrot.slane %v151, %v160
    %v162 = vlaneseq
    %v163 = vshrl.u32 %v162, 7
    %v164 = vsub.s32 1, %v163
    %v165 = vrot.slane %v151, %v164
    %v168 = vmul.f32 %v155, %v161
    %v169 = vmul.f32 %v155, %v165
    %v170 = vld [vmem:[%s3] sm:$0x3]
    %v172 = vlaneseq
    %v173 = vshrl.u32 %v172, 7
    %v174 = vsub.s32 0, %v173
    %v175 = vrot.slane %v170, %v174
    %v176 = vlaneseq
    %v177 = vshrl.u32 %v176, 7
    %v178 = vsub.s32 1, %v177
    %v179 = vrot.slane %v170, %v178
    %v182 = vadd.f32 %v168, %v175
    %v183 = vadd.f32 %v169, %v179
    %v184 = vld [vmem:[#allocation3] sm:$0xff]
    %v185 = vld [vmem:[#allocation3 + $0x8] sm:$0xff]
    %v186 = vld [vmem:[#allocation3 + $0x10] sm:$0xff]
    %v187 = vld [vmem:[#allocation3 + $0x18] sm:$0xff]
    %v188 = vld [vmem:[#allocation3 + $0x20] sm:$0xff]
    %v189 = vld [vmem:[#allocation3 + $0x28] sm:$0xff]
    %v190 = vld [vmem:[#allocation3 + $0x30] sm:$0xff]
    %v191 = vld [vmem:[#allocation3 + $0x38] sm:$0xff]
    %v192 = vld [vmem:[#allocation3 + $0x40] sm:$0xff]
    %v193 = vld [vmem:[#allocation3 + $0x48] sm:$0xff]
    %v194 = vld [vmem:[#allocation3 + $0x50] sm:$0xff]
    %v195 = vld [vmem:[#allocation3 + $0x58] sm:$0xff]
    %v196 = vld [vmem:[#allocation3 + $0x60] sm:$0xff]
    %v197 = vld [vmem:[#allocation3 + $0x68] sm:$0xff]
    %v198 = vld [vmem:[#allocation3 + $0x70] sm:$0xff]
    %v199 = vld [vmem:[#allocation3 + $0x78] sm:$0xff]
    %vm200 = vcmask 523264
    %v202 = vsel %vm200, 0.0, 0
    %204 = vmatprep.subr.mxu0 0.0
    %205 = vmatpush1.msra.mxu0 0.0
    %206 = vmatprep.subr.mxu0 0.0
    %207 = vmatpush1.msra.mxu0 0.0
    %208 = vmatprep.subr.mxu0 0.0
    %209 = vmatpush1.msra.mxu0 0.0
    %210 = vmatprep.subr.mxu0 0.0
    %211 = vmatpush1.msra.mxu0 0.0
    %212 = vmatprep.subr.mxu0 0.0
    %213 = vmatpush1.msra.mxu0 0.0
    %214 = vmatprep.subr.mxu0 0.0
    %215 = vmatpush1.msra.mxu0 0.0
    %216 = vmatprep.subr.mxu0 0.0
    %217 = vmatpush1.msra.mxu0 0.0
    %218 = vmatprep.subr.mxu0 0.0
    %219 = vmatpush1.msra.mxu0 0.0
    %220 = vmatprep.subr.mxu0 %v199
    %221 = vmatpush1.msra.mxu0 %v198
    %222 = vmatprep.subr.mxu0 %v197
    %223 = vmatpush1.msra.mxu0 %v196
    %224 = vmatprep.subr.mxu0 %v195
    %225 = vmatpush1.msra.mxu0 %v194
    %226 = vmatprep.subr.mxu0 %v193
    %227 = vmatpush1.msra.mxu0 %v192
    %228 = vmatprep.subr.mxu0 %v191
    %229 = vmatpush1.msra.mxu0 %v190
    %230 = vmatprep.subr.mxu0 %v189
    %231 = vmatpush1.msra.mxu0 %v188
    %232 = vmatprep.subr.mxu0 %v187
    %233 = vmatpush1.msra.mxu0 %v186
    %234 = vmatprep.subr.mxu0 %v185
    %235 = vmatpush1.msra.mxu0 %v184
    %236 = vmatprep.subr.mxu0 0.0
    %237 = vmatpush2.msra.mxu0 0.0
    %238 = vmatprep.subr.mxu0 0.0
    %239 = vmatpush2.msra.mxu0 0.0
    %240 = vmatprep.subr.mxu0 0.0
    %241 = vmatpush2.msra.mxu0 0.0
    %242 = vmatprep.subr.mxu0 0.0
    %243 = vmatpush2.msra.mxu0 0.0
    %244 = vmatprep.subr.mxu0 0.0
    %245 = vmatpush2.msra.mxu0 0.0
    %246 = vmatprep.subr.mxu0 0.0
    %247 = vmatpush2.msra.mxu0 0.0
    %248 = vmatprep.subr.mxu0 0.0
    %249 = vmatpush2.msra.mxu0 0.0
    %250 = vmatprep.subr.mxu0 0.0
    %251 = vmatpush2.msra.mxu0 0.0
    %252 = vmatprep.subr.mxu0 0.0
    %253 = vmatpush2.msra.mxu0 0.0
    %254 = vmatprep.subr.mxu0 0.0
    %255 = vmatpush2.msra.mxu0 0.0
    %256 = vmatprep.subr.mxu0 0.0
    %257 = vmatpush2.msra.mxu0 0.0
    %258 = vmatprep.subr.mxu0 0.0
    %259 = vmatpush2.msra.mxu0 0.0
    %260 = vmatprep.subr.mxu0 0.0
    %261 = vmatpush2.msra.mxu0 0.0
    %262 = vmatprep.subr.mxu0 0.0
    %263 = vmatpush2.msra.mxu0 0.0
    %264 = vmatprep.subr.mxu0 0.0
    %265 = vmatpush2.msra.mxu0 0.0
    %266 = vmatprep.subr.mxu0 0.0
    %267 = vmatpush2.msra.mxu0 0.0
    %268 = vmatprep.mubr.f32.mxu0 0.0
    %269 = vmatmul.mubr.f32.gmra.mxu0 %v202
    %v270 = vpop.f32.mrf.mxu0
    %v271 = vadd.f32 0.0, %v270
    %v272 = vpop.f32.mrf.mxu0
    %v273 = vadd.f32 0.0, %v272
    %274 = vdwg.mxu0
    %v275 = vadd.f32 %v182, %v271
    %v276 = vadd.f32 %v183, %v273
    %v277 = vxor.u32 %v275, 2147483648
    %v278 = vmul.f32 %v277, 1.442695
    %v279 = vpow.pop %v278
    %v280 = vadd.f32 %v279, 1.0
    %v281 = vrcp.pop %v280
    %v282 = vmul.f32 1.0, %v281
    %v283 = vtanh.pop %v276
    %v284 = vxor.u32 %v276, 2147483648
    %v285 = vmul.f32 %v284, 1.442695
    %v286 = vpow.pop %v285
    %v287 = vadd.f32 %v286, 1.0
    %v288 = vrcp.pop %v287
    %v289 = vmul.f32 1.0, %v288
    %v290 = vmul.f32 %v282, 0.0
    %v291 = vmul.f32 %v282, %v283
    %293 = vrot.lane.b32.xlu0 %v291, 64
    %v294 = vpop.permute.xlu0 %293
    %v296 = vadd.f32 %v290, %v294
    %v297 = vtanh.pop %v296
    %v298 = vmul.f32 %v289, %v297
    %300 = vrot.lane.b32.xlu0 %v298, 64
    %v301 = vpop.permute.xlu0 %300
    %v302 = vsel %vm200, %v301, 0
    %304 = vmatprep.subr.mxu0 0.0
    %305 = vmatpush1.msra.mxu0 0.0
    %306 = vmatprep.subr.mxu0 0.0
    %307 = vmatpush1.msra.mxu0 0.0
    %308 = vmatprep.subr.mxu0 0.0
    %309 = vmatpush1.msra.mxu0 0.0
    %310 = vmatprep.subr.mxu0 0.0
    %311 = vmatpush1.msra.mxu0 0.0
    %312 = vmatprep.subr.mxu0 0.0
    %313 = vmatpush1.msra.mxu0 0.0
    %314 = vmatprep.subr.mxu0 0.0
    %315 = vmatpush1.msra.mxu0 0.0
    %316 = vmatprep.subr.mxu0 0.0
    %317 = vmatpush1.msra.mxu0 0.0
    %318 = vmatprep.subr.mxu0 0.0
    %319 = vmatpush1.msra.mxu0 0.0
    %320 = vmatprep.subr.mxu0 %v199
    %321 = vmatpush1.msra.mxu0 %v198
    %322 = vmatprep.subr.mxu0 %v197
    %323 = vmatpush1.msra.mxu0 %v196
    %324 = vmatprep.subr.mxu0 %v195
    %325 = vmatpush1.msra.mxu0 %v194
    %326 = vmatprep.subr.mxu0 %v193
    %327 = vmatpush1.msra.mxu0 %v192
    %328 = vmatprep.subr.mxu0 %v191
    %329 = vmatpush1.msra.mxu0 %v190
    %330 = vmatprep.subr.mxu0 %v189
    %331 = vmatpush1.msra.mxu0 %v188
    %332 = vmatprep.subr.mxu0 %v187
    %333 = vmatpush1.msra.mxu0 %v186
    %334 = vmatprep.subr.mxu0 %v185
    %335 = vmatpush1.msra.mxu0 %v184
    %336 = vmatprep.subr.mxu0 0.0
    %337 = vmatpush2.msra.mxu0 0.0
    %338 = vmatprep.subr.mxu0 0.0
    %339 = vmatpush2.msra.mxu0 0.0
    %340 = vmatprep.subr.mxu0 0.0
    %341 = vmatpush2.msra.mxu0 0.0
    %342 = vmatprep.subr.mxu0 0.0
    %343 = vmatpush2.msra.mxu0 0.0
    %344 = vmatprep.subr.mxu0 0.0
    %345 = vmatpush2.msra.mxu0 0.0
    %346 = vmatprep.subr.mxu0 0.0
    %347 = vmatpush2.msra.mxu0 0.0
    %348 = vmatprep.subr.mxu0 0.0
    %349 = vmatpush2.msra.mxu0 0.0
    %350 = vmatprep.subr.mxu0 0.0
    %351 = vmatpush2.msra.mxu0 0.0
    %352 = vmatprep.subr.mxu0 0.0
    %353 = vmatpush2.msra.mxu0 0.0
    %354 = vmatprep.subr.mxu0 0.0
    %355 = vmatpush2.msra.mxu0 0.0
    %356 = vmatprep.subr.mxu0 0.0
    %357 = vmatpush2.msra.mxu0 0.0
    %358 = vmatprep.subr.mxu0 0.0
    %359 = vmatpush2.msra.mxu0 0.0
    %360 = vmatprep.subr.mxu0 0.0
    %361 = vmatpush2.msra.mxu0 0.0
    %362 = vmatprep.subr.mxu0 0.0
    %363 = vmatpush2.msra.mxu0 0.0
    %364 = vmatprep.subr.mxu0 0.0
    %365 = vmatpush2.msra.mxu0 0.0
    %366 = vmatprep.subr.mxu0 0.0
    %367 = vmatpush2.msra.mxu0 0.0
    %368 = vmatprep.mubr.f32.mxu0 0.0
    %369 = vmatmul.mubr.f32.gmra.mxu0 %v302
    %v370 = vpop.f32.mrf.mxu0
    %v371 = vadd.f32 0.0, %v370
    %v372 = vpop.f32.mrf.mxu0
    %v373 = vadd.f32 0.0, %v372
    %374 = vdwg.mxu0
    %v377 = vrot.slane %v371, 7
    %v378 = vrot.slane %v373, 7
    %v381 = vadd.f32 %v182, %v377
    %v382 = vadd.f32 %v183, %v378
    %v383 = vxor.u32 %v381, 2147483648
    %v384 = vmul.f32 %v383, 1.442695
    %v385 = vpow.pop %v384
    %v386 = vadd.f32 %v385, 1.0
    %v387 = vrcp.pop %v386
    %v388 = vmul.f32 1.0, %v387
    %v389 = vtanh.pop %v382
    %v390 = vxor.u32 %v382, 2147483648
    %v391 = vmul.f32 %v390, 1.442695
    %v392 = vpow.pop %v391
    %v393 = vadd.f32 %v392, 1.0
    %v394 = vrcp.pop %v393
    %v395 = vmul.f32 1.0, %v394
    %v397 = vrot.slane %v296, 7
    %v399 = vmul.f32 %v388, %v397
    %v400 = vmul.f32 %v388, %v389
    %402 = vrot.lane.b32.xlu0 %v400, 64
    %v403 = vpop.permute.xlu0 %402
    %v405 = vadd.f32 %v399, %v403
    %v406 = vtanh.pop %v405
    %v407 = vmul.f32 %v395, %v406
    %v409 = vrot.slane %v407, 1
    %410 = vrot.lane.b32.xlu0 %v409, 64
    %v411 = vpop.permute.xlu0 %410
    %v412 = vsel %vm200, %v411, 0
    %414 = vmatprep.subr.mxu0 0.0
    %415 = vmatpush1.msra.mxu0 0.0
    %416 = vmatprep.subr.mxu0 0.0
    %417 = vmatpush1.msra.mxu0 0.0
    %418 = vmatprep.subr.mxu0 0.0
    %419 = vmatpush1.msra.mxu0 0.0
    %420 = vmatprep.subr.mxu0 0.0
    %421 = vmatpush1.msra.mxu0 0.0
    %422 = vmatprep.subr.mxu0 0.0
    %423 = vmatpush1.msra.mxu0 0.0
    %424 = vmatprep.subr.mxu0 0.0
    %425 = vmatpush1.msra.mxu0 0.0
    %426 = vmatprep.subr.mxu0 0.0
    %427 = vmatpush1.msra.mxu0 0.0
    %428 = vmatprep.subr.mxu0 0.0
    %429 = vmatpush1.msra.mxu0 0.0
    %430 = vmatprep.subr.mxu0 %v199
    %431 = vmatpush1.msra.mxu0 %v198
    %432 = vmatprep.subr.mxu0 %v197
    %433 = vmatpush1.msra.mxu0 %v196
    %434 = vmatprep.subr.mxu0 %v195
    %435 = vmatpush1.msra.mxu0 %v194
    %436 = vmatprep.subr.mxu0 %v193
    %437 = vmatpush1.msra.mxu0 %v192
    %438 = vmatprep.subr.mxu0 %v191
    %439 = vmatpush1.msra.mxu0 %v190
    %440 = vmatprep.subr.mxu0 %v189
    %441 = vmatpush1.msra.mxu0 %v188
    %442 = vmatprep.subr.mxu0 %v187
    %443 = vmatpush1.msra.mxu0 %v186
    %444 = vmatprep.subr.mxu0 %v185
    %445 = vmatpush1.msra.mxu0 %v184
    %446 = vmatprep.subr.mxu0 0.0
    %447 = vmatpush2.msra.mxu0 0.0
    %448 = vmatprep.subr.mxu0 0.0
    %449 = vmatpush2.msra.mxu0 0.0
    %450 = vmatprep.subr.mxu0 0.0
    %451 = vmatpush2.msra.mxu0 0.0
    %452 = vmatprep.subr.mxu0 0.0
    %453 = vmatpush2.msra.mxu0 0.0
    %454 = vmatprep.subr.mxu0 0.0
    %455 = vmatpush2.msra.mxu0 0.0
    %456 = vmatprep.subr.mxu0 0.0
    %457 = vmatpush2.msra.mxu0 0.0
    %458 = vmatprep.subr.mxu0 0.0
    %459 = vmatpush2.msra.mxu0 0.0
    %460 = vmatprep.subr.mxu0 0.0
    %461 = vmatpush2.msra.mxu0 0.0
    %462 = vmatprep.subr.mxu0 0.0
    %463 = vmatpush2.msra.mxu0 0.0
    %464 = vmatprep.subr.mxu0 0.0
    %465 = vmatpush2.msra.mxu0 0.0
    %466 = vmatprep.subr.mxu0 0.0
    %467 = vmatpush2.msra.mxu0 0.0
    %468 = vmatprep.subr.mxu0 0.0
    %469 = vmatpush2.msra.mxu0 0.0
    %470 = vmatprep.subr.mxu0 0.0
    %471 = vmatpush2.msra.mxu0 0.0
    %472 = vmatprep.subr.mxu0 0.0
    %473 = vmatpush2.msra.mxu0 0.0
    %474 = vmatprep.subr.mxu0 0.0
    %475 = vmatpush2.msra.mxu0 0.0
    %476 = vmatprep.subr.mxu0 0.0
    %477 = vmatpush2.msra.mxu0 0.0
    %478 = vmatprep.mubr.f32.mxu0 0.0
    %479 = vmatmul.mubr.f32.gmra.mxu0 %v412
    %v480 = vpop.f32.mrf.mxu0
    %v481 = vadd.f32 0.0, %v480
    %v482 = vpop.f32.mrf.mxu0
    %v483 = vadd.f32 0.0, %v482
    %484 = vdwg.mxu0
    %v487 = vrot.slane %v481, 6
    %v488 = vrot.slane %v483, 6
    %v491 = vadd.f32 %v182, %v487
    %v492 = vadd.f32 %v183, %v488
    %v493 = vxor.u32 %v491, 2147483648
    %v494 = vmul.f32 %v493, 1.442695
    %v495 = vpow.pop %v494
    %v496 = vadd.f32 %v495, 1.0
    %v497 = vrcp.pop %v496
    %v498 = vmul.f32 1.0, %v497
    %v499 = vtanh.pop %v492
    %v500 = vxor.u32 %v492, 2147483648
    %v501 = vmul.f32 %v500, 1.442695
    %v502 = vpow.pop %v501
    %v503 = vadd.f32 %v502, 1.0
    %v504 = vrcp.pop %v503
    %v505 = vmul.f32 1.0, %v504
    %v507 = vrot.slane %v405, 7
    %v509 = vmul.f32 %v498, %v507
    %v510 = vmul.f32 %v498, %v499
    %512 = vrot.lane.b32.xlu0 %v510, 64
    %v513 = vpop.permute.xlu0 %512
    %v515 = vadd.f32 %v509, %v513
    %v516 = vtanh.pop %v515
    %v517 = vmul.f32 %v505, %v516
    %v519 = vrot.slane %v517, 2
    %520 = vrot.lane.b32.xlu0 %v519, 64
    %v521 = vpop.permute.xlu0 %520
    %v522 = vsel %vm200, %v521, 0
    %524 = vmatprep.subr.mxu0 0.0
    %525 = vmatpush1.msra.mxu0 0.0
    %526 = vmatprep.subr.mxu0 0.0
    %527 = vmatpush1.msra.mxu0 0.0
    %528 = vmatprep.subr.mxu0 0.0
    %529 = vmatpush1.msra.mxu0 0.0
    %530 = vmatprep.subr.mxu0 0.0
    %531 = vmatpush1.msra.mxu0 0.0
    %532 = vmatprep.subr.mxu0 0.0
    %533 = vmatpush1.msra.mxu0 0.0
    %534 = vmatprep.subr.mxu0 0.0
    %535 = vmatpush1.msra.mxu0 0.0
    %536 = vmatprep.subr.mxu0 0.0
    %537 = vmatpush1.msra.mxu0 0.0
    %538 = vmatprep.subr.mxu0 0.0
    %539 = vmatpush1.msra.mxu0 0.0
    %540 = vmatprep.subr.mxu0 %v199
    %541 = vmatpush1.msra.mxu0 %v198
    %542 = vmatprep.subr.mxu0 %v197
    %543 = vmatpush1.msra.mxu0 %v196
    %544 = vmatprep.subr.mxu0 %v195
    %545 = vmatpush1.msra.mxu0 %v194
    %546 = vmatprep.subr.mxu0 %v193
    %547 = vmatpush1.msra.mxu0 %v192
    %548 = vmatprep.subr.mxu0 %v191
    %549 = vmatpush1.msra.mxu0 %v190
    %550 = vmatprep.subr.mxu0 %v189
    %551 = vmatpush1.msra.mxu0 %v188
    %552 = vmatprep.subr.mxu0 %v187
    %553 = vmatpush1.msra.mxu0 %v186
    %554 = vmatprep.subr.mxu0 %v185
    %555 = vmatpush1.msra.mxu0 %v184
    %556 = vmatprep.subr.mxu0 0.0
    %557 = vmatpush2.msra.mxu0 0.0
    %558 = vmatprep.subr.mxu0 0.0
    %559 = vmatpush2.msra.mxu0 0.0
    %560 = vmatprep.subr.mxu0 0.0
    %561 = vmatpush2.msra.mxu0 0.0
    %562 = vmatprep.subr.mxu0 0.0
    %563 = vmatpush2.msra.mxu0 0.0
    %564 = vmatprep.subr.mxu0 0.0
    %565 = vmatpush2.msra.mxu0 0.0
    %566 = vmatprep.subr.mxu0 0.0
    %567 = vmatpush2.msra.mxu0 0.0
    %568 = vmatprep.subr.mxu0 0.0
    %569 = vmatpush2.msra.mxu0 0.0
    %570 = vmatprep.subr.mxu0 0.0
    %571 = vmatpush2.msra.mxu0 0.0
    %572 = vmatprep.subr.mxu0 0.0
    %573 = vmatpush2.msra.mxu0 0.0
    %574 = vmatprep.subr.mxu0 0.0
    %575 = vmatpush2.msra.mxu0 0.0
    %576 = vmatprep.subr.mxu0 0.0
    %577 = vmatpush2.msra.mxu0 0.0
    %578 = vmatprep.subr.mxu0 0.0
    %579 = vmatpush2.msra.mxu0 0.0
    %580 = vmatprep.subr.mxu0 0.0
    %581 = vmatpush2.msra.mxu0 0.0
    %582 = vmatprep.subr.mxu0 0.0
    %583 = vmatpush2.msra.mxu0 0.0
    %584 = vmatprep.subr.mxu0 0.0
    %585 = vmatpush2.msra.mxu0 0.0
    %586 = vmatprep.subr.mxu0 0.0
    %587 = vmatpush2.msra.mxu0 0.0
    %588 = vmatprep.mubr.f32.mxu0 0.0
    %589 = vmatmul.mubr.f32.gmra.mxu0 %v522
    %v590 = vpop.f32.mrf.mxu0
    %v591 = vadd.f32 0.0, %v590
    %v592 = vpop.f32.mrf.mxu0
    %v593 = vadd.f32 0.0, %v592
    %594 = vdwg.mxu0
    %v597 = vrot.slane %v591, 5
    %v598 = vrot.slane %v593, 5
    %v601 = vadd.f32 %v182, %v597
    %v602 = vadd.f32 %v183, %v598
    %v603 = vxor.u32 %v601, 2147483648
    %v604 = vmul.f32 %v603, 1.442695
    %v605 = vpow.pop %v604
    %v606 = vadd.f32 %v605, 1.0
    %v607 = vrcp.pop %v606
    %v608 = vmul.f32 1.0, %v607
    %v609 = vtanh.pop %v602
    %v610 = vxor.u32 %v602, 2147483648
    %v611 = vmul.f32 %v610, 1.442695
    %v612 = vpow.pop %v611
    %v613 = vadd.f32 %v612, 1.0
    %v614 = vrcp.pop %v613
    %v615 = vmul.f32 1.0, %v614
    %v617 = vrot.slane %v515, 7
    %v619 = vmul.f32 %v608, %v617
    %v620 = vmul.f32 %v608, %v609
    %622 = vrot.lane.b32.xlu0 %v620, 64
    %v623 = vpop.permute.xlu0 %622
    %v625 = vadd.f32 %v619, %v623
    %v626 = vtanh.pop %v625
    %v627 = vmul.f32 %v615, %v626
    %v629 = vrot.slane %v627, 3
    %630 = vrot.lane.b32.xlu0 %v629, 64
    %v631 = vpop.permute.xlu0 %630
    %v632 = vsel %vm200, %v631, 0
    %634 = vmatprep.subr.mxu0 0.0
    %635 = vmatpush1.msra.mxu0 0.0
    %636 = vmatprep.subr.mxu0 0.0
    %637 = vmatpush1.msra.mxu0 0.0
    %638 = vmatprep.subr.mxu0 0.0
    %639 = vmatpush1.msra.mxu0 0.0
    %640 = vmatprep.subr.mxu0 0.0
    %641 = vmatpush1.msra.mxu0 0.0
    %642 = vmatprep.subr.mxu0 0.0
    %643 = vmatpush1.msra.mxu0 0.0
    %644 = vmatprep.subr.mxu0 0.0
    %645 = vmatpush1.msra.mxu0 0.0
    %646 = vmatprep.subr.mxu0 0.0
    %647 = vmatpush1.msra.mxu0 0.0
    %648 = vmatprep.subr.mxu0 0.0
    %649 = vmatpush1.msra.mxu0 0.0
    %650 = vmatprep.subr.mxu0 %v199
    %651 = vmatpush1.msra.mxu0 %v198
    %652 = vmatprep.subr.mxu0 %v197
    %653 = vmatpush1.msra.mxu0 %v196
    %654 = vmatprep.subr.mxu0 %v195
    %655 = vmatpush1.msra.mxu0 %v194
    %656 = vmatprep.subr.mxu0 %v193
    %657 = vmatpush1.msra.mxu0 %v192
    %658 = vmatprep.subr.mxu0 %v191
    %659 = vmatpush1.msra.mxu0 %v190
    %660 = vmatprep.subr.mxu0 %v189
    %661 = vmatpush1.msra.mxu0 %v188
    %662 = vmatprep.subr.mxu0 %v187
    %663 = vmatpush1.msra.mxu0 %v186
    %664 = vmatprep.subr.mxu0 %v185
    %665 = vmatpush1.msra.mxu0 %v184
    %666 = vmatprep.subr.mxu0 0.0
    %667 = vmatpush2.msra.mxu0 0.0
    %668 = vmatprep.subr.mxu0 0.0
    %669 = vmatpush2.msra.mxu0 0.0
    %670 = vmatprep.subr.mxu0 0.0
    %671 = vmatpush2.msra.mxu0 0.0
    %672 = vmatprep.subr.mxu0 0.0
    %673 = vmatpush2.msra.mxu0 0.0
    %674 = vmatprep.subr.mxu0 0.0
    %675 = vmatpush2.msra.mxu0 0.0
    %676 = vmatprep.subr.mxu0 0.0
    %677 = vmatpush2.msra.mxu0 0.0
    %678 = vmatprep.subr.mxu0 0.0
    %679 = vmatpush2.msra.mxu0 0.0
    %680 = vmatprep.subr.mxu0 0.0
    %681 = vmatpush2.msra.mxu0 0.0
    %682 = vmatprep.subr.mxu0 0.0
    %683 = vmatpush2.msra.mxu0 0.0
    %684 = vmatprep.subr.mxu0 0.0
    %685 = vmatpush2.msra.mxu0 0.0
    %686 = vmatprep.subr.mxu0 0.0
    %687 = vmatpush2.msra.mxu0 0.0
    %688 = vmatprep.subr.mxu0 0.0
    %689 = vmatpush2.msra.mxu0 0.0
    %690 = vmatprep.subr.mxu0 0.0
    %691 = vmatpush2.msra.mxu0 0.0
    %692 = vmatprep.subr.mxu0 0.0
    %693 = vmatpush2.msra.mxu0 0.0
    %694 = vmatprep.subr.mxu0 0.0
    %695 = vmatpush2.msra.mxu0 0.0
    %696 = vmatprep.subr.mxu0 0.0
    %697 = vmatpush2.msra.mxu0 0.0
    %698 = vmatprep.mubr.f32.mxu0 0.0
    %699 = vmatmul.mubr.f32.gmra.mxu0 %v632
    %v700 = vpop.f32.mrf.mxu0
    %v701 = vadd.f32 0.0, %v700
    %v702 = vpop.f32.mrf.mxu0
    %v703 = vadd.f32 0.0, %v702
    %704 = vdwg.mxu0
    %v707 = vrot.slane %v701, 4
    %v708 = vrot.slane %v703, 4
    %v711 = vadd.f32 %v182, %v707
    %v712 = vadd.f32 %v183, %v708
    %v713 = vxor.u32 %v711, 2147483648
    %v714 = vmul.f32 %v713, 1.442695
    %v715 = vpow.pop %v714
    %v716 = vadd.f32 %v715, 1.0
    %v717 = vrcp.pop %v716
    %v718 = vmul.f32 1.0, %v717
    %v719 = vtanh.pop %v712
    %v720 = vxor.u32 %v712, 2147483648
    %v721 = vmul.f32 %v720, 1.442695
    %v722 = vpow.pop %v721
    %v723 = vadd.f32 %v722, 1.0
    %v724 = vrcp.pop %v723
    %v725 = vmul.f32 1.0, %v724
    %v727 = vrot.slane %v625, 7
    %v729 = vmul.f32 %v718, %v727
    %v730 = vmul.f32 %v718, %v719
    %732 = vrot.lane.b32.xlu0 %v730, 64
    %v733 = vpop.permute.xlu0 %732
    %v735 = vadd.f32 %v729, %v733
    %v736 = vtanh.pop %v735
    %v737 = vmul.f32 %v725, %v736
    %v739 = vrot.slane %v737, 4
    %740 = vrot.lane.b32.xlu0 %v739, 64
    %v741 = vpop.permute.xlu0 %740
    %v742 = vsel %vm200, %v741, 0
    %744 = vmatprep.subr.mxu0 0.0
    %745 = vmatpush1.msra.mxu0 0.0
    %746 = vmatprep.subr.mxu0 0.0
    %747 = vmatpush1.msra.mxu0 0.0
    %748 = vmatprep.subr.mxu0 0.0
    %749 = vmatpush1.msra.mxu0 0.0
    %750 = vmatprep.subr.mxu0 0.0
    %751 = vmatpush1.msra.mxu0 0.0
    %752 = vmatprep.subr.mxu0 0.0
    %753 = vmatpush1.msra.mxu0 0.0
    %754 = vmatprep.subr.mxu0 0.0
    %755 = vmatpush1.msra.mxu0 0.0
    %756 = vmatprep.subr.mxu0 0.0
    %757 = vmatpush1.msra.mxu0 0.0
    %758 = vmatprep.subr.mxu0 0.0
    %759 = vmatpush1.msra.mxu0 0.0
    %760 = vmatprep.subr.mxu0 %v199
    %761 = vmatpush1.msra.mxu0 %v198
    %762 = vmatprep.subr.mxu0 %v197
    %763 = vmatpush1.msra.mxu0 %v196
    %764 = vmatprep.subr.mxu0 %v195
    %765 = vmatpush1.msra.mxu0 %v194
    %766 = vmatprep.subr.mxu0 %v193
    %767 = vmatpush1.msra.mxu0 %v192
    %768 = vmatprep.subr.mxu0 %v191
    %769 = vmatpush1.msra.mxu0 %v190
    %770 = vmatprep.subr.mxu0 %v189
    %771 = vmatpush1.msra.mxu0 %v188
    %772 = vmatprep.subr.mxu0 %v187
    %773 = vmatpush1.msra.mxu0 %v186
    %774 = vmatprep.subr.mxu0 %v185
    %775 = vmatpush1.msra.mxu0 %v184
    %776 = vmatprep.subr.mxu0 0.0
    %777 = vmatpush2.msra.mxu0 0.0
    %778 = vmatprep.subr.mxu0 0.0
    %779 = vmatpush2.msra.mxu0 0.0
    %780 = vmatprep.subr.mxu0 0.0
    %781 = vmatpush2.msra.mxu0 0.0
    %782 = vmatprep.subr.mxu0 0.0
    %783 = vmatpush2.msra.mxu0 0.0
    %784 = vmatprep.subr.mxu0 0.0
    %785 = vmatpush2.msra.mxu0 0.0
    %786 = vmatprep.subr.mxu0 0.0
    %787 = vmatpush2.msra.mxu0 0.0
    %788 = vmatprep.subr.mxu0 0.0
    %789 = vmatpush2.msra.mxu0 0.0
    %790 = vmatprep.subr.mxu0 0.0
    %791 = vmatpush2.msra.mxu0 0.0
    %792 = vmatprep.subr.mxu0 0.0
    %793 = vmatpush2.msra.mxu0 0.0
    %794 = vmatprep.subr.mxu0 0.0
    %795 = vmatpush2.msra.mxu0 0.0
    %796 = vmatprep.subr.mxu0 0.0
    %797 = vmatpush2.msra.mxu0 0.0
    %798 = vmatprep.subr.mxu0 0.0
    %799 = vmatpush2.msra.mxu0 0.0
    %800 = vmatprep.subr.mxu0 0.0
    %801 = vmatpush2.msra.mxu0 0.0
    %802 = vmatprep.subr.mxu0 0.0
    %803 = vmatpush2.msra.mxu0 0.0
    %804 = vmatprep.subr.mxu0 0.0
    %805 = vmatpush2.msra.mxu0 0.0
    %806 = vmatprep.subr.mxu0 0.0
    %807 = vmatpush2.msra.mxu0 0.0
    %808 = vmatprep.mubr.f32.mxu0 0.0
    %809 = vmatmul.mubr.f32.gmra.mxu0 %v742
    %v810 = vpop.f32.mrf.mxu0
    %v811 = vadd.f32 0.0, %v810
    %v812 = vpop.f32.mrf.mxu0
    %v813 = vadd.f32 0.0, %v812
    %814 = vdwg.mxu0
    %v817 = vrot.slane %v811, 3
    %v818 = vrot.slane %v813, 3
    %v821 = vadd.f32 %v182, %v817
    %v822 = vadd.f32 %v183, %v818
    %v823 = vxor.u32 %v821, 2147483648
    %v824 = vmul.f32 %v823, 1.442695
    %v825 = vpow.pop %v824
    %v826 = vadd.f32 %v825, 1.0
    %v827 = vrcp.pop %v826
    %v828 = vmul.f32 1.0, %v827
    %v829 = vtanh.pop %v822
    %v830 = vxor.u32 %v822, 2147483648
    %v831 = vmul.f32 %v830, 1.442695
    %v832 = vpow.pop %v831
    %v833 = vadd.f32 %v832, 1.0
    %v834 = vrcp.pop %v833
    %v835 = vmul.f32 1.0, %v834
    %v837 = vrot.slane %v735, 7
    %v839 = vmul.f32 %v828, %v837
    %v840 = vmul.f32 %v828, %v829
    %842 = vrot.lane.b32.xlu0 %v840, 64
    %v843 = vpop.permute.xlu0 %842
    %v845 = vadd.f32 %v839, %v843
    %v846 = vtanh.pop %v845
    %v847 = vmul.f32 %v835, %v846
    %v849 = vrot.slane %v847, 5
    %850 = vrot.lane.b32.xlu0 %v849, 64
    %v851 = vpop.permute.xlu0 %850
    %v852 = vsel %vm200, %v851, 0
    %854 = vmatprep.subr.mxu0 0.0
    %855 = vmatpush1.msra.mxu0 0.0
    %856 = vmatprep.subr.mxu0 0.0
    %857 = vmatpush1.msra.mxu0 0.0
    %858 = vmatprep.subr.mxu0 0.0
    %859 = vmatpush1.msra.mxu0 0.0
    %860 = vmatprep.subr.mxu0 0.0
    %861 = vmatpush1.msra.mxu0 0.0
    %862 = vmatprep.subr.mxu0 0.0
    %863 = vmatpush1.msra.mxu0 0.0
    %864 = vmatprep.subr.mxu0 0.0
    %865 = vmatpush1.msra.mxu0 0.0
    %866 = vmatprep.subr.mxu0 0.0
    %867 = vmatpush1.msra.mxu0 0.0
    %868 = vmatprep.subr.mxu0 0.0
    %869 = vmatpush1.msra.mxu0 0.0
    %870 = vmatprep.subr.mxu0 %v199
    %871 = vmatpush1.msra.mxu0 %v198
    %872 = vmatprep.subr.mxu0 %v197
    %873 = vmatpush1.msra.mxu0 %v196
    %874 = vmatprep.subr.mxu0 %v195
    %875 = vmatpush1.msra.mxu0 %v194
    %876 = vmatprep.subr.mxu0 %v193
    %877 = vmatpush1.msra.mxu0 %v192
    %878 = vmatprep.subr.mxu0 %v191
    %879 = vmatpush1.msra.mxu0 %v190
    %880 = vmatprep.subr.mxu0 %v189
    %881 = vmatpush1.msra.mxu0 %v188
    %882 = vmatprep.subr.mxu0 %v187
    %883 = vmatpush1.msra.mxu0 %v186
    %884 = vmatprep.subr.mxu0 %v185
    %885 = vmatpush1.msra.mxu0 %v184
    %886 = vmatprep.subr.mxu0 0.0
    %887 = vmatpush2.msra.mxu0 0.0
    %888 = vmatprep.subr.mxu0 0.0
    %889 = vmatpush2.msra.mxu0 0.0
    %890 = vmatprep.subr.mxu0 0.0
    %891 = vmatpush2.msra.mxu0 0.0
    %892 = vmatprep.subr.mxu0 0.0
    %893 = vmatpush2.msra.mxu0 0.0
    %894 = vmatprep.subr.mxu0 0.0
    %895 = vmatpush2.msra.mxu0 0.0
    %896 = vmatprep.subr.mxu0 0.0
    %897 = vmatpush2.msra.mxu0 0.0
    %898 = vmatprep.subr.mxu0 0.0
    %899 = vmatpush2.msra.mxu0 0.0
    %900 = vmatprep.subr.mxu0 0.0
    %901 = vmatpush2.msra.mxu0 0.0
    %902 = vmatprep.subr.mxu0 0.0
    %903 = vmatpush2.msra.mxu0 0.0
    %904 = vmatprep.subr.mxu0 0.0
    %905 = vmatpush2.msra.mxu0 0.0
    %906 = vmatprep.subr.mxu0 0.0
    %907 = vmatpush2.msra.mxu0 0.0
    %908 = vmatprep.subr.mxu0 0.0
    %909 = vmatpush2.msra.mxu0 0.0
    %910 = vmatprep.subr.mxu0 0.0
    %911 = vmatpush2.msra.mxu0 0.0
    %912 = vmatprep.subr.mxu0 0.0
    %913 = vmatpush2.msra.mxu0 0.0
    %914 = vmatprep.subr.mxu0 0.0
    %915 = vmatpush2.msra.mxu0 0.0
    %916 = vmatprep.subr.mxu0 0.0
    %917 = vmatpush2.msra.mxu0 0.0
    %918 = vmatprep.mubr.f32.mxu0 0.0
    %919 = vmatmul.mubr.f32.gmra.mxu0 %v852
    %v920 = vpop.f32.mrf.mxu0
    %v921 = vadd.f32 0.0, %v920
    %v922 = vpop.f32.mrf.mxu0
    %v923 = vadd.f32 0.0, %v922
    %924 = vdwg.mxu0
    %v927 = vrot.slane %v921, 2
    %v928 = vrot.slane %v923, 2
    %v931 = vadd.f32 %v182, %v927
    %v932 = vadd.f32 %v183, %v928
    %v933 = vxor.u32 %v931, 2147483648
    %v934 = vmul.f32 %v933, 1.442695
    %v935 = vpow.pop %v934
    %v936 = vadd.f32 %v935, 1.0
    %v937 = vrcp.pop %v936
    %v938 = vmul.f32 1.0, %v937
    %v939 = vtanh.pop %v932
    %v940 = vxor.u32 %v932, 2147483648
    %v941 = vmul.f32 %v940, 1.442695
    %v942 = vpow.pop %v941
    %v943 = vadd.f32 %v942, 1.0
    %v944 = vrcp.pop %v943
    %v945 = vmul.f32 1.0, %v944
    %v947 = vrot.slane %v845, 7
    %v949 = vmul.f32 %v938, %v947
    %v950 = vmul.f32 %v938, %v939
    %952 = vrot.lane.b32.xlu0 %v950, 64
    %v953 = vpop.permute.xlu0 %952
    %v955 = vadd.f32 %v949, %v953
    %v956 = vtanh.pop %v955
    %v957 = vmul.f32 %v945, %v956
    %v959 = vrot.slane %v957, 6
    %960 = vrot.lane.b32.xlu0 %v959, 64
    %v961 = vpop.permute.xlu0 %960
    %v962 = vsel %vm200, %v961, 0
    %964 = vmatprep.subr.mxu0 0.0
    %965 = vmatpush1.msra.mxu0 0.0
    %966 = vmatprep.subr.mxu0 0.0
    %967 = vmatpush1.msra.mxu0 0.0
    %968 = vmatprep.subr.mxu0 0.0
    %969 = vmatpush1.msra.mxu0 0.0
    %970 = vmatprep.subr.mxu0 0.0
    %971 = vmatpush1.msra.mxu0 0.0
    %972 = vmatprep.subr.mxu0 0.0
    %973 = vmatpush1.msra.mxu0 0.0
    %974 = vmatprep.subr.mxu0 0.0
    %975 = vmatpush1.msra.mxu0 0.0
    %976 = vmatprep.subr.mxu0 0.0
    %977 = vmatpush1.msra.mxu0 0.0
    %978 = vmatprep.subr.mxu0 0.0
    %979 = vmatpush1.msra.mxu0 0.0
    %980 = vmatprep.subr.mxu0 %v199
    %981 = vmatpush1.msra.mxu0 %v198
    %982 = vmatprep.subr.mxu0 %v197
    %983 = vmatpush1.msra.mxu0 %v196
    %984 = vmatprep.subr.mxu0 %v195
    %985 = vmatpush1.msra.mxu0 %v194
    %986 = vmatprep.subr.mxu0 %v193
    %987 = vmatpush1.msra.mxu0 %v192
    %988 = vmatprep.subr.mxu0 %v191
    %989 = vmatpush1.msra.mxu0 %v190
    %990 = vmatprep.subr.mxu0 %v189
    %991 = vmatpush1.msra.mxu0 %v188
    %992 = vmatprep.subr.mxu0 %v187
    %993 = vmatpush1.msra.mxu0 %v186
    %994 = vmatprep.subr.mxu0 %v185
    %995 = vmatpush1.msra.mxu0 %v184
    %996 = vmatprep.subr.mxu0 0.0
    %997 = vmatpush2.msra.mxu0 0.0
    %998 = vmatprep.subr.mxu0 0.0
    %999 = vmatpush2.msra.mxu0 0.0
    %1000 = vmatprep.subr.mxu0 0.0
    %1001 = vmatpush2.msra.mxu0 0.0
    %1002 = vmatprep.subr.mxu0 0.0
    %1003 = vmatpush2.msra.mxu0 0.0
    %1004 = vmatprep.subr.mxu0 0.0
    %1005 = vmatpush2.msra.mxu0 0.0
    %1006 = vmatprep.subr.mxu0 0.0
    %1007 = vmatpush2.msra.mxu0 0.0
    %1008 = vmatprep.subr.mxu0 0.0
    %1009 = vmatpush2.msra.mxu0 0.0
    %1010 = vmatprep.subr.mxu0 0.0
    %1011 = vmatpush2.msra.mxu0 0.0
    %1012 = vmatprep.subr.mxu0 0.0
    %1013 = vmatpush2.msra.mxu0 0.0
    %1014 = vmatprep.subr.mxu0 0.0
    %1015 = vmatpush2.msra.mxu0 0.0
    %1016 = vmatprep.subr.mxu0 0.0
    %1017 = vmatpush2.msra.mxu0 0.0
    %1018 = vmatprep.subr.mxu0 0.0
    %1019 = vmatpush2.msra.mxu0 0.0
    %1020 = vmatprep.subr.mxu0 0.0
    %1021 = vmatpush2.msra.mxu0 0.0
    %1022 = vmatprep.subr.mxu0 0.0
    %1023 = vmatpush2.msra.mxu0 0.0
    %1024 = vmatprep.subr.mxu0 0.0
    %1025 = vmatpush2.msra.mxu0 0.0
    %1026 = vmatprep.subr.mxu0 0.0
    %1027 = vmatpush2.msra.mxu0 0.0
    %1028 = vmatprep.mubr.f32.mxu0 0.0
    %1029 = vmatmul.mubr.f32.gmra.mxu0 %v962
    %v1030 = vpop.f32.mrf.mxu0
    %v1031 = vadd.f32 0.0, %v1030
    %v1032 = vpop.f32.mrf.mxu0
    %v1033 = vadd.f32 0.0, %v1032
    %1034 = vdwg.mxu0
    %v1037 = vrot.slane %v1031, 1
    %v1038 = vrot.slane %v1033, 1
    %v1041 = vadd.f32 %v182, %v1037
    %v1042 = vadd.f32 %v183, %v1038
    %v1043 = vxor.u32 %v1041, 2147483648
    %v1044 = vmul.f32 %v1043, 1.442695
    %v1045 = vpow.pop %v1044
    %v1046 = vadd.f32 %v1045, 1.0
    %v1047 = vrcp.pop %v1046
    %v1048 = vmul.f32 1.0, %v1047
    %v1049 = vtanh.pop %v1042
    %v1050 = vxor.u32 %v1042, 2147483648
    %v1051 = vmul.f32 %v1050, 1.442695
    %v1052 = vpow.pop %v1051
    %v1053 = vadd.f32 %v1052, 1.0
    %v1054 = vrcp.pop %v1053
    %v1055 = vmul.f32 1.0, %v1054
    %v1057 = vrot.slane %v955, 7
    %v1059 = vmul.f32 %v1048, %v1057
    %v1060 = vmul.f32 %v1048, %v1049
    %1062 = vrot.lane.b32.xlu0 %v1060, 64
    %v1063 = vpop.permute.xlu0 %1062
    %v1065 = vadd.f32 %v1059, %v1063
    %v1066 = vtanh.pop %v1065
    %v1067 = vmul.f32 %v1055, %v1066
    %vm1068 = vcmask 1040384
    %v1069 = vsel %vm1068, %v298, %v407
    %vm1070 = vcmask 1041408
    %v1071 = vsel %vm1070, %v1069, %v517
    %vm1072 = vcmask 1042432
    %v1073 = vsel %vm1072, %v1071, %v627
    %vm1074 = vcmask 1043456
    %v1075 = vsel %vm1074, %v1073, %v737
    %vm1076 = vcmask 1044480
    %v1077 = vsel %vm1076, %v1075, %v847
    %vm1078 = vcmask 1045504
    %v1079 = vsel %vm1078, %v1077, %v957
    %vm1080 = vcmask 1046528
    %v1081 = vsel %vm1080, %v1079, %v1067
    %v1082 = vld [vmem:[#allocation6] sm:$0xff]
    %v1083 = vld [vmem:[#allocation6 + $0x8] sm:$0xff]
    %v1084 = vld [vmem:[#allocation6 + $0x10] sm:$0xff]
    %v1085 = vld [vmem:[#allocation6 + $0x18] sm:$0xff]
    %v1086 = vld [vmem:[#allocation6 + $0x20] sm:$0xff]
    %v1087 = vld [vmem:[#allocation6 + $0x28] sm:$0xff]
    %v1088 = vld [vmem:[#allocation6 + $0x30] sm:$0xff]
    %v1089 = vld [vmem:[#allocation6 + $0x38] sm:$0xff]
    %v1090 = vld [vmem:[%s6] sm:$0x1]
    %v1092 = vlaneseq
    %v1093 = vshrl.u32 %v1092, 7
    %v1094 = vsub.s32 0, %v1093
    %v1095 = vrot.slane %v1090, %v1094
    %1098 = vrot.lane.b32.xlu0 %v1081, 64
    %v1099 = vpop.permute.xlu0 %1098
    %v1100 = vsel %vm200, %v1099, 0
    %1102 = vmatprep.subr.mxu0 0.0
    %1103 = vmatpush1.msra.mxu0 0.0
    %1104 = vmatprep.subr.mxu0 0.0
    %1105 = vmatpush1.msra.mxu0 0.0
    %1106 = vmatprep.subr.mxu0 0.0
    %1107 = vmatpush1.msra.mxu0 0.0
    %1108 = vmatprep.subr.mxu0 0.0
    %1109 = vmatpush1.msra.mxu0 0.0
    %1110 = vmatprep.subr.mxu0 0.0
    %1111 = vmatpush1.msra.mxu0 0.0
    %1112 = vmatprep.subr.mxu0 0.0
    %1113 = vmatpush1.msra.mxu0 0.0
    %1114 = vmatprep.subr.mxu0 0.0
    %1115 = vmatpush1.msra.mxu0 0.0
    %1116 = vmatprep.subr.mxu0 0.0
    %1117 = vmatpush1.msra.mxu0 0.0
    %1118 = vmatprep.subr.mxu0 0.0
    %1119 = vmatpush1.msra.mxu0 %v1089
    %1120 = vmatprep.subr.mxu0 0.0
    %1121 = vmatpush1.msra.mxu0 %v1088
    %1122 = vmatprep.subr.mxu0 0.0
    %1123 = vmatpush1.msra.mxu0 %v1087
    %1124 = vmatprep.subr.mxu0 0.0
    %1125 = vmatpush1.msra.mxu0 %v1086
    %1126 = vmatprep.subr.mxu0 0.0
    %1127 = vmatpush1.msra.mxu0 %v1085
    %1128 = vmatprep.subr.mxu0 0.0
    %1129 = vmatpush1.msra.mxu0 %v1084
    %1130 = vmatprep.subr.mxu0 0.0
    %1131 = vmatpush1.msra.mxu0 %v1083
    %1132 = vmatprep.subr.mxu0 0.0
    %1133 = vmatpush1.msra.mxu0 %v1082
    %1134 = vmatprep.subr.mxu0 0.0
    %1135 = vmatpush2.msra.mxu0 0.0
    %1136 = vmatprep.subr.mxu0 0.0
    %1137 = vmatpush2.msra.mxu0 0.0
    %1138 = vmatprep.subr.mxu0 0.0
    %1139 = vmatpush2.msra.mxu0 0.0
    %1140 = vmatprep.subr.mxu0 0.0
    %1141 = vmatpush2.msra.mxu0 0.0
    %1142 = vmatprep.subr.mxu0 0.0
    %1143 = vmatpush2.msra.mxu0 0.0
    %1144 = vmatprep.subr.mxu0 0.0
    %1145 = vmatpush2.msra.mxu0 0.0
    %1146 = vmatprep.subr.mxu0 0.0
    %1147 = vmatpush2.msra.mxu0 0.0
    %1148 = vmatprep.subr.mxu0 0.0
    %1149 = vmatpush2.msra.mxu0 0.0
    %1150 = vmatprep.subr.mxu0 0.0
    %1151 = vmatpush2.msra.mxu0 0.0
    %1152 = vmatprep.subr.mxu0 0.0
    %1153 = vmatpush2.msra.mxu0 0.0
    %1154 = vmatprep.subr.mxu0 0.0
    %1155 = vmatpush2.msra.mxu0 0.0
    %1156 = vmatprep.subr.mxu0 0.0
    %1157 = vmatpush2.msra.mxu0 0.0
    %1158 = vmatprep.subr.mxu0 0.0
    %1159 = vmatpush2.msra.mxu0 0.0
    %1160 = vmatprep.subr.mxu0 0.0
    %1161 = vmatpush2.msra.mxu0 0.0
    %1162 = vmatprep.subr.mxu0 0.0
    %1163 = vmatpush2.msra.mxu0 0.0
    %1164 = vmatprep.subr.mxu0 0.0
    %1165 = vmatpush2.msra.mxu0 0.0
    %1166 = vmatprep.mubr.f32.mxu0 0.0
    %1167 = vmatmul.mubr.f32.gmra.mxu0 %v1100
    %v1168 = vpop.f32.mrf.mxu0
    %v1169 = vadd.f32 %v1095, %v1168
    %v1170 = vpop.f32.mrf.mxu0
    %1171 = vdwg.mxu0
    %v1172 = vld [vmem:[#allocation8] sm:$0xff]
    %v1173 = vld [vmem:[#allocation8 + $0x8] sm:$0xff]
    %v1174 = vld [vmem:[#allocation8 + $0x10] sm:$0xff]
    %v1175 = vld [vmem:[#allocation8 + $0x18] sm:$0xff]
    %vm1176 = vcmask 261120
    %v1177 = vsel %vm1176, 0.0, 0
    %1179 = vmatprep.subr.mxu0 0.0
    %1180 = vmatpush1.msra.mxu0 0.0
    %1181 = vmatprep.subr.mxu0 0.0
    %1182 = vmatpush1.msra.mxu0 0.0
    %1183 = vmatprep.subr.mxu0 0.0
    %1184 = vmatpush1.msra.mxu0 0.0
    %1185 = vmatprep.subr.mxu0 0.0
    %1186 = vmatpush1.msra.mxu0 0.0
    %1187 = vmatprep.subr.mxu0 0.0
    %1188 = vmatpush1.msra.mxu0 0.0
    %1189 = vmatprep.subr.mxu0 0.0
    %1190 = vmatpush1.msra.mxu0 0.0
    %1191 = vmatprep.subr.mxu0 0.0
    %1192 = vmatpush1.msra.mxu0 0.0
    %1193 = vmatprep.subr.mxu0 0.0
    %1194 = vmatpush1.msra.mxu0 0.0
    %1195 = vmatprep.subr.mxu0 0.0
    %1196 = vmatpush1.msra.mxu0 0.0
    %1197 = vmatprep.subr.mxu0 0.0
    %1198 = vmatpush1.msra.mxu0 0.0
    %1199 = vmatprep.subr.mxu0 0.0
    %1200 = vmatpush1.msra.mxu0 0.0
    %1201 = vmatprep.subr.mxu0 0.0
    %1202 = vmatpush1.msra.mxu0 0.0
    %1203 = vmatprep.subr.mxu0 0.0
    %1204 = vmatpush1.msra.mxu0 %v1175
    %1205 = vmatprep.subr.mxu0 0.0
    %1206 = vmatpush1.msra.mxu0 %v1174
    %1207 = vmatprep.subr.mxu0 0.0
    %1208 = vmatpush1.msra.mxu0 %v1173
    %1209 = vmatprep.subr.mxu0 0.0
    %1210 = vmatpush1.msra.mxu0 %v1172
    %1211 = vmatprep.subr.mxu0 0.0
    %1212 = vmatpush2.msra.mxu0 0.0
    %1213 = vmatprep.subr.mxu0 0.0
    %1214 = vmatpush2.msra.mxu0 0.0
    %1215 = vmatprep.subr.mxu0 0.0
    %1216 = vmatpush2.msra.mxu0 0.0
    %1217 = vmatprep.subr.mxu0 0.0
    %1218 = vmatpush2.msra.mxu0 0.0
    %1219 = vmatprep.subr.mxu0 0.0
    %1220 = vmatpush2.msra.mxu0 0.0
    %1221 = vmatprep.subr.mxu0 0.0
    %1222 = vmatpush2.msra.mxu0 0.0
    %1223 = vmatprep.subr.mxu0 0.0
    %1224 = vmatpush2.msra.mxu0 0.0
    %1225 = vmatprep.subr.mxu0 0.0
    %1226 = vmatpush2.msra.mxu0 0.0
    %1227 = vmatprep.subr.mxu0 0.0
    %1228 = vmatpush2.msra.mxu0 0.0
    %1229 = vmatprep.subr.mxu0 0.0
    %1230 = vmatpush2.msra.mxu0 0.0
    %1231 = vmatprep.subr.mxu0 0.0
    %1232 = vmatpush2.msra.mxu0 0.0
    %1233 = vmatprep.subr.mxu0 0.0
    %1234 = vmatpush2.msra.mxu0 0.0
    %1235 = vmatprep.subr.mxu0 0.0
    %1236 = vmatpush2.msra.mxu0 0.0
    %1237 = vmatprep.subr.mxu0 0.0
    %1238 = vmatpush2.msra.mxu0 0.0
    %1239 = vmatprep.subr.mxu0 0.0
    %1240 = vmatpush2.msra.mxu0 0.0
    %1241 = vmatprep.subr.mxu0 0.0
    %1242 = vmatpush2.msra.mxu0 0.0
    %1243 = vmatprep.mubr.f32.mxu0 0.0
    %1244 = vmatmul.mubr.f32.gmra.mxu0 %v1177
    %v1245 = vpop.f32.mrf.mxu0
    %v1246 = vadd.f32 0.0, %v1245
    %v1247 = vpop.f32.mrf.mxu0
    %1248 = vdwg.mxu0
    %v1249 = vadd.f32 %v1169, %v1246
    %v1250 = vxor.u32 %v1249, 2147483648
    %v1251 = vmul.f32 %v1250, 1.442695
    %v1252 = vpow.pop %v1251
    %v1253 = vadd.f32 %v1252, 1.0
    %v1254 = vrcp.pop %v1253
    %v1255 = vmul.f32 1.0, %v1254
    %v1256 = vtanh.pop %v1249
    %v1257 = vmul.f32 %v1255, 0.0
    %1259 = vrot.lane.b32.xlu0 %v1256, 64
    %v1260 = vpop.permute.xlu0 %1259
    %v1262 = vmul.f32 %v1255, %v1260
    %1264 = vrot.lane.b32.xlu0 %v1262, 32
    %v1265 = vpop.permute.xlu0 %1264
    %v1267 = vadd.f32 %v1257, %v1265
    %v1268 = vtanh.pop %v1267
    %1270 = vrot.lane.b32.xlu0 %v1268, 64
    %v1271 = vpop.permute.xlu0 %1270
    %v1273 = vmul.f32 %v1255, %v1271
    %1275 = vrot.lane.b32.xlu0 %v1273, 32
    %v1276 = vpop.permute.xlu0 %1275
    %v1277 = vsel %vm1176, %v1276, 0
    %1279 = vmatprep.subr.mxu0 0.0
    %1280 = vmatpush1.msra.mxu0 0.0
    %1281 = vmatprep.subr.mxu0 0.0
    %1282 = vmatpush1.msra.mxu0 0.0
    %1283 = vmatprep.subr.mxu0 0.0
    %1284 = vmatpush1.msra.mxu0 0.0
    %1285 = vmatprep.subr.mxu0 0.0
    %1286 = vmatpush1.msra.mxu0 0.0
    %1287 = vmatprep.subr.mxu0 0.0
    %1288 = vmatpush1.msra.mxu0 0.0
    %1289 = vmatprep.subr.mxu0 0.0
    %1290 = vmatpush1.msra.mxu0 0.0
    %1291 = vmatprep.subr.mxu0 0.0
    %1292 = vmatpush1.msra.mxu0 0.0
    %1293 = vmatprep.subr.mxu0 0.0
    %1294 = vmatpush1.msra.mxu0 0.0
    %1295 = vmatprep.subr.mxu0 0.0
    %1296 = vmatpush1.msra.mxu0 0.0
    %1297 = vmatprep.subr.mxu0 0.0
    %1298 = vmatpush1.msra.mxu0 0.0
    %1299 = vmatprep.subr.mxu0 0.0
    %1300 = vmatpush1.msra.mxu0 0.0
    %1301 = vmatprep.subr.mxu0 0.0
    %1302 = vmatpush1.msra.mxu0 0.0
    %1303 = vmatprep.subr.mxu0 0.0
    %1304 = vmatpush1.msra.mxu0 %v1175
    %1305 = vmatprep.subr.mxu0 0.0
    %1306 = vmatpush1.msra.mxu0 %v1174
    %1307 = vmatprep.subr.mxu0 0.0
    %1308 = vmatpush1.msra.mxu0 %v1173
    %1309 = vmatprep.subr.mxu0 0.0
    %1310 = vmatpush1.msra.mxu0 %v1172
    %1311 = vmatprep.subr.mxu0 0.0
    %1312 = vmatpush2.msra.mxu0 0.0
    %1313 = vmatprep.subr.mxu0 0.0
    %1314 = vmatpush2.msra.mxu0 0.0
    %1315 = vmatprep.subr.mxu0 0.0
    %1316 = vmatpush2.msra.mxu0 0.0
    %1317 = vmatprep.subr.mxu0 0.0
    %1318 = vmatpush2.msra.mxu0 0.0
    %1319 = vmatprep.subr.mxu0 0.0
    %1320 = vmatpush2.msra.mxu0 0.0
    %1321 = vmatprep.subr.mxu0 0.0
    %1322 = vmatpush2.msra.mxu0 0.0
    %1323 = vmatprep.subr.mxu0 0.0
    %1324 = vmatpush2.msra.mxu0 0.0
    %1325 = vmatprep.subr.mxu0 0.0
    %1326 = vmatpush2.msra.mxu0 0.0
    %1327 = vmatprep.subr.mxu0 0.0
    %1328 = vmatpush2.msra.mxu0 0.0
    %1329 = vmatprep.subr.mxu0 0.0
    %1330 = vmatpush2.msra.mxu0 0.0
    %1331 = vmatprep.subr.mxu0 0.0
    %1332 = vmatpush2.msra.mxu0 0.0
    %1333 = vmatprep.subr.mxu0 0.0
    %1334 = vmatpush2.msra.mxu0 0.0
    %1335 = vmatprep.subr.mxu0 0.0
    %1336 = vmatpush2.msra.mxu0 0.0
    %1337 = vmatprep.subr.mxu0 0.0
    %1338 = vmatpush2.msra.mxu0 0.0
    %1339 = vmatprep.subr.mxu0 0.0
    %1340 = vmatpush2.msra.mxu0 0.0
    %1341 = vmatprep.subr.mxu0 0.0
    %1342 = vmatpush2.msra.mxu0 0.0
    %1343 = vmatprep.mubr.f32.mxu0 0.0
    %1344 = vmatmul.mubr.f32.gmra.mxu0 %v1277
    %v1345 = vpop.f32.mrf.mxu0
    %v1346 = vadd.f32 0.0, %v1345
    %v1347 = vpop.f32.mrf.mxu0
    %1348 = vdwg.mxu0
    %v1350 = vrot.slane %v1346, 7
    %v1352 = vadd.f32 %v1169, %v1350
    %v1353 = vxor.u32 %v1352, 2147483648
    %v1354 = vmul.f32 %v1353, 1.442695
    %v1355 = vpow.pop %v1354
    %v1356 = vadd.f32 %v1355, 1.0
    %v1357 = vrcp.pop %v1356
    %v1358 = vmul.f32 1.0, %v1357
    %v1359 = vtanh.pop %v1352
    %v1361 = vrot.slane %v1267, 7
    %v1363 = vmul.f32 %v1358, %v1361
    %1365 = vrot.lane.b32.xlu0 %v1359, 64
    %v1366 = vpop.permute.xlu0 %1365
    %v1368 = vmul.f32 %v1358, %v1366
    %1370 = vrot.lane.b32.xlu0 %v1368, 32
    %v1371 = vpop.permute.xlu0 %1370
    %v1373 = vadd.f32 %v1363, %v1371
    %v1374 = vtanh.pop %v1373
    %1376 = vrot.lane.b32.xlu0 %v1374, 64
    %v1377 = vpop.permute.xlu0 %1376
    %v1379 = vmul.f32 %v1358, %v1377
    %v1381 = vrot.slane %v1379, 1
    %1382 = vrot.lane.b32.xlu0 %v1381, 32
    %v1383 = vpop.permute.xlu0 %1382
    %v1384 = vsel %vm1176, %v1383, 0
    %1386 = vmatprep.subr.mxu0 0.0
    %1387 = vmatpush1.msra.mxu0 0.0
    %1388 = vmatprep.subr.mxu0 0.0
    %1389 = vmatpush1.msra.mxu0 0.0
    %1390 = vmatprep.subr.mxu0 0.0
    %1391 = vmatpush1.msra.mxu0 0.0
    %1392 = vmatprep.subr.mxu0 0.0
    %1393 = vmatpush1.msra.mxu0 0.0
    %1394 = vmatprep.subr.mxu0 0.0
    %1395 = vmatpush1.msra.mxu0 0.0
    %1396 = vmatprep.subr.mxu0 0.0
    %1397 = vmatpush1.msra.mxu0 0.0
    %1398 = vmatprep.subr.mxu0 0.0
    %1399 = vmatpush1.msra.mxu0 0.0
    %1400 = vmatprep.subr.mxu0 0.0
    %1401 = vmatpush1.msra.mxu0 0.0
    %1402 = vmatprep.subr.mxu0 0.0
    %1403 = vmatpush1.msra.mxu0 0.0
    %1404 = vmatprep.subr.mxu0 0.0
    %1405 = vmatpush1.msra.mxu0 0.0
    %1406 = vmatprep.subr.mxu0 0.0
    %1407 = vmatpush1.msra.mxu0 0.0
    %1408 = vmatprep.subr.mxu0 0.0
    %1409 = vmatpush1.msra.mxu0 0.0
    %1410 = vmatprep.subr.mxu0 0.0
    %1411 = vmatpush1.msra.mxu0 %v1175
    %1412 = vmatprep.subr.mxu0 0.0
    %1413 = vmatpush1.msra.mxu0 %v1174
    %1414 = vmatprep.subr.mxu0 0.0
    %1415 = vmatpush1.msra.mxu0 %v1173
    %1416 = vmatprep.subr.mxu0 0.0
    %1417 = vmatpush1.msra.mxu0 %v1172
    %1418 = vmatprep.subr.mxu0 0.0
    %1419 = vmatpush2.msra.mxu0 0.0
    %1420 = vmatprep.subr.mxu0 0.0
    %1421 = vmatpush2.msra.mxu0 0.0
    %1422 = vmatprep.subr.mxu0 0.0
    %1423 = vmatpush2.msra.mxu0 0.0
    %1424 = vmatprep.subr.mxu0 0.0
    %1425 = vmatpush2.msra.mxu0 0.0
    %1426 = vmatprep.subr.mxu0 0.0
    %1427 = vmatpush2.msra.mxu0 0.0
    %1428 = vmatprep.subr.mxu0 0.0
    %1429 = vmatpush2.msra.mxu0 0.0
    %1430 = vmatprep.subr.mxu0 0.0
    %1431 = vmatpush2.msra.mxu0 0.0
    %1432 = vmatprep.subr.mxu0 0.0
    %1433 = vmatpush2.msra.mxu0 0.0
    %1434 = vmatprep.subr.mxu0 0.0
    %1435 = vmatpush2.msra.mxu0 0.0
    %1436 = vmatprep.subr.mxu0 0.0
    %1437 = vmatpush2.msra.mxu0 0.0
    %1438 = vmatprep.subr.mxu0 0.0
    %1439 = vmatpush2.msra.mxu0 0.0
    %1440 = vmatprep.subr.mxu0 0.0
    %1441 = vmatpush2.msra.mxu0 0.0
    %1442 = vmatprep.subr.mxu0 0.0
    %1443 = vmatpush2.msra.mxu0 0.0
    %1444 = vmatprep.subr.mxu0 0.0
    %1445 = vmatpush2.msra.mxu0 0.0
    %1446 = vmatprep.subr.mxu0 0.0
    %1447 = vmatpush2.msra.mxu0 0.0
    %1448 = vmatprep.subr.mxu0 0.0
    %1449 = vmatpush2.msra.mxu0 0.0
    %1450 = vmatprep.mubr.f32.mxu0 0.0
    %1451 = vmatmul.mubr.f32.gmra.mxu0 %v1384
    %v1452 = vpop.f32.mrf.mxu0
    %v1453 = vadd.f32 0.0, %v1452
    %v1454 = vpop.f32.mrf.mxu0
    %1455 = vdwg.mxu0
    %v1457 = vrot.slane %v1453, 6
    %v1459 = vadd.f32 %v1169, %v1457
    %v1460 = vxor.u32 %v1459, 2147483648
    %v1461 = vmul.f32 %v1460, 1.442695
    %v1462 = vpow.pop %v1461
    %v1463 = vadd.f32 %v1462, 1.0
    %v1464 = vrcp.pop %v1463
    %v1465 = vmul.f32 1.0, %v1464
    %v1466 = vtanh.pop %v1459
    %v1468 = vrot.slane %v1373, 7
    %v1470 = vmul.f32 %v1465, %v1468
    %1472 = vrot.lane.b32.xlu0 %v1466, 64
    %v1473 = vpop.permute.xlu0 %1472
    %v1475 = vmul.f32 %v1465, %v1473
    %1477 = vrot.lane.b32.xlu0 %v1475, 32
    %v1478 = vpop.permute.xlu0 %1477
    %v1480 = vadd.f32 %v1470, %v1478
    %v1481 = vtanh.pop %v1480
    %1483 = vrot.lane.b32.xlu0 %v1481, 64
    %v1484 = vpop.permute.xlu0 %1483
    %v1486 = vmul.f32 %v1465, %v1484
    %v1488 = vrot.slane %v1486, 2
    %1489 = vrot.lane.b32.xlu0 %v1488, 32
    %v1490 = vpop.permute.xlu0 %1489
    %v1491 = vsel %vm1176, %v1490, 0
    %1493 = vmatprep.subr.mxu0 0.0
    %1494 = vmatpush1.msra.mxu0 0.0
    %1495 = vmatprep.subr.mxu0 0.0
    %1496 = vmatpush1.msra.mxu0 0.0
    %1497 = vmatprep.subr.mxu0 0.0
    %1498 = vmatpush1.msra.mxu0 0.0
    %1499 = vmatprep.subr.mxu0 0.0
    %1500 = vmatpush1.msra.mxu0 0.0
    %1501 = vmatprep.subr.mxu0 0.0
    %1502 = vmatpush1.msra.mxu0 0.0
    %1503 = vmatprep.subr.mxu0 0.0
    %1504 = vmatpush1.msra.mxu0 0.0
    %1505 = vmatprep.subr.mxu0 0.0
    %1506 = vmatpush1.msra.mxu0 0.0
    %1507 = vmatprep.subr.mxu0 0.0
    %1508 = vmatpush1.msra.mxu0 0.0
    %1509 = vmatprep.subr.mxu0 0.0
    %1510 = vmatpush1.msra.mxu0 0.0
    %1511 = vmatprep.subr.mxu0 0.0
    %1512 = vmatpush1.msra.mxu0 0.0
    %1513 = vmatprep.subr.mxu0 0.0
    %1514 = vmatpush1.msra.mxu0 0.0
    %1515 = vmatprep.subr.mxu0 0.0
    %1516 = vmatpush1.msra.mxu0 0.0
    %1517 = vmatprep.subr.mxu0 0.0
    %1518 = vmatpush1.msra.mxu0 %v1175
    %1519 = vmatprep.subr.mxu0 0.0
    %1520 = vmatpush1.msra.mxu0 %v1174
    %1521 = vmatprep.subr.mxu0 0.0
    %1522 = vmatpush1.msra.mxu0 %v1173
    %1523 = vmatprep.subr.mxu0 0.0
    %1524 = vmatpush1.msra.mxu0 %v1172
    %1525 = vmatprep.subr.mxu0 0.0
    %1526 = vmatpush2.msra.mxu0 0.0
    %1527 = vmatprep.subr.mxu0 0.0
    %1528 = vmatpush2.msra.mxu0 0.0
    %1529 = vmatprep.subr.mxu0 0.0
    %1530 = vmatpush2.msra.mxu0 0.0
    %1531 = vmatprep.subr.mxu0 0.0
    %1532 = vmatpush2.msra.mxu0 0.0
    %1533 = vmatprep.subr.mxu0 0.0
    %1534 = vmatpush2.msra.mxu0 0.0
    %1535 = vmatprep.subr.mxu0 0.0
    %1536 = vmatpush2.msra.mxu0 0.0
    %1537 = vmatprep.subr.mxu0 0.0
    %1538 = vmatpush2.msra.mxu0 0.0
    %1539 = vmatprep.subr.mxu0 0.0
    %1540 = vmatpush2.msra.mxu0 0.0
    %1541 = vmatprep.subr.mxu0 0.0
    %1542 = vmatpush2.msra.mxu0 0.0
    %1543 = vmatprep.subr.mxu0 0.0
    %1544 = vmatpush2.msra.mxu0 0.0
    %1545 = vmatprep.subr.mxu0 0.0
    %1546 = vmatpush2.msra.mxu0 0.0
    %1547 = vmatprep.subr.mxu0 0.0
    %1548 = vmatpush2.msra.mxu0 0.0
    %1549 = vmatprep.subr.mxu0 0.0
    %1550 = vmatpush2.msra.mxu0 0.0
    %1551 = vmatprep.subr.mxu0 0.0
    %1552 = vmatpush2.msra.mxu0 0.0
    %1553 = vmatprep.subr.mxu0 0.0
    %1554 = vmatpush2.msra.mxu0 0.0
    %1555 = vmatprep.subr.mxu0 0.0
    %1556 = vmatpush2.msra.mxu0 0.0
    %1557 = vmatprep.mubr.f32.mxu0 0.0
    %1558 = vmatmul.mubr.f32.gmra.mxu0 %v1491
    %v1559 = vpop.f32.mrf.mxu0
    %v1560 = vadd.f32 0.0, %v1559
    %v1561 = vpop.f32.mrf.mxu0
    %1562 = vdwg.mxu0
    %v1564 = vrot.slane %v1560, 5
    %v1566 = vadd.f32 %v1169, %v1564
    %v1567 = vxor.u32 %v1566, 2147483648
    %v1568 = vmul.f32 %v1567, 1.442695
    %v1569 = vpow.pop %v1568
    %v1570 = vadd.f32 %v1569, 1.0
    %v1571 = vrcp.pop %v1570
    %v1572 = vmul.f32 1.0, %v1571
    %v1573 = vtanh.pop %v1566
    %v1575 = vrot.slane %v1480, 7
    %v1577 = vmul.f32 %v1572, %v1575
    %1579 = vrot.lane.b32.xlu0 %v1573, 64
    %v1580 = vpop.permute.xlu0 %1579
    %v1582 = vmul.f32 %v1572, %v1580
    %1584 = vrot.lane.b32.xlu0 %v1582, 32
    %v1585 = vpop.permute.xlu0 %1584
    %v1587 = vadd.f32 %v1577, %v1585
    %v1588 = vtanh.pop %v1587
    %1590 = vrot.lane.b32.xlu0 %v1588, 64
    %v1591 = vpop.permute.xlu0 %1590
    %v1593 = vmul.f32 %v1572, %v1591
    %v1595 = vrot.slane %v1593, 3
    %1596 = vrot.lane.b32.xlu0 %v1595, 32
    %v1597 = vpop.permute.xlu0 %1596
    %v1598 = vsel %vm1176, %v1597, 0
    %1600 = vmatprep.subr.mxu0 0.0
    %1601 = vmatpush1.msra.mxu0 0.0
    %1602 = vmatprep.subr.mxu0 0.0
    %1603 = vmatpush1.msra.mxu0 0.0
    %1604 = vmatprep.subr.mxu0 0.0
    %1605 = vmatpush1.msra.mxu0 0.0
    %1606 = vmatprep.subr.mxu0 0.0
    %1607 = vmatpush1.msra.mxu0 0.0
    %1608 = vmatprep.subr.mxu0 0.0
    %1609 = vmatpush1.msra.mxu0 0.0
    %1610 = vmatprep.subr.mxu0 0.0
    %1611 = vmatpush1.msra.mxu0 0.0
    %1612 = vmatprep.subr.mxu0 0.0
    %1613 = vmatpush1.msra.mxu0 0.0
    %1614 = vmatprep.subr.mxu0 0.0
    %1615 = vmatpush1.msra.mxu0 0.0
    %1616 = vmatprep.subr.mxu0 0.0
    %1617 = vmatpush1.msra.mxu0 0.0
    %1618 = vmatprep.subr.mxu0 0.0
    %1619 = vmatpush1.msra.mxu0 0.0
    %1620 = vmatprep.subr.mxu0 0.0
    %1621 = vmatpush1.msra.mxu0 0.0
    %1622 = vmatprep.subr.mxu0 0.0
    %1623 = vmatpush1.msra.mxu0 0.0
    %1624 = vmatprep.subr.mxu0 0.0
    %1625 = vmatpush1.msra.mxu0 %v1175
    %1626 = vmatprep.subr.mxu0 0.0
    %1627 = vmatpush1.msra.mxu0 %v1174
    %1628 = vmatprep.subr.mxu0 0.0
    %1629 = vmatpush1.msra.mxu0 %v1173
    %1630 = vmatprep.subr.mxu0 0.0
    %1631 = vmatpush1.msra.mxu0 %v1172
    %1632 = vmatprep.subr.mxu0 0.0
    %1633 = vmatpush2.msra.mxu0 0.0
    %1634 = vmatprep.subr.mxu0 0.0
    %1635 = vmatpush2.msra.mxu0 0.0
    %1636 = vmatprep.subr.mxu0 0.0
    %1637 = vmatpush2.msra.mxu0 0.0
    %1638 = vmatprep.subr.mxu0 0.0
    %1639 = vmatpush2.msra.mxu0 0.0
    %1640 = vmatprep.subr.mxu0 0.0
    %1641 = vmatpush2.msra.mxu0 0.0
    %1642 = vmatprep.subr.mxu0 0.0
    %1643 = vmatpush2.msra.mxu0 0.0
    %1644 = vmatprep.subr.mxu0 0.0
    %1645 = vmatpush2.msra.mxu0 0.0
    %1646 = vmatprep.subr.mxu0 0.0
    %1647 = vmatpush2.msra.mxu0 0.0
    %1648 = vmatprep.subr.mxu0 0.0
    %1649 = vmatpush2.msra.mxu0 0.0
    %1650 = vmatprep.subr.mxu0 0.0
    %1651 = vmatpush2.msra.mxu0 0.0
    %1652 = vmatprep.subr.mxu0 0.0
    %1653 = vmatpush2.msra.mxu0 0.0
    %1654 = vmatprep.subr.mxu0 0.0
    %1655 = vmatpush2.msra.mxu0 0.0
    %1656 = vmatprep.subr.mxu0 0.0
    %1657 = vmatpush2.msra.mxu0 0.0
    %1658 = vmatprep.subr.mxu0 0.0
    %1659 = vmatpush2.msra.mxu0 0.0
    %1660 = vmatprep.subr.mxu0 0.0
    %1661 = vmatpush2.msra.mxu0 0.0
    %1662 = vmatprep.subr.mxu0 0.0
    %1663 = vmatpush2.msra.mxu0 0.0
    %1664 = vmatprep.mubr.f32.mxu0 0.0
    %1665 = vmatmul.mubr.f32.gmra.mxu0 %v1598
    %v1666 = vpop.f32.mrf.mxu0
    %v1667 = vadd.f32 0.0, %v1666
    %v1668 = vpop.f32.mrf.mxu0
    %1669 = vdwg.mxu0
    %v1671 = vrot.slane %v1667, 4
    %v1673 = vadd.f32 %v1169, %v1671
    %v1674 = vxor.u32 %v1673, 2147483648
    %v1675 = vmul.f32 %v1674, 1.442695
    %v1676 = vpow.pop %v1675
    %v1677 = vadd.f32 %v1676, 1.0
    %v1678 = vrcp.pop %v1677
    %v1679 = vmul.f32 1.0, %v1678
    %v1680 = vtanh.pop %v1673
    %v1682 = vrot.slane %v1587, 7
    %v1684 = vmul.f32 %v1679, %v1682
    %1686 = vrot.lane.b32.xlu0 %v1680, 64
    %v1687 = vpop.permute.xlu0 %1686
    %v1689 = vmul.f32 %v1679, %v1687
    %1691 = vrot.lane.b32.xlu0 %v1689, 32
    %v1692 = vpop.permute.xlu0 %1691
    %v1694 = vadd.f32 %v1684, %v1692
    %v1695 = vtanh.pop %v1694
    %1697 = vrot.lane.b32.xlu0 %v1695, 64
    %v1698 = vpop.permute.xlu0 %1697
    %v1700 = vmul.f32 %v1679, %v1698
    %v1702 = vrot.slane %v1700, 4
    %1703 = vrot.lane.b32.xlu0 %v1702, 32
    %v1704 = vpop.permute.xlu0 %1703
    %v1705 = vsel %vm1176, %v1704, 0
    %1707 = vmatprep.subr.mxu0 0.0
    %1708 = vmatpush1.msra.mxu0 0.0
    %1709 = vmatprep.subr.mxu0 0.0
    %1710 = vmatpush1.msra.mxu0 0.0
    %1711 = vmatprep.subr.mxu0 0.0
    %1712 = vmatpush1.msra.mxu0 0.0
    %1713 = vmatprep.subr.mxu0 0.0
    %1714 = vmatpush1.msra.mxu0 0.0
    %1715 = vmatprep.subr.mxu0 0.0
    %1716 = vmatpush1.msra.mxu0 0.0
    %1717 = vmatprep.subr.mxu0 0.0
    %1718 = vmatpush1.msra.mxu0 0.0
    %1719 = vmatprep.subr.mxu0 0.0
    %1720 = vmatpush1.msra.mxu0 0.0
    %1721 = vmatprep.subr.mxu0 0.0
    %1722 = vmatpush1.msra.mxu0 0.0
    %1723 = vmatprep.subr.mxu0 0.0
    %1724 = vmatpush1.msra.mxu0 0.0
    %1725 = vmatprep.subr.mxu0 0.0
    %1726 = vmatpush1.msra.mxu0 0.0
    %1727 = vmatprep.subr.mxu0 0.0
    %1728 = vmatpush1.msra.mxu0 0.0
    %1729 = vmatprep.subr.mxu0 0.0
    %1730 = vmatpush1.msra.mxu0 0.0
    %1731 = vmatprep.subr.mxu0 0.0
    %1732 = vmatpush1.msra.mxu0 %v1175
    %1733 = vmatprep.subr.mxu0 0.0
    %1734 = vmatpush1.msra.mxu0 %v1174
    %1735 = vmatprep.subr.mxu0 0.0
    %1736 = vmatpush1.msra.mxu0 %v1173
    %1737 = vmatprep.subr.mxu0 0.0
    %1738 = vmatpush1.msra.mxu0 %v1172
    %1739 = vmatprep.subr.mxu0 0.0
    %1740 = vmatpush2.msra.mxu0 0.0
    %1741 = vmatprep.subr.mxu0 0.0
    %1742 = vmatpush2.msra.mxu0 0.0
    %1743 = vmatprep.subr.mxu0 0.0
    %1744 = vmatpush2.msra.mxu0 0.0
    %1745 = vmatprep.subr.mxu0 0.0
    %1746 = vmatpush2.msra.mxu0 0.0
    %1747 = vmatprep.subr.mxu0 0.0
    %1748 = vmatpush2.msra.mxu0 0.0
    %1749 = vmatprep.subr.mxu0 0.0
    %1750 = vmatpush2.msra.mxu0 0.0
    %1751 = vmatprep.subr.mxu0 0.0
    %1752 = vmatpush2.msra.mxu0 0.0
    %1753 = vmatprep.subr.mxu0 0.0
    %1754 = vmatpush2.msra.mxu0 0.0
    %1755 = vmatprep.subr.mxu0 0.0
    %1756 = vmatpush2.msra.mxu0 0.0
    %1757 = vmatprep.subr.mxu0 0.0
    %1758 = vmatpush2.msra.mxu0 0.0
    %1759 = vmatprep.subr.mxu0 0.0
    %1760 = vmatpush2.msra.mxu0 0.0
    %1761 = vmatprep.subr.mxu0 0.0
    %1762 = vmatpush2.msra.mxu0 0.0
    %1763 = vmatprep.subr.mxu0 0.0
    %1764 = vmatpush2.msra.mxu0 0.0
    %1765 = vmatprep.subr.mxu0 0.0
    %1766 = vmatpush2.msra.mxu0 0.0
    %1767 = vmatprep.subr.mxu0 0.0
    %1768 = vmatpush2.msra.mxu0 0.0
    %1769 = vmatprep.subr.mxu0 0.0
    %1770 = vmatpush2.msra.mxu0 0.0
    %1771 = vmatprep.mubr.f32.mxu0 0.0
    %1772 = vmatmul.mubr.f32.gmra.mxu0 %v1705
    %v1773 = vpop.f32.mrf.mxu0
    %v1774 = vadd.f32 0.0, %v1773
    %v1775 = vpop.f32.mrf.mxu0
    %1776 = vdwg.mxu0
    %v1778 = vrot.slane %v1774, 3
    %v1780 = vadd.f32 %v1169, %v1778
    %v1781 = vxor.u32 %v1780, 2147483648
    %v1782 = vmul.f32 %v1781, 1.442695
    %v1783 = vpow.pop %v1782
    %v1784 = vadd.f32 %v1783, 1.0
    %v1785 = vrcp.pop %v1784
    %v1786 = vmul.f32 1.0, %v1785
    %v1787 = vtanh.pop %v1780
    %v1789 = vrot.slane %v1694, 7
    %v1791 = vmul.f32 %v1786, %v1789
    %1793 = vrot.lane.b32.xlu0 %v1787, 64
    %v1794 = vpop.permute.xlu0 %1793
    %v1796 = vmul.f32 %v1786, %v1794
    %1798 = vrot.lane.b32.xlu0 %v1796, 32
    %v1799 = vpop.permute.xlu0 %1798
    %v1801 = vadd.f32 %v1791, %v1799
    %v1802 = vtanh.pop %v1801
    %1804 = vrot.lane.b32.xlu0 %v1802, 64
    %v1805 = vpop.permute.xlu0 %1804
    %v1807 = vmul.f32 %v1786, %v1805
    %v1809 = vrot.slane %v1807, 5
    %1810 = vrot.lane.b32.xlu0 %v1809, 32
    %v1811 = vpop.permute.xlu0 %1810
    %v1812 = vsel %vm1176, %v1811, 0
    %1814 = vmatprep.subr.mxu0 0.0
    %1815 = vmatpush1.msra.mxu0 0.0
    %1816 = vmatprep.subr.mxu0 0.0
    %1817 = vmatpush1.msra.mxu0 0.0
    %1818 = vmatprep.subr.mxu0 0.0
    %1819 = vmatpush1.msra.mxu0 0.0
    %1820 = vmatprep.subr.mxu0 0.0
    %1821 = vmatpush1.msra.mxu0 0.0
    %1822 = vmatprep.subr.mxu0 0.0
    %1823 = vmatpush1.msra.mxu0 0.0
    %1824 = vmatprep.subr.mxu0 0.0
    %1825 = vmatpush1.msra.mxu0 0.0
    %1826 = vmatprep.subr.mxu0 0.0
    %1827 = vmatpush1.msra.mxu0 0.0
    %1828 = vmatprep.subr.mxu0 0.0
    %1829 = vmatpush1.msra.mxu0 0.0
    %1830 = vmatprep.subr.mxu0 0.0
    %1831 = vmatpush1.msra.mxu0 0.0
    %1832 = vmatprep.subr.mxu0 0.0
    %1833 = vmatpush1.msra.mxu0 0.0
    %1834 = vmatprep.subr.mxu0 0.0
    %1835 = vmatpush1.msra.mxu0 0.0
    %1836 = vmatprep.subr.mxu0 0.0
    %1837 = vmatpush1.msra.mxu0 0.0
    %1838 = vmatprep.subr.mxu0 0.0
    %1839 = vmatpush1.msra.mxu0 %v1175
    %1840 = vmatprep.subr.mxu0 0.0
    %1841 = vmatpush1.msra.mxu0 %v1174
    %1842 = vmatprep.subr.mxu0 0.0
    %1843 = vmatpush1.msra.mxu0 %v1173
    %1844 = vmatprep.subr.mxu0 0.0
    %1845 = vmatpush1.msra.mxu0 %v1172
    %1846 = vmatprep.subr.mxu0 0.0
    %1847 = vmatpush2.msra.mxu0 0.0
    %1848 = vmatprep.subr.mxu0 0.0
    %1849 = vmatpush2.msra.mxu0 0.0
    %1850 = vmatprep.subr.mxu0 0.0
    %1851 = vmatpush2.msra.mxu0 0.0
    %1852 = vmatprep.subr.mxu0 0.0
    %1853 = vmatpush2.msra.mxu0 0.0
    %1854 = vmatprep.subr.mxu0 0.0
    %1855 = vmatpush2.msra.mxu0 0.0
    %1856 = vmatprep.subr.mxu0 0.0
    %1857 = vmatpush2.msra.mxu0 0.0
    %1858 = vmatprep.subr.mxu0 0.0
    %1859 = vmatpush2.msra.mxu0 0.0
    %1860 = vmatprep.subr.mxu0 0.0
    %1861 = vmatpush2.msra.mxu0 0.0
    %1862 = vmatprep.subr.mxu0 0.0
    %1863 = vmatpush2.msra.mxu0 0.0
    %1864 = vmatprep.subr.mxu0 0.0
    %1865 = vmatpush2.msra.mxu0 0.0
    %1866 = vmatprep.subr.mxu0 0.0
    %1867 = vmatpush2.msra.mxu0 0.0
    %1868 = vmatprep.subr.mxu0 0.0
    %1869 = vmatpush2.msra.mxu0 0.0
    %1870 = vmatprep.subr.mxu0 0.0
    %1871 = vmatpush2.msra.mxu0 0.0
    %1872 = vmatprep.subr.mxu0 0.0
    %1873 = vmatpush2.msra.mxu0 0.0
    %1874 = vmatprep.subr.mxu0 0.0
    %1875 = vmatpush2.msra.mxu0 0.0
    %1876 = vmatprep.subr.mxu0 0.0
    %1877 = vmatpush2.msra.mxu0 0.0
    %1878 = vmatprep.mubr.f32.mxu0 0.0
    %1879 = vmatmul.mubr.f32.gmra.mxu0 %v1812
    %v1880 = vpop.f32.mrf.mxu0
    %v1881 = vadd.f32 0.0, %v1880
    %v1882 = vpop.f32.mrf.mxu0
    %1883 = vdwg.mxu0
    %v1885 = vrot.slane %v1881, 2
    %v1887 = vadd.f32 %v1169, %v1885
    %v1888 = vxor.u32 %v1887, 2147483648
    %v1889 = vmul.f32 %v1888, 1.442695
    %v1890 = vpow.pop %v1889
    %v1891 = vadd.f32 %v1890, 1.0
    %v1892 = vrcp.pop %v1891
    %v1893 = vmul.f32 1.0, %v1892
    %v1894 = vtanh.pop %v1887
    %v1896 = vrot.slane %v1801, 7
    %v1898 = vmul.f32 %v1893, %v1896
    %1900 = vrot.lane.b32.xlu0 %v1894, 64
    %v1901 = vpop.permute.xlu0 %1900
    %v1903 = vmul.f32 %v1893, %v1901
    %1905 = vrot.lane.b32.xlu0 %v1903, 32
    %v1906 = vpop.permute.xlu0 %1905
    %v1908 = vadd.f32 %v1898, %v1906
    %v1909 = vtanh.pop %v1908
    %1911 = vrot.lane.b32.xlu0 %v1909, 64
    %v1912 = vpop.permute.xlu0 %1911
    %v1914 = vmul.f32 %v1893, %v1912
    %v1916 = vrot.slane %v1914, 6
    %1917 = vrot.lane.b32.xlu0 %v1916, 32
    %v1918 = vpop.permute.xlu0 %1917
    %v1919 = vsel %vm1176, %v1918, 0
    %1921 = vmatprep.subr.mxu0 0.0
    %1922 = vmatpush1.msra.mxu0 0.0
    %1923 = vmatprep.subr.mxu0 0.0
    %1924 = vmatpush1.msra.mxu0 0.0
    %1925 = vmatprep.subr.mxu0 0.0
    %1926 = vmatpush1.msra.mxu0 0.0
    %1927 = vmatprep.subr.mxu0 0.0
    %1928 = vmatpush1.msra.mxu0 0.0
    %1929 = vmatprep.subr.mxu0 0.0
    %1930 = vmatpush1.msra.mxu0 0.0
    %1931 = vmatprep.subr.mxu0 0.0
    %1932 = vmatpush1.msra.mxu0 0.0
    %1933 = vmatprep.subr.mxu0 0.0
    %1934 = vmatpush1.msra.mxu0 0.0
    %1935 = vmatprep.subr.mxu0 0.0
    %1936 = vmatpush1.msra.mxu0 0.0
    %1937 = vmatprep.subr.mxu0 0.0
    %1938 = vmatpush1.msra.mxu0 0.0
    %1939 = vmatprep.subr.mxu0 0.0
    %1940 = vmatpush1.msra.mxu0 0.0
    %1941 = vmatprep.subr.mxu0 0.0
    %1942 = vmatpush1.msra.mxu0 0.0
    %1943 = vmatprep.subr.mxu0 0.0
    %1944 = vmatpush1.msra.mxu0 0.0
    %1945 = vmatprep.subr.mxu0 0.0
    %1946 = vmatpush1.msra.mxu0 %v1175
    %1947 = vmatprep.subr.mxu0 0.0
    %1948 = vmatpush1.msra.mxu0 %v1174
    %1949 = vmatprep.subr.mxu0 0.0
    %1950 = vmatpush1.msra.mxu0 %v1173
    %1951 = vmatprep.subr.mxu0 0.0
    %1952 = vmatpush1.msra.mxu0 %v1172
    %1953 = vmatprep.subr.mxu0 0.0
    %1954 = vmatpush2.msra.mxu0 0.0
    %1955 = vmatprep.subr.mxu0 0.0
    %1956 = vmatpush2.msra.mxu0 0.0
    %1957 = vmatprep.subr.mxu0 0.0
    %1958 = vmatpush2.msra.mxu0 0.0
    %1959 = vmatprep.subr.mxu0 0.0
    %1960 = vmatpush2.msra.mxu0 0.0
    %1961 = vmatprep.subr.mxu0 0.0
    %1962 = vmatpush2.msra.mxu0 0.0
    %1963 = vmatprep.subr.mxu0 0.0
    %1964 = vmatpush2.msra.mxu0 0.0
    %1965 = vmatprep.subr.mxu0 0.0
    %1966 = vmatpush2.msra.mxu0 0.0
    %1967 = vmatprep.subr.mxu0 0.0
    %1968 = vmatpush2.msra.mxu0 0.0
    %1969 = vmatprep.subr.mxu0 0.0
    %1970 = vmatpush2.msra.mxu0 0.0
    %1971 = vmatprep.subr.mxu0 0.0
    %1972 = vmatpush2.msra.mxu0 0.0
    %1973 = vmatprep.subr.mxu0 0.0
    %1974 = vmatpush2.msra.mxu0 0.0
    %1975 = vmatprep.subr.mxu0 0.0
    %1976 = vmatpush2.msra.mxu0 0.0
    %1977 = vmatprep.subr.mxu0 0.0
    %1978 = vmatpush2.msra.mxu0 0.0
    %1979 = vmatprep.subr.mxu0 0.0
    %1980 = vmatpush2.msra.mxu0 0.0
    %1981 = vmatprep.subr.mxu0 0.0
    %1982 = vmatpush2.msra.mxu0 0.0
    %1983 = vmatprep.subr.mxu0 0.0
    %1984 = vmatpush2.msra.mxu0 0.0
    %1985 = vmatprep.mubr.f32.mxu0 0.0
    %1986 = vmatmul.mubr.f32.gmra.mxu0 %v1919
    %v1987 = vpop.f32.mrf.mxu0
    %v1988 = vadd.f32 0.0, %v1987
    %v1989 = vpop.f32.mrf.mxu0
    %1990 = vdwg.mxu0
    %v1992 = vrot.slane %v1988, 1
    %v1994 = vadd.f32 %v1169, %v1992
    %v1995 = vxor.u32 %v1994, 2147483648
    %v1996 = vmul.f32 %v1995, 1.442695
    %v1997 = vpow.pop %v1996
    %v1998 = vadd.f32 %v1997, 1.0
    %v1999 = vrcp.pop %v1998
    %v2000 = vmul.f32 1.0, %v1999
    %v2001 = vtanh.pop %v1994
    %v2003 = vrot.slane %v1908, 7
    %v2005 = vmul.f32 %v2000, %v2003
    %2007 = vrot.lane.b32.xlu0 %v2001, 64
    %v2008 = vpop.permute.xlu0 %2007
    %v2010 = vmul.f32 %v2000, %v2008
    %2012 = vrot.lane.b32.xlu0 %v2010, 32
    %v2013 = vpop.permute.xlu0 %2012
    %v2015 = vadd.f32 %v2005, %v2013
    %v2016 = vtanh.pop %v2015
    %2018 = vrot.lane.b32.xlu0 %v2016, 64
    %v2019 = vpop.permute.xlu0 %2018
    %v2021 = vmul.f32 %v2000, %v2019
    %2023 = vrot.lane.b32.xlu0 %v2021, 32
    %v2024 = vpop.permute.xlu0 %2023
    %vm2026 = vcmask 261127
    %2027 = vst.msk [vmem:[#allocation15 - $0x7] sm:$0x80] %vm2026, %v2024
    %v2028 = vld [vmem:[#allocation9] sm:$0xff]
    %v2029 = vld [vmem:[#allocation9 + $0x8] sm:$0xff]
    %v2030 = vld [vmem:[#allocation9 + $0x10] sm:$0xff]
    %v2031 = vld [vmem:[#allocation9 + $0x18] sm:$0xff]
    %v2032 = vld [vmem:[%s9] sm:$0x1]
    %v2033 = vrot.slane %v2021, 7
    %2034 = vrot.lane.b32.xlu0 %v2033, 32
    %v2035 = vpop.permute.xlu0 %2034
    %v2036 = vsel %vm1176, %v2035, 0
    %2038 = vmatprep.subr.mxu0 0.0
    %2039 = vmatpush1.msra.mxu0 0.0
    %2040 = vmatprep.subr.mxu0 0.0
    %2041 = vmatpush1.msra.mxu0 0.0
    %2042 = vmatprep.subr.mxu0 0.0
    %2043 = vmatpush1.msra.mxu0 0.0
    %2044 = vmatprep.subr.mxu0 0.0
    %2045 = vmatpush1.msra.mxu0 0.0
    %2046 = vmatprep.subr.mxu0 0.0
    %2047 = vmatpush1.msra.mxu0 0.0
    %2048 = vmatprep.subr.mxu0 0.0
    %2049 = vmatpush1.msra.mxu0 0.0
    %2050 = vmatprep.subr.mxu0 0.0
    %2051 = vmatpush1.msra.mxu0 0.0
    %2052 = vmatprep.subr.mxu0 0.0
    %2053 = vmatpush1.msra.mxu0 0.0
    %2054 = vmatprep.subr.mxu0 0.0
    %2055 = vmatpush1.msra.mxu0 0.0
    %2056 = vmatprep.subr.mxu0 0.0
    %2057 = vmatpush1.msra.mxu0 0.0
    %2058 = vmatprep.subr.mxu0 0.0
    %2059 = vmatpush1.msra.mxu0 0.0
    %2060 = vmatprep.subr.mxu0 0.0
    %2061 = vmatpush1.msra.mxu0 0.0
    %2062 = vmatprep.subr.mxu0 0.0
    %2063 = vmatpush1.msra.mxu0 %v2031
    %2064 = vmatprep.subr.mxu0 0.0
    %2065 = vmatpush1.msra.mxu0 %v2030
    %2066 = vmatprep.subr.mxu0 0.0
    %2067 = vmatpush1.msra.mxu0 %v2029
    %2068 = vmatprep.subr.mxu0 0.0
    %2069 = vmatpush1.msra.mxu0 %v2028
    %2070 = vmatprep.subr.mxu0 0.0
    %2071 = vmatpush2.msra.mxu0 0.0
    %2072 = vmatprep.subr.mxu0 0.0
    %2073 = vmatpush2.msra.mxu0 0.0
    %2074 = vmatprep.subr.mxu0 0.0
    %2075 = vmatpush2.msra.mxu0 0.0
    %2076 = vmatprep.subr.mxu0 0.0
    %2077 = vmatpush2.msra.mxu0 0.0
    %2078 = vmatprep.subr.mxu0 0.0
    %2079 = vmatpush2.msra.mxu0 0.0
    %2080 = vmatprep.subr.mxu0 0.0
    %2081 = vmatpush2.msra.mxu0 0.0
    %2082 = vmatprep.subr.mxu0 0.0
    %2083 = vmatpush2.msra.mxu0 0.0
    %2084 = vmatprep.subr.mxu0 0.0
    %2085 = vmatpush2.msra.mxu0 0.0
    %2086 = vmatprep.subr.mxu0 0.0
    %2087 = vmatpush2.msra.mxu0 0.0
    %2088 = vmatprep.subr.mxu0 0.0
    %2089 = vmatpush2.msra.mxu0 0.0
    %2090 = vmatprep.subr.mxu0 0.0
    %2091 = vmatpush2.msra.mxu0 0.0
    %2092 = vmatprep.subr.mxu0 0.0
    %2093 = vmatpush2.msra.mxu0 0.0
    %2094 = vmatprep.subr.mxu0 0.0
    %2095 = vmatpush2.msra.mxu0 0.0
    %2096 = vmatprep.subr.mxu0 0.0
    %2097 = vmatpush2.msra.mxu0 0.0
    %2098 = vmatprep.subr.mxu0 0.0
    %2099 = vmatpush2.msra.mxu0 0.0
    %2100 = vmatprep.subr.mxu0 0.0
    %2101 = vmatpush2.msra.mxu0 0.0
    %2102 = vmatprep.mubr.f32.mxu0 0.0
    %2103 = vmatmul.mubr.f32.gmra.mxu0 %v2036
    %v2104 = vpop.f32.mrf.mxu0
    %v2105 = vadd.f32 %v2032, %v2104
    %v2106 = vpop.f32.mrf.mxu0
    %2107 = vdwg.mxu0
    %v2108 = vld [vmem:[#allocation11] sm:$0xff]
    %v2109 = vld [vmem:[#allocation11 + $0x8] sm:$0xff]
    %v2110 = vld [vmem:[#allocation11 + $0x10] sm:$0xff]
    %v2111 = vld [vmem:[#allocation11 + $0x18] sm:$0xff]
    %2112 = vmatprep.subr.mxu0 0.0
    %2113 = vmatpush1.msra.mxu0 0.0
    %2114 = vmatprep.subr.mxu0 0.0
    %2115 = vmatpush1.msra.mxu0 0.0
    %2116 = vmatprep.subr.mxu0 0.0
    %2117 = vmatpush1.msra.mxu0 0.0
    %2118 = vmatprep.subr.mxu0 0.0
    %2119 = vmatpush1.msra.mxu0 0.0
    %2120 = vmatprep.subr.mxu0 0.0
    %2121 = vmatpush1.msra.mxu0 0.0
    %2122 = vmatprep.subr.mxu0 0.0
    %2123 = vmatpush1.msra.mxu0 0.0
    %2124 = vmatprep.subr.mxu0 0.0
    %2125 = vmatpush1.msra.mxu0 0.0
    %2126 = vmatprep.subr.mxu0 0.0
    %2127 = vmatpush1.msra.mxu0 0.0
    %2128 = vmatprep.subr.mxu0 0.0
    %2129 = vmatpush1.msra.mxu0 0.0
    %2130 = vmatprep.subr.mxu0 0.0
    %2131 = vmatpush1.msra.mxu0 0.0
    %2132 = vmatprep.subr.mxu0 0.0
    %2133 = vmatpush1.msra.mxu0 0.0
    %2134 = vmatprep.subr.mxu0 0.0
    %2135 = vmatpush1.msra.mxu0 0.0
    %2136 = vmatprep.subr.mxu0 0.0
    %2137 = vmatpush1.msra.mxu0 %v2111
    %2138 = vmatprep.subr.mxu0 0.0
    %2139 = vmatpush1.msra.mxu0 %v2110
    %2140 = vmatprep.subr.mxu0 0.0
    %2141 = vmatpush1.msra.mxu0 %v2109
    %2142 = vmatprep.subr.mxu0 0.0
    %2143 = vmatpush1.msra.mxu0 %v2108
    %2144 = vmatprep.subr.mxu0 0.0
    %2145 = vmatpush2.msra.mxu0 0.0
    %2146 = vmatprep.subr.mxu0 0.0
    %2147 = vmatpush2.msra.mxu0 0.0
    %2148 = vmatprep.subr.mxu0 0.0
    %2149 = vmatpush2.msra.mxu0 0.0
    %2150 = vmatprep.subr.mxu0 0.0
    %2151 = vmatpush2.msra.mxu0 0.0
    %2152 = vmatprep.subr.mxu0 0.0
    %2153 = vmatpush2.msra.mxu0 0.0
    %2154 = vmatprep.subr.mxu0 0.0
    %2155 = vmatpush2.msra.mxu0 0.0
    %2156 = vmatprep.subr.mxu0 0.0
    %2157 = vmatpush2.msra.mxu0 0.0
    %2158 = vmatprep.subr.mxu0 0.0
    %2159 = vmatpush2.msra.mxu0 0.0
    %2160 = vmatprep.subr.mxu0 0.0
    %2161 = vmatpush2.msra.mxu0 0.0
    %2162 = vmatprep.subr.mxu0 0.0
    %2163 = vmatpush2.msra.mxu0 0.0
    %2164 = vmatprep.subr.mxu0 0.0
    %2165 = vmatpush2.msra.mxu0 0.0
    %2166 = vmatprep.subr.mxu0 0.0
    %2167 = vmatpush2.msra.mxu0 0.0
    %2168 = vmatprep.subr.mxu0 0.0
    %2169 = vmatpush2.msra.mxu0 0.0
    %2170 = vmatprep.subr.mxu0 0.0
    %2171 = vmatpush2.msra.mxu0 0.0
    %2172 = vmatprep.subr.mxu0 0.0
    %2173 = vmatpush2.msra.mxu0 0.0
    %2174 = vmatprep.subr.mxu0 0.0
    %2175 = vmatpush2.msra.mxu0 0.0
    %2176 = vmatprep.mubr.f32.mxu0 0.0
    %2177 = vmatmul.mubr.f32.gmra.mxu0 %v1177
    %v2178 = vpop.f32.mrf.mxu0
    %v2179 = vadd.f32 0.0, %v2178
    %v2180 = vpop.f32.mrf.mxu0
    %2181 = vdwg.mxu0
    %v2182 = vadd.f32 %v2105, %v2179
    %v2183 = vxor.u32 %v2182, 2147483648
    %v2184 = vmul.f32 %v2183, 1.442695
    %v2185 = vpow.pop %v2184
    %v2186 = vadd.f32 %v2185, 1.0
    %v2187 = vrcp.pop %v2186
    %v2188 = vmul.f32 1.0, %v2187
    %v2189 = vtanh.pop %v2182
    %v2190 = vmul.f32 %v2188, 0.0
    %2192 = vrot.lane.b32.xlu0 %v2189, 64
    %v2193 = vpop.permute.xlu0 %2192
    %v2195 = vmul.f32 %v2188, %v2193
    %2197 = vrot.lane.b32.xlu0 %v2195, 32
    %v2198 = vpop.permute.xlu0 %2197
    %v2200 = vadd.f32 %v2190, %v2198
    %v2201 = vtanh.pop %v2200
    %2203 = vrot.lane.b32.xlu0 %v2201, 64
    %v2204 = vpop.permute.xlu0 %2203
    %v2206 = vmul.f32 %v2188, %v2204
    %2208 = vrot.lane.b32.xlu0 %v2206, 32
    %v2209 = vpop.permute.xlu0 %2208
    %v2210 = vsel %vm1176, %v2209, 0
    %2212 = vmatprep.subr.mxu0 0.0
    %2213 = vmatpush1.msra.mxu0 0.0
    %2214 = vmatprep.subr.mxu0 0.0
    %2215 = vmatpush1.msra.mxu0 0.0
    %2216 = vmatprep.subr.mxu0 0.0
    %2217 = vmatpush1.msra.mxu0 0.0
    %2218 = vmatprep.subr.mxu0 0.0
    %2219 = vmatpush1.msra.mxu0 0.0
    %2220 = vmatprep.subr.mxu0 0.0
    %2221 = vmatpush1.msra.mxu0 0.0
    %2222 = vmatprep.subr.mxu0 0.0
    %2223 = vmatpush1.msra.mxu0 0.0
    %2224 = vmatprep.subr.mxu0 0.0
    %2225 = vmatpush1.msra.mxu0 0.0
    %2226 = vmatprep.subr.mxu0 0.0
    %2227 = vmatpush1.msra.mxu0 0.0
    %2228 = vmatprep.subr.mxu0 0.0
    %2229 = vmatpush1.msra.mxu0 0.0
    %2230 = vmatprep.subr.mxu0 0.0
    %2231 = vmatpush1.msra.mxu0 0.0
    %2232 = vmatprep.subr.mxu0 0.0
    %2233 = vmatpush1.msra.mxu0 0.0
    %2234 = vmatprep.subr.mxu0 0.0
    %2235 = vmatpush1.msra.mxu0 0.0
    %2236 = vmatprep.subr.mxu0 0.0
    %2237 = vmatpush1.msra.mxu0 %v2111
    %2238 = vmatprep.subr.mxu0 0.0
    %2239 = vmatpush1.msra.mxu0 %v2110
    %2240 = vmatprep.subr.mxu0 0.0
    %2241 = vmatpush1.msra.mxu0 %v2109
    %2242 = vmatprep.subr.mxu0 0.0
    %2243 = vmatpush1.msra.mxu0 %v2108
    %2244 = vmatprep.subr.mxu0 0.0
    %2245 = vmatpush2.msra.mxu0 0.0
    %2246 = vmatprep.subr.mxu0 0.0
    %2247 = vmatpush2.msra.mxu0 0.0
    %2248 = vmatprep.subr.mxu0 0.0
    %2249 = vmatpush2.msra.mxu0 0.0
    %2250 = vmatprep.subr.mxu0 0.0
    %2251 = vmatpush2.msra.mxu0 0.0
    %2252 = vmatprep.subr.mxu0 0.0
    %2253 = vmatpush2.msra.mxu0 0.0
    %2254 = vmatprep.subr.mxu0 0.0
    %2255 = vmatpush2.msra.mxu0 0.0
    %2256 = vmatprep.subr.mxu0 0.0
    %2257 = vmatpush2.msra.mxu0 0.0
    %2258 = vmatprep.subr.mxu0 0.0
    %2259 = vmatpush2.msra.mxu0 0.0
    %2260 = vmatprep.subr.mxu0 0.0
    %2261 = vmatpush2.msra.mxu0 0.0
    %2262 = vmatprep.subr.mxu0 0.0
    %2263 = vmatpush2.msra.mxu0 0.0
    %2264 = vmatprep.subr.mxu0 0.0
    %2265 = vmatpush2.msra.mxu0 0.0
    %2266 = vmatprep.subr.mxu0 0.0
    %2267 = vmatpush2.msra.mxu0 0.0
    %2268 = vmatprep.subr.mxu0 0.0
    %2269 = vmatpush2.msra.mxu0 0.0
    %2270 = vmatprep.subr.mxu0 0.0
    %2271 = vmatpush2.msra.mxu0 0.0
    %2272 = vmatprep.subr.mxu0 0.0
    %2273 = vmatpush2.msra.mxu0 0.0
    %2274 = vmatprep.subr.mxu0 0.0
    %2275 = vmatpush2.msra.mxu0 0.0
    %2276 = vmatprep.mubr.f32.mxu0 0.0
    %2277 = vmatmul.mubr.f32.gmra.mxu0 %v2210
    %v2278 = vpop.f32.mrf.mxu0
    %v2279 = vadd.f32 0.0, %v2278
    %v2280 = vpop.f32.mrf.mxu0
    %2281 = vdwg.mxu0
    %v2282 = vadd.f32 %v2105, %v2279
    %v2283 = vxor.u32 %v2282, 2147483648
    %v2284 = vmul.f32 %v2283, 1.442695
    %v2285 = vpow.pop %v2284
    %v2286 = vadd.f32 %v2285, 1.0
    %v2287 = vrcp.pop %v2286
    %v2288 = vmul.f32 1.0, %v2287
    %v2289 = vtanh.pop %v2282
    %v2290 = vmul.f32 %v2288, %v2200
    %2292 = vrot.lane.b32.xlu0 %v2289, 64
    %v2293 = vpop.permute.xlu0 %2292
    %v2295 = vmul.f32 %v2288, %v2293
    %2297 = vrot.lane.b32.xlu0 %v2295, 32
    %v2298 = vpop.permute.xlu0 %2297
    %v2300 = vadd.f32 %v2290, %v2298
    %v2301 = vtanh.pop %v2300
    %2303 = vrot.lane.b32.xlu0 %v2301, 64
    %v2304 = vpop.permute.xlu0 %2303
    %v2306 = vmul.f32 %v2288, %v2304
    %2308 = vrot.lane.b32.xlu0 %v2306, 32
    %v2309 = vpop.permute.xlu0 %2308
    %v2310 = vsel %vm1176, %v2309, 0
    %2312 = vmatprep.subr.mxu0 0.0
    %2313 = vmatpush1.msra.mxu0 0.0
    %2314 = vmatprep.subr.mxu0 0.0
    %2315 = vmatpush1.msra.mxu0 0.0
    %2316 = vmatprep.subr.mxu0 0.0
    %2317 = vmatpush1.msra.mxu0 0.0
    %2318 = vmatprep.subr.mxu0 0.0
    %2319 = vmatpush1.msra.mxu0 0.0
    %2320 = vmatprep.subr.mxu0 0.0
    %2321 = vmatpush1.msra.mxu0 0.0
    %2322 = vmatprep.subr.mxu0 0.0
    %2323 = vmatpush1.msra.mxu0 0.0
    %2324 = vmatprep.subr.mxu0 0.0
    %2325 = vmatpush1.msra.mxu0 0.0
    %2326 = vmatprep.subr.mxu0 0.0
    %2327 = vmatpush1.msra.mxu0 0.0
    %2328 = vmatprep.subr.mxu0 0.0
    %2329 = vmatpush1.msra.mxu0 0.0
    %2330 = vmatprep.subr.mxu0 0.0
    %2331 = vmatpush1.msra.mxu0 0.0
    %2332 = vmatprep.subr.mxu0 0.0
    %2333 = vmatpush1.msra.mxu0 0.0
    %2334 = vmatprep.subr.mxu0 0.0
    %2335 = vmatpush1.msra.mxu0 0.0
    %2336 = vmatprep.subr.mxu0 0.0
    %2337 = vmatpush1.msra.mxu0 %v2111
    %2338 = vmatprep.subr.mxu0 0.0
    %2339 = vmatpush1.msra.mxu0 %v2110
    %2340 = vmatprep.subr.mxu0 0.0
    %2341 = vmatpush1.msra.mxu0 %v2109
    %2342 = vmatprep.subr.mxu0 0.0
    %2343 = vmatpush1.msra.mxu0 %v2108
    %2344 = vmatprep.subr.mxu0 0.0
    %2345 = vmatpush2.msra.mxu0 0.0
    %2346 = vmatprep.subr.mxu0 0.0
    %2347 = vmatpush2.msra.mxu0 0.0
    %2348 = vmatprep.subr.mxu0 0.0
    %2349 = vmatpush2.msra.mxu0 0.0
    %2350 = vmatprep.subr.mxu0 0.0
    %2351 = vmatpush2.msra.mxu0 0.0
    %2352 = vmatprep.subr.mxu0 0.0
    %2353 = vmatpush2.msra.mxu0 0.0
    %2354 = vmatprep.subr.mxu0 0.0
    %2355 = vmatpush2.msra.mxu0 0.0
    %2356 = vmatprep.subr.mxu0 0.0
    %2357 = vmatpush2.msra.mxu0 0.0
    %2358 = vmatprep.subr.mxu0 0.0
    %2359 = vmatpush2.msra.mxu0 0.0
    %2360 = vmatprep.subr.mxu0 0.0
    %2361 = vmatpush2.msra.mxu0 0.0
    %2362 = vmatprep.subr.mxu0 0.0
    %2363 = vmatpush2.msra.mxu0 0.0
    %2364 = vmatprep.subr.mxu0 0.0
    %2365 = vmatpush2.msra.mxu0 0.0
    %2366 = vmatprep.subr.mxu0 0.0
    %2367 = vmatpush2.msra.mxu0 0.0
    %2368 = vmatprep.subr.mxu0 0.0
    %2369 = vmatpush2.msra.mxu0 0.0
    %2370 = vmatprep.subr.mxu0 0.0
    %2371 = vmatpush2.msra.mxu0 0.0
    %2372 = vmatprep.subr.mxu0 0.0
    %2373 = vmatpush2.msra.mxu0 0.0
    %2374 = vmatprep.subr.mxu0 0.0
    %2375 = vmatpush2.msra.mxu0 0.0
    %2376 = vmatprep.mubr.f32.mxu0 0.0
    %2377 = vmatmul.mubr.f32.gmra.mxu0 %v2310
    %v2378 = vpop.f32.mrf.mxu0
    %v2379 = vadd.f32 0.0, %v2378
    %v2380 = vpop.f32.mrf.mxu0
    %2381 = vdwg.mxu0
    %v2382 = vadd.f32 %v2105, %v2379
    %v2383 = vxor.u32 %v2382, 2147483648
    %v2384 = vmul.f32 %v2383, 1.442695
    %v2385 = vpow.pop %v2384
    %v2386 = vadd.f32 %v2385, 1.0
    %v2387 = vrcp.pop %v2386
    %v2388 = vmul.f32 1.0, %v2387
    %v2389 = vtanh.pop %v2382
    %v2390 = vmul.f32 %v2388, %v2300
    %2392 = vrot.lane.b32.xlu0 %v2389, 64
    %v2393 = vpop.permute.xlu0 %2392
    %v2395 = vmul.f32 %v2388, %v2393
    %2397 = vrot.lane.b32.xlu0 %v2395, 32
    %v2398 = vpop.permute.xlu0 %2397
    %v2400 = vadd.f32 %v2390, %v2398
    %v2401 = vtanh.pop %v2400
    %2403 = vrot.lane.b32.xlu0 %v2401, 64
    %v2404 = vpop.permute.xlu0 %2403
    %v2406 = vmul.f32 %v2388, %v2404
    %2408 = vrot.lane.b32.xlu0 %v2406, 32
    %v2409 = vpop.permute.xlu0 %2408
    %v2410 = vsel %vm1176, %v2409, 0
    %2412 = vmatprep.subr.mxu0 0.0
    %2413 = vmatpush1.msra.mxu0 0.0
    %2414 = vmatprep.subr.mxu0 0.0
    %2415 = vmatpush1.msra.mxu0 0.0
    %2416 = vmatprep.subr.mxu0 0.0
    %2417 = vmatpush1.msra.mxu0 0.0
    %2418 = vmatprep.subr.mxu0 0.0
    %2419 = vmatpush1.msra.mxu0 0.0
    %2420 = vmatprep.subr.mxu0 0.0
    %2421 = vmatpush1.msra.mxu0 0.0
    %2422 = vmatprep.subr.mxu0 0.0
    %2423 = vmatpush1.msra.mxu0 0.0
    %2424 = vmatprep.subr.mxu0 0.0
    %2425 = vmatpush1.msra.mxu0 0.0
    %2426 = vmatprep.subr.mxu0 0.0
    %2427 = vmatpush1.msra.mxu0 0.0
    %2428 = vmatprep.subr.mxu0 0.0
    %2429 = vmatpush1.msra.mxu0 0.0
    %2430 = vmatprep.subr.mxu0 0.0
    %2431 = vmatpush1.msra.mxu0 0.0
    %2432 = vmatprep.subr.mxu0 0.0
    %2433 = vmatpush1.msra.mxu0 0.0
    %2434 = vmatprep.subr.mxu0 0.0
    %2435 = vmatpush1.msra.mxu0 0.0
    %2436 = vmatprep.subr.mxu0 0.0
    %2437 = vmatpush1.msra.mxu0 %v2111
    %2438 = vmatprep.subr.mxu0 0.0
    %2439 = vmatpush1.msra.mxu0 %v2110
    %2440 = vmatprep.subr.mxu0 0.0
    %2441 = vmatpush1.msra.mxu0 %v2109
    %2442 = vmatprep.subr.mxu0 0.0
    %2443 = vmatpush1.msra.mxu0 %v2108
    %2444 = vmatprep.subr.mxu0 0.0
    %2445 = vmatpush2.msra.mxu0 0.0
    %2446 = vmatprep.subr.mxu0 0.0
    %2447 = vmatpush2.msra.mxu0 0.0
    %2448 = vmatprep.subr.mxu0 0.0
    %2449 = vmatpush2.msra.mxu0 0.0
    %2450 = vmatprep.subr.mxu0 0.0
    %2451 = vmatpush2.msra.mxu0 0.0
    %2452 = vmatprep.subr.mxu0 0.0
    %2453 = vmatpush2.msra.mxu0 0.0
    %2454 = vmatprep.subr.mxu0 0.0
    %2455 = vmatpush2.msra.mxu0 0.0
    %2456 = vmatprep.subr.mxu0 0.0
    %2457 = vmatpush2.msra.mxu0 0.0
    %2458 = vmatprep.subr.mxu0 0.0
    %2459 = vmatpush2.msra.mxu0 0.0
    %2460 = vmatprep.subr.mxu0 0.0
    %2461 = vmatpush2.msra.mxu0 0.0
    %2462 = vmatprep.subr.mxu0 0.0
    %2463 = vmatpush2.msra.mxu0 0.0
    %2464 = vmatprep.subr.mxu0 0.0
    %2465 = vmatpush2.msra.mxu0 0.0
    %2466 = vmatprep.subr.mxu0 0.0
    %2467 = vmatpush2.msra.mxu0 0.0
    %2468 = vmatprep.subr.mxu0 0.0
    %2469 = vmatpush2.msra.mxu0 0.0
    %2470 = vmatprep.subr.mxu0 0.0
    %2471 = vmatpush2.msra.mxu0 0.0
    %2472 = vmatprep.subr.mxu0 0.0
    %2473 = vmatpush2.msra.mxu0 0.0
    %2474 = vmatprep.subr.mxu0 0.0
    %2475 = vmatpush2.msra.mxu0 0.0
    %2476 = vmatprep.mubr.f32.mxu0 0.0
    %2477 = vmatmul.mubr.f32.gmra.mxu0 %v2410
    %v2478 = vpop.f32.mrf.mxu0
    %v2479 = vadd.f32 0.0, %v2478
    %v2480 = vpop.f32.mrf.mxu0
    %2481 = vdwg.mxu0
    %v2482 = vadd.f32 %v2105, %v2479
    %v2483 = vxor.u32 %v2482, 2147483648
    %v2484 = vmul.f32 %v2483, 1.442695
    %v2485 = vpow.pop %v2484
    %v2486 = vadd.f32 %v2485, 1.0
    %v2487 = vrcp.pop %v2486
    %v2488 = vmul.f32 1.0, %v2487
    %v2489 = vtanh.pop %v2482
    %v2490 = vmul.f32 %v2488, %v2400
    %2492 = vrot.lane.b32.xlu0 %v2489, 64
    %v2493 = vpop.permute.xlu0 %2492
    %v2495 = vmul.f32 %v2488, %v2493
    %2497 = vrot.lane.b32.xlu0 %v2495, 32
    %v2498 = vpop.permute.xlu0 %2497
    %v2500 = vadd.f32 %v2490, %v2498
    %v2501 = vtanh.pop %v2500
    %2503 = vrot.lane.b32.xlu0 %v2501, 64
    %v2504 = vpop.permute.xlu0 %2503
    %v2506 = vmul.f32 %v2488, %v2504
    %2508 = vrot.lane.b32.xlu0 %v2506, 32
    %v2509 = vpop.permute.xlu0 %2508
    %v2510 = vsel %vm1176, %v2509, 0
    %2512 = vmatprep.subr.mxu0 0.0
    %2513 = vmatpush1.msra.mxu0 0.0
    %2514 = vmatprep.subr.mxu0 0.0
    %2515 = vmatpush1.msra.mxu0 0.0
    %2516 = vmatprep.subr.mxu0 0.0
    %2517 = vmatpush1.msra.mxu0 0.0
    %2518 = vmatprep.subr.mxu0 0.0
    %2519 = vmatpush1.msra.mxu0 0.0
    %2520 = vmatprep.subr.mxu0 0.0
    %2521 = vmatpush1.msra.mxu0 0.0
    %2522 = vmatprep.subr.mxu0 0.0
    %2523 = vmatpush1.msra.mxu0 0.0
    %2524 = vmatprep.subr.mxu0 0.0
    %2525 = vmatpush1.msra.mxu0 0.0
    %2526 = vmatprep.subr.mxu0 0.0
    %2527 = vmatpush1.msra.mxu0 0.0
    %2528 = vmatprep.subr.mxu0 0.0
    %2529 = vmatpush1.msra.mxu0 0.0
    %2530 = vmatprep.subr.mxu0 0.0
    %2531 = vmatpush1.msra.mxu0 0.0
    %2532 = vmatprep.subr.mxu0 0.0
    %2533 = vmatpush1.msra.mxu0 0.0
    %2534 = vmatprep.subr.mxu0 0.0
    %2535 = vmatpush1.msra.mxu0 0.0
    %2536 = vmatprep.subr.mxu0 0.0
    %2537 = vmatpush1.msra.mxu0 %v2111
    %2538 = vmatprep.subr.mxu0 0.0
    %2539 = vmatpush1.msra.mxu0 %v2110
    %2540 = vmatprep.subr.mxu0 0.0
    %2541 = vmatpush1.msra.mxu0 %v2109
    %2542 = vmatprep.subr.mxu0 0.0
    %2543 = vmatpush1.msra.mxu0 %v2108
    %2544 = vmatprep.subr.mxu0 0.0
    %2545 = vmatpush2.msra.mxu0 0.0
    %2546 = vmatprep.subr.mxu0 0.0
    %2547 = vmatpush2.msra.mxu0 0.0
    %2548 = vmatprep.subr.mxu0 0.0
    %2549 = vmatpush2.msra.mxu0 0.0
    %2550 = vmatprep.subr.mxu0 0.0
    %2551 = vmatpush2.msra.mxu0 0.0
    %2552 = vmatprep.subr.mxu0 0.0
    %2553 = vmatpush2.msra.mxu0 0.0
    %2554 = vmatprep.subr.mxu0 0.0
    %2555 = vmatpush2.msra.mxu0 0.0
    %2556 = vmatprep.subr.mxu0 0.0
    %2557 = vmatpush2.msra.mxu0 0.0
    %2558 = vmatprep.subr.mxu0 0.0
    %2559 = vmatpush2.msra.mxu0 0.0
    %2560 = vmatprep.subr.mxu0 0.0
    %2561 = vmatpush2.msra.mxu0 0.0
    %2562 = vmatprep.subr.mxu0 0.0
    %2563 = vmatpush2.msra.mxu0 0.0
    %2564 = vmatprep.subr.mxu0 0.0
    %2565 = vmatpush2.msra.mxu0 0.0
    %2566 = vmatprep.subr.mxu0 0.0
    %2567 = vmatpush2.msra.mxu0 0.0
    %2568 = vmatprep.subr.mxu0 0.0
    %2569 = vmatpush2.msra.mxu0 0.0
    %2570 = vmatprep.subr.mxu0 0.0
    %2571 = vmatpush2.msra.mxu0 0.0
    %2572 = vmatprep.subr.mxu0 0.0
    %2573 = vmatpush2.msra.mxu0 0.0
    %2574 = vmatprep.subr.mxu0 0.0
    %2575 = vmatpush2.msra.mxu0 0.0
    %2576 = vmatprep.mubr.f32.mxu0 0.0
    %2577 = vmatmul.mubr.f32.gmra.mxu0 %v2510
    %v2578 = vpop.f32.mrf.mxu0
    %v2579 = vadd.f32 0.0, %v2578
    %v2580 = vpop.f32.mrf.mxu0
    %2581 = vdwg.mxu0
    %v2582 = vadd.f32 %v2105, %v2579
    %v2583 = vxor.u32 %v2582, 2147483648
    %v2584 = vmul.f32 %v2583, 1.442695
    %v2585 = vpow.pop %v2584
    %v2586 = vadd.f32 %v2585, 1.0
    %v2587 = vrcp.pop %v2586
    %v2588 = vmul.f32 1.0, %v2587
    %v2589 = vtanh.pop %v2582
    %v2590 = vmul.f32 %v2588, %v2500
    %2592 = vrot.lane.b32.xlu0 %v2589, 64
    %v2593 = vpop.permute.xlu0 %2592
    %v2595 = vmul.f32 %v2588, %v2593
    %2597 = vrot.lane.b32.xlu0 %v2595, 32
    %v2598 = vpop.permute.xlu0 %2597
    %v2600 = vadd.f32 %v2590, %v2598
    %v2601 = vtanh.pop %v2600
    %2603 = vrot.lane.b32.xlu0 %v2601, 64
    %v2604 = vpop.permute.xlu0 %2603
    %v2606 = vmul.f32 %v2588, %v2604
    %2608 = vrot.lane.b32.xlu0 %v2606, 32
    %v2609 = vpop.permute.xlu0 %2608
    %v2610 = vsel %vm1176, %v2609, 0
    %2612 = vmatprep.subr.mxu0 0.0
    %2613 = vmatpush1.msra.mxu0 0.0
    %2614 = vmatprep.subr.mxu0 0.0
    %2615 = vmatpush1.msra.mxu0 0.0
    %2616 = vmatprep.subr.mxu0 0.0
    %2617 = vmatpush1.msra.mxu0 0.0
    %2618 = vmatprep.subr.mxu0 0.0
    %2619 = vmatpush1.msra.mxu0 0.0
    %2620 = vmatprep.subr.mxu0 0.0
    %2621 = vmatpush1.msra.mxu0 0.0
    %2622 = vmatprep.subr.mxu0 0.0
    %2623 = vmatpush1.msra.mxu0 0.0
    %2624 = vmatprep.subr.mxu0 0.0
    %2625 = vmatpush1.msra.mxu0 0.0
    %2626 = vmatprep.subr.mxu0 0.0
    %2627 = vmatpush1.msra.mxu0 0.0
    %2628 = vmatprep.subr.mxu0 0.0
    %2629 = vmatpush1.msra.mxu0 0.0
    %2630 = vmatprep.subr.mxu0 0.0
    %2631 = vmatpush1.msra.mxu0 0.0
    %2632 = vmatprep.subr.mxu0 0.0
    %2633 = vmatpush1.msra.mxu0 0.0
    %2634 = vmatprep.subr.mxu0 0.0
    %2635 = vmatpush1.msra.mxu0 0.0
    %2636 = vmatprep.subr.mxu0 0.0
    %2637 = vmatpush1.msra.mxu0 %v2111
    %2638 = vmatprep.subr.mxu0 0.0
    %2639 = vmatpush1.msra.mxu0 %v2110
    %2640 = vmatprep.subr.mxu0 0.0
    %2641 = vmatpush1.msra.mxu0 %v2109
    %2642 = vmatprep.subr.mxu0 0.0
    %2643 = vmatpush1.msra.mxu0 %v2108
    %2644 = vmatprep.subr.mxu0 0.0
    %2645 = vmatpush2.msra.mxu0 0.0
    %2646 = vmatprep.subr.mxu0 0.0
    %2647 = vmatpush2.msra.mxu0 0.0
    %2648 = vmatprep.subr.mxu0 0.0
    %2649 = vmatpush2.msra.mxu0 0.0
    %2650 = vmatprep.subr.mxu0 0.0
    %2651 = vmatpush2.msra.mxu0 0.0
    %2652 = vmatprep.subr.mxu0 0.0
    %2653 = vmatpush2.msra.mxu0 0.0
    %2654 = vmatprep.subr.mxu0 0.0
    %2655 = vmatpush2.msra.mxu0 0.0
    %2656 = vmatprep.subr.mxu0 0.0
    %2657 = vmatpush2.msra.mxu0 0.0
    %2658 = vmatprep.subr.mxu0 0.0
    %2659 = vmatpush2.msra.mxu0 0.0
    %2660 = vmatprep.subr.mxu0 0.0
    %2661 = vmatpush2.msra.mxu0 0.0
    %2662 = vmatprep.subr.mxu0 0.0
    %2663 = vmatpush2.msra.mxu0 0.0
    %2664 = vmatprep.subr.mxu0 0.0
    %2665 = vmatpush2.msra.mxu0 0.0
    %2666 = vmatprep.subr.mxu0 0.0
    %2667 = vmatpush2.msra.mxu0 0.0
    %2668 = vmatprep.subr.mxu0 0.0
    %2669 = vmatpush2.msra.mxu0 0.0
    %2670 = vmatprep.subr.mxu0 0.0
    %2671 = vmatpush2.msra.mxu0 0.0
    %2672 = vmatprep.subr.mxu0 0.0
    %2673 = vmatpush2.msra.mxu0 0.0
    %2674 = vmatprep.subr.mxu0 0.0
    %2675 = vmatpush2.msra.mxu0 0.0
    %2676 = vmatprep.mubr.f32.mxu0 0.0
    %2677 = vmatmul.mubr.f32.gmra.mxu0 %v2610
    %v2678 = vpop.f32.mrf.mxu0
    %v2679 = vadd.f32 0.0, %v2678
    %v2680 = vpop.f32.mrf.mxu0
    %2681 = vdwg.mxu0
    %v2682 = vadd.f32 %v2105, %v2679
    %v2683 = vxor.u32 %v2682, 2147483648
    %v2684 = vmul.f32 %v2683, 1.442695
    %v2685 = vpow.pop %v2684
    %v2686 = vadd.f32 %v2685, 1.0
    %v2687 = vrcp.pop %v2686
    %v2688 = vmul.f32 1.0, %v2687
    %v2689 = vtanh.pop %v2682
    %v2690 = vmul.f32 %v2688, %v2600
    %2692 = vrot.lane.b32.xlu0 %v2689, 64
    %v2693 = vpop.permute.xlu0 %2692
    %v2695 = vmul.f32 %v2688, %v2693
    %2697 = vrot.lane.b32.xlu0 %v2695, 32
    %v2698 = vpop.permute.xlu0 %2697
    %v2700 = vadd.f32 %v2690, %v2698
    %v2701 = vtanh.pop %v2700
    %2703 = vrot.lane.b32.xlu0 %v2701, 64
    %v2704 = vpop.permute.xlu0 %2703
    %v2706 = vmul.f32 %v2688, %v2704
    %2708 = vrot.lane.b32.xlu0 %v2706, 32
    %v2709 = vpop.permute.xlu0 %2708
    %v2710 = vsel %vm1176, %v2709, 0
    %2712 = vmatprep.subr.mxu0 0.0
    %2713 = vmatpush1.msra.mxu0 0.0
    %2714 = vmatprep.subr.mxu0 0.0
    %2715 = vmatpush1.msra.mxu0 0.0
    %2716 = vmatprep.subr.mxu0 0.0
    %2717 = vmatpush1.msra.mxu0 0.0
    %2718 = vmatprep.subr.mxu0 0.0
    %2719 = vmatpush1.msra.mxu0 0.0
    %2720 = vmatprep.subr.mxu0 0.0
    %2721 = vmatpush1.msra.mxu0 0.0
    %2722 = vmatprep.subr.mxu0 0.0
    %2723 = vmatpush1.msra.mxu0 0.0
    %2724 = vmatprep.subr.mxu0 0.0
    %2725 = vmatpush1.msra.mxu0 0.0
    %2726 = vmatprep.subr.mxu0 0.0
    %2727 = vmatpush1.msra.mxu0 0.0
    %2728 = vmatprep.subr.mxu0 0.0
    %2729 = vmatpush1.msra.mxu0 0.0
    %2730 = vmatprep.subr.mxu0 0.0
    %2731 = vmatpush1.msra.mxu0 0.0
    %2732 = vmatprep.subr.mxu0 0.0
    %2733 = vmatpush1.msra.mxu0 0.0
    %2734 = vmatprep.subr.mxu0 0.0
    %2735 = vmatpush1.msra.mxu0 0.0
    %2736 = vmatprep.subr.mxu0 0.0
    %2737 = vmatpush1.msra.mxu0 %v2111
    %2738 = vmatprep.subr.mxu0 0.0
    %2739 = vmatpush1.msra.mxu0 %v2110
    %2740 = vmatprep.subr.mxu0 0.0
    %2741 = vmatpush1.msra.mxu0 %v2109
    %2742 = vmatprep.subr.mxu0 0.0
    %2743 = vmatpush1.msra.mxu0 %v2108
    %2744 = vmatprep.subr.mxu0 0.0
    %2745 = vmatpush2.msra.mxu0 0.0
    %2746 = vmatprep.subr.mxu0 0.0
    %2747 = vmatpush2.msra.mxu0 0.0
    %2748 = vmatprep.subr.mxu0 0.0
    %2749 = vmatpush2.msra.mxu0 0.0
    %2750 = vmatprep.subr.mxu0 0.0
    %2751 = vmatpush2.msra.mxu0 0.0
    %2752 = vmatprep.subr.mxu0 0.0
    %2753 = vmatpush2.msra.mxu0 0.0
    %2754 = vmatprep.subr.mxu0 0.0
    %2755 = vmatpush2.msra.mxu0 0.0
    %2756 = vmatprep.subr.mxu0 0.0
    %2757 = vmatpush2.msra.mxu0 0.0
    %2758 = vmatprep.subr.mxu0 0.0
    %2759 = vmatpush2.msra.mxu0 0.0
    %2760 = vmatprep.subr.mxu0 0.0
    %2761 = vmatpush2.msra.mxu0 0.0
    %2762 = vmatprep.subr.mxu0 0.0
    %2763 = vmatpush2.msra.mxu0 0.0
    %2764 = vmatprep.subr.mxu0 0.0
    %2765 = vmatpush2.msra.mxu0 0.0
    %2766 = vmatprep.subr.mxu0 0.0
    %2767 = vmatpush2.msra.mxu0 0.0
    %2768 = vmatprep.subr.mxu0 0.0
    %2769 = vmatpush2.msra.mxu0 0.0
    %2770 = vmatprep.subr.mxu0 0.0
    %2771 = vmatpush2.msra.mxu0 0.0
    %2772 = vmatprep.subr.mxu0 0.0
    %2773 = vmatpush2.msra.mxu0 0.0
    %2774 = vmatprep.subr.mxu0 0.0
    %2775 = vmatpush2.msra.mxu0 0.0
    %2776 = vmatprep.mubr.f32.mxu0 0.0
    %2777 = vmatmul.mubr.f32.gmra.mxu0 %v2710
    %v2778 = vpop.f32.mrf.mxu0
    %v2779 = vadd.f32 0.0, %v2778
    %v2780 = vpop.f32.mrf.mxu0
    %2781 = vdwg.mxu0
    %v2782 = vadd.f32 %v2105, %v2779
    %v2783 = vxor.u32 %v2782, 2147483648
    %v2784 = vmul.f32 %v2783, 1.442695
    %v2785 = vpow.pop %v2784
    %v2786 = vadd.f32 %v2785, 1.0
    %v2787 = vrcp.pop %v2786
    %v2788 = vmul.f32 1.0, %v2787
    %v2789 = vtanh.pop %v2782
    %v2790 = vmul.f32 %v2788, %v2700
    %2792 = vrot.lane.b32.xlu0 %v2789, 64
    %v2793 = vpop.permute.xlu0 %2792
    %v2795 = vmul.f32 %v2788, %v2793
    %2797 = vrot.lane.b32.xlu0 %v2795, 32
    %v2798 = vpop.permute.xlu0 %2797
    %v2800 = vadd.f32 %v2790, %v2798
    %v2801 = vtanh.pop %v2800
    %2803 = vrot.lane.b32.xlu0 %v2801, 64
    %v2804 = vpop.permute.xlu0 %2803
    %v2806 = vmul.f32 %v2788, %v2804
    %2808 = vrot.lane.b32.xlu0 %v2806, 32
    %v2809 = vpop.permute.xlu0 %2808
    %v2810 = vsel %vm1176, %v2809, 0
    %2812 = vmatprep.subr.mxu0 0.0
    %2813 = vmatpush1.msra.mxu0 0.0
    %2814 = vmatprep.subr.mxu0 0.0
    %2815 = vmatpush1.msra.mxu0 0.0
    %2816 = vmatprep.subr.mxu0 0.0
    %2817 = vmatpush1.msra.mxu0 0.0
    %2818 = vmatprep.subr.mxu0 0.0
    %2819 = vmatpush1.msra.mxu0 0.0
    %2820 = vmatprep.subr.mxu0 0.0
    %2821 = vmatpush1.msra.mxu0 0.0
    %2822 = vmatprep.subr.mxu0 0.0
    %2823 = vmatpush1.msra.mxu0 0.0
    %2824 = vmatprep.subr.mxu0 0.0
    %2825 = vmatpush1.msra.mxu0 0.0
    %2826 = vmatprep.subr.mxu0 0.0
    %2827 = vmatpush1.msra.mxu0 0.0
    %2828 = vmatprep.subr.mxu0 0.0
    %2829 = vmatpush1.msra.mxu0 0.0
    %2830 = vmatprep.subr.mxu0 0.0
    %2831 = vmatpush1.msra.mxu0 0.0
    %2832 = vmatprep.subr.mxu0 0.0
    %2833 = vmatpush1.msra.mxu0 0.0
    %2834 = vmatprep.subr.mxu0 0.0
    %2835 = vmatpush1.msra.mxu0 0.0
    %2836 = vmatprep.subr.mxu0 0.0
    %2837 = vmatpush1.msra.mxu0 %v2111
    %2838 = vmatprep.subr.mxu0 0.0
    %2839 = vmatpush1.msra.mxu0 %v2110
    %2840 = vmatprep.subr.mxu0 0.0
    %2841 = vmatpush1.msra.mxu0 %v2109
    %2842 = vmatprep.subr.mxu0 0.0
    %2843 = vmatpush1.msra.mxu0 %v2108
    %2844 = vmatprep.subr.mxu0 0.0
    %2845 = vmatpush2.msra.mxu0 0.0
    %2846 = vmatprep.subr.mxu0 0.0
    %2847 = vmatpush2.msra.mxu0 0.0
    %2848 = vmatprep.subr.mxu0 0.0
    %2849 = vmatpush2.msra.mxu0 0.0
    %2850 = vmatprep.subr.mxu0 0.0
    %2851 = vmatpush2.msra.mxu0 0.0
    %2852 = vmatprep.subr.mxu0 0.0
    %2853 = vmatpush2.msra.mxu0 0.0
    %2854 = vmatprep.subr.mxu0 0.0
    %2855 = vmatpush2.msra.mxu0 0.0
    %2856 = vmatprep.subr.mxu0 0.0
    %2857 = vmatpush2.msra.mxu0 0.0
    %2858 = vmatprep.subr.mxu0 0.0
    %2859 = vmatpush2.msra.mxu0 0.0
    %2860 = vmatprep.subr.mxu0 0.0
    %2861 = vmatpush2.msra.mxu0 0.0
    %2862 = vmatprep.subr.mxu0 0.0
    %2863 = vmatpush2.msra.mxu0 0.0
    %2864 = vmatprep.subr.mxu0 0.0
    %2865 = vmatpush2.msra.mxu0 0.0
    %2866 = vmatprep.subr.mxu0 0.0
    %2867 = vmatpush2.msra.mxu0 0.0
    %2868 = vmatprep.subr.mxu0 0.0
    %2869 = vmatpush2.msra.mxu0 0.0
    %2870 = vmatprep.subr.mxu0 0.0
    %2871 = vmatpush2.msra.mxu0 0.0
    %2872 = vmatprep.subr.mxu0 0.0
    %2873 = vmatpush2.msra.mxu0 0.0
    %2874 = vmatprep.subr.mxu0 0.0
    %2875 = vmatpush2.msra.mxu0 0.0
    %2876 = vmatprep.mubr.f32.mxu0 0.0
    %2877 = vmatmul.mubr.f32.gmra.mxu0 %v2810
    %v2878 = vpop.f32.mrf.mxu0
    %v2879 = vadd.f32 0.0, %v2878
    %v2880 = vpop.f32.mrf.mxu0
    %2881 = vdwg.mxu0
    %v2882 = vadd.f32 %v2105, %v2879
    %v2883 = vxor.u32 %v2882, 2147483648
    %v2884 = vmul.f32 %v2883, 1.442695
    %v2885 = vpow.pop %v2884
    %v2886 = vadd.f32 %v2885, 1.0
    %v2887 = vrcp.pop %v2886
    %v2888 = vmul.f32 1.0, %v2887
    %v2889 = vtanh.pop %v2882
    %v2890 = vmul.f32 %v2888, %v2800
    %2892 = vrot.lane.b32.xlu0 %v2889, 64
    %v2893 = vpop.permute.xlu0 %2892
    %v2895 = vmul.f32 %v2888, %v2893
    %2897 = vrot.lane.b32.xlu0 %v2895, 32
    %v2898 = vpop.permute.xlu0 %2897
    %v2900 = vadd.f32 %v2890, %v2898
    %v2901 = vtanh.pop %v2900
    %2903 = vrot.lane.b32.xlu0 %v2901, 64
    %v2904 = vpop.permute.xlu0 %2903
    %v2906 = vmul.f32 %v2888, %v2904
    %v2907 = vrot.slane %v2306, 7
    %v2909 = vrot.slane %v2406, 6
    %v2911 = vrot.slane %v2506, 5
    %v2913 = vrot.slane %v2606, 4
    %v2915 = vrot.slane %v2706, 3
    %v2917 = vrot.slane %v2806, 2
    %v2920 = vrot.slane %v2906, 1
    %v2922 = vsel %vm1068, %v2206, %v2907
    %v2923 = vsel %vm1070, %v2922, %v2909
    %v2924 = vsel %vm1072, %v2923, %v2911
    %v2925 = vsel %vm1074, %v2924, %v2913
    %v2926 = vsel %vm1076, %v2925, %v2915
    %v2927 = vsel %vm1078, %v2926, %v2917
    %v2928 = vsel %vm1080, %v2927, %v2920
    %v2929 = vld [vmem:[#allocation12] sm:$0xff]
    %v2930 = vld [vmem:[#allocation12 + $0x8] sm:$0xff]
    %v2931 = vld [vmem:[#allocation12 + $0x10] sm:$0xff]
    %v2932 = vld [vmem:[#allocation12 + $0x18] sm:$0xff]
    %v2933 = vld [vmem:[#allocation12 + $0x20] sm:$0xff]
    %v2934 = vld [vmem:[#allocation12 + $0x28] sm:$0xff]
    %v2935 = vld [vmem:[#allocation12 + $0x30] sm:$0xff]
    %v2936 = vld [vmem:[#allocation12 + $0x38] sm:$0xff]
    %v2937 = vld [vmem:[%s12] sm:$0x3]
    %v2939 = vlaneseq
    %v2940 = vshrl.u32 %v2939, 7
    %v2941 = vsub.s32 0, %v2940
    %v2942 = vrot.slane %v2937, %v2941
    %v2943 = vlaneseq
    %v2944 = vshrl.u32 %v2943, 7
    %v2945 = vsub.s32 1, %v2944
    %v2946 = vrot.slane %v2937, %v2945
    %2950 = vrot.lane.b32.xlu0 %v2928, 32
    %v2951 = vpop.permute.xlu0 %2950
    %v2952 = vsel %vm1176, %v2951, 0
    %2954 = vmatprep.subr.mxu0 0.0
    %2955 = vmatpush1.msra.mxu0 0.0
    %2956 = vmatprep.subr.mxu0 0.0
    %2957 = vmatpush1.msra.mxu0 0.0
    %2958 = vmatprep.subr.mxu0 0.0
    %2959 = vmatpush1.msra.mxu0 0.0
    %2960 = vmatprep.subr.mxu0 0.0
    %2961 = vmatpush1.msra.mxu0 0.0
    %2962 = vmatprep.subr.mxu0 0.0
    %2963 = vmatpush1.msra.mxu0 0.0
    %2964 = vmatprep.subr.mxu0 0.0
    %2965 = vmatpush1.msra.mxu0 0.0
    %2966 = vmatprep.subr.mxu0 0.0
    %2967 = vmatpush1.msra.mxu0 0.0
    %2968 = vmatprep.subr.mxu0 0.0
    %2969 = vmatpush1.msra.mxu0 0.0
    %2970 = vmatprep.subr.mxu0 0.0
    %2971 = vmatpush1.msra.mxu0 0.0
    %2972 = vmatprep.subr.mxu0 0.0
    %2973 = vmatpush1.msra.mxu0 0.0
    %2974 = vmatprep.subr.mxu0 0.0
    %2975 = vmatpush1.msra.mxu0 0.0
    %2976 = vmatprep.subr.mxu0 0.0
    %2977 = vmatpush1.msra.mxu0 0.0
    %2978 = vmatprep.subr.mxu0 %v2936
    %2979 = vmatpush1.msra.mxu0 %v2935
    %2980 = vmatprep.subr.mxu0 %v2934
    %2981 = vmatpush1.msra.mxu0 %v2933
    %2982 = vmatprep.subr.mxu0 %v2932
    %2983 = vmatpush1.msra.mxu0 %v2931
    %2984 = vmatprep.subr.mxu0 %v2930
    %2985 = vmatpush1.msra.mxu0 %v2929
    %2986 = vmatprep.subr.mxu0 0.0
    %2987 = vmatpush2.msra.mxu0 0.0
    %2988 = vmatprep.subr.mxu0 0.0
    %2989 = vmatpush2.msra.mxu0 0.0
    %2990 = vmatprep.subr.mxu0 0.0
    %2991 = vmatpush2.msra.mxu0 0.0
    %2992 = vmatprep.subr.mxu0 0.0
    %2993 = vmatpush2.msra.mxu0 0.0
    %2994 = vmatprep.subr.mxu0 0.0
    %2995 = vmatpush2.msra.mxu0 0.0
    %2996 = vmatprep.subr.mxu0 0.0
    %2997 = vmatpush2.msra.mxu0 0.0
    %2998 = vmatprep.subr.mxu0 0.0
    %2999 = vmatpush2.msra.mxu0 0.0
    %3000 = vmatprep.subr.mxu0 0.0
    %3001 = vmatpush2.msra.mxu0 0.0
    %3002 = vmatprep.subr.mxu0 0.0
    %3003 = vmatpush2.msra.mxu0 0.0
    %3004 = vmatprep.subr.mxu0 0.0
    %3005 = vmatpush2.msra.mxu0 0.0
    %3006 = vmatprep.subr.mxu0 0.0
    %3007 = vmatpush2.msra.mxu0 0.0
    %3008 = vmatprep.subr.mxu0 0.0
    %3009 = vmatpush2.msra.mxu0 0.0
    %3010 = vmatprep.subr.mxu0 0.0
    %3011 = vmatpush2.msra.mxu0 0.0
    %3012 = vmatprep.subr.mxu0 0.0
    %3013 = vmatpush2.msra.mxu0 0.0
    %3014 = vmatprep.subr.mxu0 0.0
    %3015 = vmatpush2.msra.mxu0 0.0
    %3016 = vmatprep.subr.mxu0 0.0
    %3017 = vmatpush2.msra.mxu0 0.0
    %3018 = vmatprep.mubr.f32.mxu0 0.0
    %3019 = vmatmul.mubr.f32.gmra.mxu0 %v2952
    %v3020 = vpop.f32.mrf.mxu0
    %v3021 = vadd.f32 %v2942, %v3020
    %v3022 = vpop.f32.mrf.mxu0
    %v3023 = vadd.f32 %v2946, %v3022
    %3024 = vdwg.mxu0
    %v3025 = vld [vmem:[#allocation14] sm:$0xff]
    %v3026 = vld [vmem:[#allocation14 + $0x8] sm:$0xff]
    %v3027 = vld [vmem:[#allocation14 + $0x10] sm:$0xff]
    %v3028 = vld [vmem:[#allocation14 + $0x18] sm:$0xff]
    %v3029 = vld [vmem:[#allocation14 + $0x20] sm:$0xff]
    %v3030 = vld [vmem:[#allocation14 + $0x28] sm:$0xff]
    %v3031 = vld [vmem:[#allocation14 + $0x30] sm:$0xff]
    %v3032 = vld [vmem:[#allocation14 + $0x38] sm:$0xff]
    %v3033 = vld [vmem:[#allocation14 + $0x40] sm:$0xff]
    %v3034 = vld [vmem:[#allocation14 + $0x48] sm:$0xff]
    %v3035 = vld [vmem:[#allocation14 + $0x50] sm:$0xff]
    %v3036 = vld [vmem:[#allocation14 + $0x58] sm:$0xff]
    %v3037 = vld [vmem:[#allocation14 + $0x60] sm:$0xff]
    %v3038 = vld [vmem:[#allocation14 + $0x68] sm:$0xff]
    %v3039 = vld [vmem:[#allocation14 + $0x70] sm:$0xff]
    %v3040 = vld [vmem:[#allocation14 + $0x78] sm:$0xff]
    %3041 = vmatprep.subr.mxu0 0.0
    %3042 = vmatpush1.msra.mxu0 0.0
    %3043 = vmatprep.subr.mxu0 0.0
    %3044 = vmatpush1.msra.mxu0 0.0
    %3045 = vmatprep.subr.mxu0 0.0
    %3046 = vmatpush1.msra.mxu0 0.0
    %3047 = vmatprep.subr.mxu0 0.0
    %3048 = vmatpush1.msra.mxu0 0.0
    %3049 = vmatprep.subr.mxu0 0.0
    %3050 = vmatpush1.msra.mxu0 0.0
    %3051 = vmatprep.subr.mxu0 0.0
    %3052 = vmatpush1.msra.mxu0 0.0
    %3053 = vmatprep.subr.mxu0 0.0
    %3054 = vmatpush1.msra.mxu0 0.0
    %3055 = vmatprep.subr.mxu0 0.0
    %3056 = vmatpush1.msra.mxu0 0.0
    %3057 = vmatprep.subr.mxu0 %v3040
    %3058 = vmatpush1.msra.mxu0 %v3039
    %3059 = vmatprep.subr.mxu0 %v3038
    %3060 = vmatpush1.msra.mxu0 %v3037
    %3061 = vmatprep.subr.mxu0 %v3036
    %3062 = vmatpush1.msra.mxu0 %v3035
    %3063 = vmatprep.subr.mxu0 %v3034
    %3064 = vmatpush1.msra.mxu0 %v3033
    %3065 = vmatprep.subr.mxu0 %v3032
    %3066 = vmatpush1.msra.mxu0 %v3031
    %3067 = vmatprep.subr.mxu0 %v3030
    %3068 = vmatpush1.msra.mxu0 %v3029
    %3069 = vmatprep.subr.mxu0 %v3028
    %3070 = vmatpush1.msra.mxu0 %v3027
    %3071 = vmatprep.subr.mxu0 %v3026
    %3072 = vmatpush1.msra.mxu0 %v3025
    %3073 = vmatprep.subr.mxu0 0.0
    %3074 = vmatpush2.msra.mxu0 0.0
    %3075 = vmatprep.subr.mxu0 0.0
    %3076 = vmatpush2.msra.mxu0 0.0
    %3077 = vmatprep.subr.mxu0 0.0
    %3078 = vmatpush2.msra.mxu0 0.0
    %3079 = vmatprep.subr.mxu0 0.0
    %3080 = vmatpush2.msra.mxu0 0.0
    %3081 = vmatprep.subr.mxu0 0.0
    %3082 = vmatpush2.msra.mxu0 0.0
    %3083 = vmatprep.subr.mxu0 0.0
    %3084 = vmatpush2.msra.mxu0 0.0
    %3085 = vmatprep.subr.mxu0 0.0
    %3086 = vmatpush2.msra.mxu0 0.0
    %3087 = vmatprep.subr.mxu0 0.0
    %3088 = vmatpush2.msra.mxu0 0.0
    %3089 = vmatprep.subr.mxu0 0.0
    %3090 = vmatpush2.msra.mxu0 0.0
    %3091 = vmatprep.subr.mxu0 0.0
    %3092 = vmatpush2.msra.mxu0 0.0
    %3093 = vmatprep.subr.mxu0 0.0
    %3094 = vmatpush2.msra.mxu0 0.0
    %3095 = vmatprep.subr.mxu0 0.0
    %3096 = vmatpush2.msra.mxu0 0.0
    %3097 = vmatprep.subr.mxu0 0.0
    %3098 = vmatpush2.msra.mxu0 0.0
    %3099 = vmatprep.subr.mxu0 0.0
    %3100 = vmatpush2.msra.mxu0 0.0
    %3101 = vmatprep.subr.mxu0 0.0
    %3102 = vmatpush2.msra.mxu0 0.0
    %3103 = vmatprep.subr.mxu0 0.0
    %3104 = vmatpush2.msra.mxu0 0.0
    %3105 = vmatprep.mubr.f32.mxu0 0.0
    %3106 = vmatmul.mubr.f32.gmra.mxu0 %v202
    %v3107 = vpop.f32.mrf.mxu0
    %v3108 = vadd.f32 0.0, %v3107
    %v3109 = vpop.f32.mrf.mxu0
    %v3110 = vadd.f32 0.0, %v3109
    %3111 = vdwg.mxu0
    %v3112 = vadd.f32 %v3021, %v3108
    %v3113 = vadd.f32 %v3023, %v3110
    %v3114 = vxor.u32 %v3112, 2147483648
    %v3115 = vmul.f32 %v3114, 1.442695
    %v3116 = vpow.pop %v3115
    %v3117 = vadd.f32 %v3116, 1.0
    %v3118 = vrcp.pop %v3117
    %v3119 = vmul.f32 1.0, %v3118
    %v3120 = vtanh.pop %v3113
    %v3121 = vxor.u32 %v3113, 2147483648
    %v3122 = vmul.f32 %v3121, 1.442695
    %v3123 = vpow.pop %v3122
    %v3124 = vadd.f32 %v3123, 1.0
    %v3125 = vrcp.pop %v3124
    %v3126 = vmul.f32 1.0, %v3125
    %v3127 = vmul.f32 %v3119, 0.0
    %v3128 = vmul.f32 %v3119, %v3120
    %3130 = vrot.lane.b32.xlu0 %v3128, 64
    %v3131 = vpop.permute.xlu0 %3130
    %v3133 = vadd.f32 %v3127, %v3131
    %v3134 = vtanh.pop %v3133
    %v3135 = vmul.f32 %v3126, %v3134
    %3137 = vrot.lane.b32.xlu0 %v3135, 64
    %v3138 = vpop.permute.xlu0 %3137
    %v3139 = vsel %vm200, %v3138, 0
    %3141 = vmatprep.subr.mxu0 0.0
    %3142 = vmatpush1.msra.mxu0 0.0
    %3143 = vmatprep.subr.mxu0 0.0
    %3144 = vmatpush1.msra.mxu0 0.0
    %3145 = vmatprep.subr.mxu0 0.0
    %3146 = vmatpush1.msra.mxu0 0.0
    %3147 = vmatprep.subr.mxu0 0.0
    %3148 = vmatpush1.msra.mxu0 0.0
    %3149 = vmatprep.subr.mxu0 0.0
    %3150 = vmatpush1.msra.mxu0 0.0
    %3151 = vmatprep.subr.mxu0 0.0
    %3152 = vmatpush1.msra.mxu0 0.0
    %3153 = vmatprep.subr.mxu0 0.0
    %3154 = vmatpush1.msra.mxu0 0.0
    %3155 = vmatprep.subr.mxu0 0.0
    %3156 = vmatpush1.msra.mxu0 0.0
    %3157 = vmatprep.subr.mxu0 %v3040
    %3158 = vmatpush1.msra.mxu0 %v3039
    %3159 = vmatprep.subr.mxu0 %v3038
    %3160 = vmatpush1.msra.mxu0 %v3037
    %3161 = vmatprep.subr.mxu0 %v3036
    %3162 = vmatpush1.msra.mxu0 %v3035
    %3163 = vmatprep.subr.mxu0 %v3034
    %3164 = vmatpush1.msra.mxu0 %v3033
    %3165 = vmatprep.subr.mxu0 %v3032
    %3166 = vmatpush1.msra.mxu0 %v3031
    %3167 = vmatprep.subr.mxu0 %v3030
    %3168 = vmatpush1.msra.mxu0 %v3029
    %3169 = vmatprep.subr.mxu0 %v3028
    %3170 = vmatpush1.msra.mxu0 %v3027
    %3171 = vmatprep.subr.mxu0 %v3026
    %3172 = vmatpush1.msra.mxu0 %v3025
    %3173 = vmatprep.subr.mxu0 0.0
    %3174 = vmatpush2.msra.mxu0 0.0
    %3175 = vmatprep.subr.mxu0 0.0
    %3176 = vmatpush2.msra.mxu0 0.0
    %3177 = vmatprep.subr.mxu0 0.0
    %3178 = vmatpush2.msra.mxu0 0.0
    %3179 = vmatprep.subr.mxu0 0.0
    %3180 = vmatpush2.msra.mxu0 0.0
    %3181 = vmatprep.subr.mxu0 0.0
    %3182 = vmatpush2.msra.mxu0 0.0
    %3183 = vmatprep.subr.mxu0 0.0
    %3184 = vmatpush2.msra.mxu0 0.0
    %3185 = vmatprep.subr.mxu0 0.0
    %3186 = vmatpush2.msra.mxu0 0.0
    %3187 = vmatprep.subr.mxu0 0.0
    %3188 = vmatpush2.msra.mxu0 0.0
    %3189 = vmatprep.subr.mxu0 0.0
    %3190 = vmatpush2.msra.mxu0 0.0
    %3191 = vmatprep.subr.mxu0 0.0
    %3192 = vmatpush2.msra.mxu0 0.0
    %3193 = vmatprep.subr.mxu0 0.0
    %3194 = vmatpush2.msra.mxu0 0.0
    %3195 = vmatprep.subr.mxu0 0.0
    %3196 = vmatpush2.msra.mxu0 0.0
    %3197 = vmatprep.subr.mxu0 0.0
    %3198 = vmatpush2.msra.mxu0 0.0
    %3199 = vmatprep.subr.mxu0 0.0
    %3200 = vmatpush2.msra.mxu0 0.0
    %3201 = vmatprep.subr.mxu0 0.0
    %3202 = vmatpush2.msra.mxu0 0.0
    %3203 = vmatprep.subr.mxu0 0.0
    %3204 = vmatpush2.msra.mxu0 0.0
    %3205 = vmatprep.mubr.f32.mxu0 0.0
    %3206 = vmatmul.mubr.f32.gmra.mxu0 %v3139
    %v3207 = vpop.f32.mrf.mxu0
    %v3208 = vadd.f32 0.0, %v3207
    %v3209 = vpop.f32.mrf.mxu0
    %v3210 = vadd.f32 0.0, %v3209
    %3211 = vdwg.mxu0
    %v3214 = vrot.slane %v3208, 7
    %v3215 = vrot.slane %v3210, 7
    %v3218 = vadd.f32 %v3021, %v3214
    %v3219 = vadd.f32 %v3023, %v3215
    %v3220 = vxor.u32 %v3218, 2147483648
    %v3221 = vmul.f32 %v3220, 1.442695
    %v3222 = vpow.pop %v3221
    %v3223 = vadd.f32 %v3222, 1.0
    %v3224 = vrcp.pop %v3223
    %v3225 = vmul.f32 1.0, %v3224
    %v3226 = vtanh.pop %v3219
    %v3227 = vxor.u32 %v3219, 2147483648
    %v3228 = vmul.f32 %v3227, 1.442695
    %v3229 = vpow.pop %v3228
    %v3230 = vadd.f32 %v3229, 1.0
    %v3231 = vrcp.pop %v3230
    %v3232 = vmul.f32 1.0, %v3231
    %v3234 = vrot.slane %v3133, 7
    %v3236 = vmul.f32 %v3225, %v3234
    %v3237 = vmul.f32 %v3225, %v3226
    %3239 = vrot.lane.b32.xlu0 %v3237, 64
    %v3240 = vpop.permute.xlu0 %3239
    %v3242 = vadd.f32 %v3236, %v3240
    %v3243 = vtanh.pop %v3242
    %v3244 = vmul.f32 %v3232, %v3243
    %v3246 = vrot.slane %v3244, 1
    %3247 = vrot.lane.b32.xlu0 %v3246, 64
    %v3248 = vpop.permute.xlu0 %3247
    %v3249 = vsel %vm200, %v3248, 0
    %3251 = vmatprep.subr.mxu0 0.0
    %3252 = vmatpush1.msra.mxu0 0.0
    %3253 = vmatprep.subr.mxu0 0.0
    %3254 = vmatpush1.msra.mxu0 0.0
    %3255 = vmatprep.subr.mxu0 0.0
    %3256 = vmatpush1.msra.mxu0 0.0
    %3257 = vmatprep.subr.mxu0 0.0
    %3258 = vmatpush1.msra.mxu0 0.0
    %3259 = vmatprep.subr.mxu0 0.0
    %3260 = vmatpush1.msra.mxu0 0.0
    %3261 = vmatprep.subr.mxu0 0.0
    %3262 = vmatpush1.msra.mxu0 0.0
    %3263 = vmatprep.subr.mxu0 0.0
    %3264 = vmatpush1.msra.mxu0 0.0
    %3265 = vmatprep.subr.mxu0 0.0
    %3266 = vmatpush1.msra.mxu0 0.0
    %3267 = vmatprep.subr.mxu0 %v3040
    %3268 = vmatpush1.msra.mxu0 %v3039
    %3269 = vmatprep.subr.mxu0 %v3038
    %3270 = vmatpush1.msra.mxu0 %v3037
    %3271 = vmatprep.subr.mxu0 %v3036
    %3272 = vmatpush1.msra.mxu0 %v3035
    %3273 = vmatprep.subr.mxu0 %v3034
    %3274 = vmatpush1.msra.mxu0 %v3033
    %3275 = vmatprep.subr.mxu0 %v3032
    %3276 = vmatpush1.msra.mxu0 %v3031
    %3277 = vmatprep.subr.mxu0 %v3030
    %3278 = vmatpush1.msra.mxu0 %v3029
    %3279 = vmatprep.subr.mxu0 %v3028
    %3280 = vmatpush1.msra.mxu0 %v3027
    %3281 = vmatprep.subr.mxu0 %v3026
    %3282 = vmatpush1.msra.mxu0 %v3025
    %3283 = vmatprep.subr.mxu0 0.0
    %3284 = vmatpush2.msra.mxu0 0.0
    %3285 = vmatprep.subr.mxu0 0.0
    %3286 = vmatpush2.msra.mxu0 0.0
    %3287 = vmatprep.subr.mxu0 0.0
    %3288 = vmatpush2.msra.mxu0 0.0
    %3289 = vmatprep.subr.mxu0 0.0
    %3290 = vmatpush2.msra.mxu0 0.0
    %3291 = vmatprep.subr.mxu0 0.0
    %3292 = vmatpush2.msra.mxu0 0.0
    %3293 = vmatprep.subr.mxu0 0.0
    %3294 = vmatpush2.msra.mxu0 0.0
    %3295 = vmatprep.subr.mxu0 0.0
    %3296 = vmatpush2.msra.mxu0 0.0
    %3297 = vmatprep.subr.mxu0 0.0
    %3298 = vmatpush2.msra.mxu0 0.0
    %3299 = vmatprep.subr.mxu0 0.0
    %3300 = vmatpush2.msra.mxu0 0.0
    %3301 = vmatprep.subr.mxu0 0.0
    %3302 = vmatpush2.msra.mxu0 0.0
    %3303 = vmatprep.subr.mxu0 0.0
    %3304 = vmatpush2.msra.mxu0 0.0
    %3305 = vmatprep.subr.mxu0 0.0
    %3306 = vmatpush2.msra.mxu0 0.0
    %3307 = vmatprep.subr.mxu0 0.0
    %3308 = vmatpush2.msra.mxu0 0.0
    %3309 = vmatprep.subr.mxu0 0.0
    %3310 = vmatpush2.msra.mxu0 0.0
    %3311 = vmatprep.subr.mxu0 0.0
    %3312 = vmatpush2.msra.mxu0 0.0
    %3313 = vmatprep.subr.mxu0 0.0
    %3314 = vmatpush2.msra.mxu0 0.0
    %3315 = vmatprep.mubr.f32.mxu0 0.0
    %3316 = vmatmul.mubr.f32.gmra.mxu0 %v3249
    %v3317 = vpop.f32.mrf.mxu0
    %v3318 = vadd.f32 0.0, %v3317
    %v3319 = vpop.f32.mrf.mxu0
    %v3320 = vadd.f32 0.0, %v3319
    %3321 = vdwg.mxu0
    %v3324 = vrot.slane %v3318, 6
    %v3325 = vrot.slane %v3320, 6
    %v3328 = vadd.f32 %v3021, %v3324
    %v3329 = vadd.f32 %v3023, %v3325
    %v3330 = vxor.u32 %v3328, 2147483648
    %v3331 = vmul.f32 %v3330, 1.442695
    %v3332 = vpow.pop %v3331
    %v3333 = vadd.f32 %v3332, 1.0
    %v3334 = vrcp.pop %v3333
    %v3335 = vmul.f32 1.0, %v3334
    %v3336 = vtanh.pop %v3329
    %v3337 = vxor.u32 %v3329, 2147483648
    %v3338 = vmul.f32 %v3337, 1.442695
    %v3339 = vpow.pop %v3338
    %v3340 = vadd.f32 %v3339, 1.0
    %v3341 = vrcp.pop %v3340
    %v3342 = vmul.f32 1.0, %v3341
    %v3344 = vrot.slane %v3242, 7
    %v3346 = vmul.f32 %v3335, %v3344
    %v3347 = vmul.f32 %v3335, %v3336
    %3349 = vrot.lane.b32.xlu0 %v3347, 64
    %v3350 = vpop.permute.xlu0 %3349
    %v3352 = vadd.f32 %v3346, %v3350
    %v3353 = vtanh.pop %v3352
    %v3354 = vmul.f32 %v3342, %v3353
    %v3356 = vrot.slane %v3354, 2
    %3357 = vrot.lane.b32.xlu0 %v3356, 64
    %v3358 = vpop.permute.xlu0 %3357
    %v3359 = vsel %vm200, %v3358, 0
    %3361 = vmatprep.subr.mxu0 0.0
    %3362 = vmatpush1.msra.mxu0 0.0
    %3363 = vmatprep.subr.mxu0 0.0
    %3364 = vmatpush1.msra.mxu0 0.0
    %3365 = vmatprep.subr.mxu0 0.0
    %3366 = vmatpush1.msra.mxu0 0.0
    %3367 = vmatprep.subr.mxu0 0.0
    %3368 = vmatpush1.msra.mxu0 0.0
    %3369 = vmatprep.subr.mxu0 0.0
    %3370 = vmatpush1.msra.mxu0 0.0
    %3371 = vmatprep.subr.mxu0 0.0
    %3372 = vmatpush1.msra.mxu0 0.0
    %3373 = vmatprep.subr.mxu0 0.0
    %3374 = vmatpush1.msra.mxu0 0.0
    %3375 = vmatprep.subr.mxu0 0.0
    %3376 = vmatpush1.msra.mxu0 0.0
    %3377 = vmatprep.subr.mxu0 %v3040
    %3378 = vmatpush1.msra.mxu0 %v3039
    %3379 = vmatprep.subr.mxu0 %v3038
    %3380 = vmatpush1.msra.mxu0 %v3037
    %3381 = vmatprep.subr.mxu0 %v3036
    %3382 = vmatpush1.msra.mxu0 %v3035
    %3383 = vmatprep.subr.mxu0 %v3034
    %3384 = vmatpush1.msra.mxu0 %v3033
    %3385 = vmatprep.subr.mxu0 %v3032
    %3386 = vmatpush1.msra.mxu0 %v3031
    %3387 = vmatprep.subr.mxu0 %v3030
    %3388 = vmatpush1.msra.mxu0 %v3029
    %3389 = vmatprep.subr.mxu0 %v3028
    %3390 = vmatpush1.msra.mxu0 %v3027
    %3391 = vmatprep.subr.mxu0 %v3026
    %3392 = vmatpush1.msra.mxu0 %v3025
    %3393 = vmatprep.subr.mxu0 0.0
    %3394 = vmatpush2.msra.mxu0 0.0
    %3395 = vmatprep.subr.mxu0 0.0
    %3396 = vmatpush2.msra.mxu0 0.0
    %3397 = vmatprep.subr.mxu0 0.0
    %3398 = vmatpush2.msra.mxu0 0.0
    %3399 = vmatprep.subr.mxu0 0.0
    %3400 = vmatpush2.msra.mxu0 0.0
    %3401 = vmatprep.subr.mxu0 0.0
    %3402 = vmatpush2.msra.mxu0 0.0
    %3403 = vmatprep.subr.mxu0 0.0
    %3404 = vmatpush2.msra.mxu0 0.0
    %3405 = vmatprep.subr.mxu0 0.0
    %3406 = vmatpush2.msra.mxu0 0.0
    %3407 = vmatprep.subr.mxu0 0.0
    %3408 = vmatpush2.msra.mxu0 0.0
    %3409 = vmatprep.subr.mxu0 0.0
    %3410 = vmatpush2.msra.mxu0 0.0
    %3411 = vmatprep.subr.mxu0 0.0
    %3412 = vmatpush2.msra.mxu0 0.0
    %3413 = vmatprep.subr.mxu0 0.0
    %3414 = vmatpush2.msra.mxu0 0.0
    %3415 = vmatprep.subr.mxu0 0.0
    %3416 = vmatpush2.msra.mxu0 0.0
    %3417 = vmatprep.subr.mxu0 0.0
    %3418 = vmatpush2.msra.mxu0 0.0
    %3419 = vmatprep.subr.mxu0 0.0
    %3420 = vmatpush2.msra.mxu0 0.0
    %3421 = vmatprep.subr.mxu0 0.0
    %3422 = vmatpush2.msra.mxu0 0.0
    %3423 = vmatprep.subr.mxu0 0.0
    %3424 = vmatpush2.msra.mxu0 0.0
    %3425 = vmatprep.mubr.f32.mxu0 0.0
    %3426 = vmatmul.mubr.f32.gmra.mxu0 %v3359
    %v3427 = vpop.f32.mrf.mxu0
    %v3428 = vadd.f32 0.0, %v3427
    %v3429 = vpop.f32.mrf.mxu0
    %v3430 = vadd.f32 0.0, %v3429
    %3431 = vdwg.mxu0
    %v3434 = vrot.slane %v3428, 5
    %v3435 = vrot.slane %v3430, 5
    %v3438 = vadd.f32 %v3021, %v3434
    %v3439 = vadd.f32 %v3023, %v3435
    %v3440 = vxor.u32 %v3438, 2147483648
    %v3441 = vmul.f32 %v3440, 1.442695
    %v3442 = vpow.pop %v3441
    %v3443 = vadd.f32 %v3442, 1.0
    %v3444 = vrcp.pop %v3443
    %v3445 = vmul.f32 1.0, %v3444
    %v3446 = vtanh.pop %v3439
    %v3447 = vxor.u32 %v3439, 2147483648
    %v3448 = vmul.f32 %v3447, 1.442695
    %v3449 = vpow.pop %v3448
    %v3450 = vadd.f32 %v3449, 1.0
    %v3451 = vrcp.pop %v3450
    %v3452 = vmul.f32 1.0, %v3451
    %v3454 = vrot.slane %v3352, 7
    %v3456 = vmul.f32 %v3445, %v3454
    %v3457 = vmul.f32 %v3445, %v3446
    %3459 = vrot.lane.b32.xlu0 %v3457, 64
    %v3460 = vpop.permute.xlu0 %3459
    %v3462 = vadd.f32 %v3456, %v3460
    %v3463 = vtanh.pop %v3462
    %v3464 = vmul.f32 %v3452, %v3463
    %v3466 = vrot.slane %v3464, 3
    %3467 = vrot.lane.b32.xlu0 %v3466, 64
    %v3468 = vpop.permute.xlu0 %3467
    %v3469 = vsel %vm200, %v3468, 0
    %3471 = vmatprep.subr.mxu0 0.0
    %3472 = vmatpush1.msra.mxu0 0.0
    %3473 = vmatprep.subr.mxu0 0.0
    %3474 = vmatpush1.msra.mxu0 0.0
    %3475 = vmatprep.subr.mxu0 0.0
    %3476 = vmatpush1.msra.mxu0 0.0
    %3477 = vmatprep.subr.mxu0 0.0
    %3478 = vmatpush1.msra.mxu0 0.0
    %3479 = vmatprep.subr.mxu0 0.0
    %3480 = vmatpush1.msra.mxu0 0.0
    %3481 = vmatprep.subr.mxu0 0.0
    %3482 = vmatpush1.msra.mxu0 0.0
    %3483 = vmatprep.subr.mxu0 0.0
    %3484 = vmatpush1.msra.mxu0 0.0
    %3485 = vmatprep.subr.mxu0 0.0
    %3486 = vmatpush1.msra.mxu0 0.0
    %3487 = vmatprep.subr.mxu0 %v3040
    %3488 = vmatpush1.msra.mxu0 %v3039
    %3489 = vmatprep.subr.mxu0 %v3038
    %3490 = vmatpush1.msra.mxu0 %v3037
    %3491 = vmatprep.subr.mxu0 %v3036
    %3492 = vmatpush1.msra.mxu0 %v3035
    %3493 = vmatprep.subr.mxu0 %v3034
    %3494 = vmatpush1.msra.mxu0 %v3033
    %3495 = vmatprep.subr.mxu0 %v3032
    %3496 = vmatpush1.msra.mxu0 %v3031
    %3497 = vmatprep.subr.mxu0 %v3030
    %3498 = vmatpush1.msra.mxu0 %v3029
    %3499 = vmatprep.subr.mxu0 %v3028
    %3500 = vmatpush1.msra.mxu0 %v3027
    %3501 = vmatprep.subr.mxu0 %v3026
    %3502 = vmatpush1.msra.mxu0 %v3025
    %3503 = vmatprep.subr.mxu0 0.0
    %3504 = vmatpush2.msra.mxu0 0.0
    %3505 = vmatprep.subr.mxu0 0.0
    %3506 = vmatpush2.msra.mxu0 0.0
    %3507 = vmatprep.subr.mxu0 0.0
    %3508 = vmatpush2.msra.mxu0 0.0
    %3509 = vmatprep.subr.mxu0 0.0
    %3510 = vmatpush2.msra.mxu0 0.0
    %3511 = vmatprep.subr.mxu0 0.0
    %3512 = vmatpush2.msra.mxu0 0.0
    %3513 = vmatprep.subr.mxu0 0.0
    %3514 = vmatpush2.msra.mxu0 0.0
    %3515 = vmatprep.subr.mxu0 0.0
    %3516 = vmatpush2.msra.mxu0 0.0
    %3517 = vmatprep.subr.mxu0 0.0
    %3518 = vmatpush2.msra.mxu0 0.0
    %3519 = vmatprep.subr.mxu0 0.0
    %3520 = vmatpush2.msra.mxu0 0.0
    %3521 = vmatprep.subr.mxu0 0.0
    %3522 = vmatpush2.msra.mxu0 0.0
    %3523 = vmatprep.subr.mxu0 0.0
    %3524 = vmatpush2.msra.mxu0 0.0
    %3525 = vmatprep.subr.mxu0 0.0
    %3526 = vmatpush2.msra.mxu0 0.0
    %3527 = vmatprep.subr.mxu0 0.0
    %3528 = vmatpush2.msra.mxu0 0.0
    %3529 = vmatprep.subr.mxu0 0.0
    %3530 = vmatpush2.msra.mxu0 0.0
    %3531 = vmatprep.subr.mxu0 0.0
    %3532 = vmatpush2.msra.mxu0 0.0
    %3533 = vmatprep.subr.mxu0 0.0
    %3534 = vmatpush2.msra.mxu0 0.0
    %3535 = vmatprep.mubr.f32.mxu0 0.0
    %3536 = vmatmul.mubr.f32.gmra.mxu0 %v3469
    %v3537 = vpop.f32.mrf.mxu0
    %v3538 = vadd.f32 0.0, %v3537
    %v3539 = vpop.f32.mrf.mxu0
    %v3540 = vadd.f32 0.0, %v3539
    %3541 = vdwg.mxu0
    %v3544 = vrot.slane %v3538, 4
    %v3545 = vrot.slane %v3540, 4
    %v3548 = vadd.f32 %v3021, %v3544
    %v3549 = vadd.f32 %v3023, %v3545
    %v3550 = vxor.u32 %v3548, 2147483648
    %v3551 = vmul.f32 %v3550, 1.442695
    %v3552 = vpow.pop %v3551
    %v3553 = vadd.f32 %v3552, 1.0
    %v3554 = vrcp.pop %v3553
    %v3555 = vmul.f32 1.0, %v3554
    %v3556 = vtanh.pop %v3549
    %v3557 = vxor.u32 %v3549, 2147483648
    %v3558 = vmul.f32 %v3557, 1.442695
    %v3559 = vpow.pop %v3558
    %v3560 = vadd.f32 %v3559, 1.0
    %v3561 = vrcp.pop %v3560
    %v3562 = vmul.f32 1.0, %v3561
    %v3564 = vrot.slane %v3462, 7
    %v3566 = vmul.f32 %v3555, %v3564
    %v3567 = vmul.f32 %v3555, %v3556
    %3569 = vrot.lane.b32.xlu0 %v3567, 64
    %v3570 = vpop.permute.xlu0 %3569
    %v3572 = vadd.f32 %v3566, %v3570
    %v3573 = vtanh.pop %v3572
    %v3574 = vmul.f32 %v3562, %v3573
    %v3576 = vrot.slane %v3574, 4
    %3577 = vrot.lane.b32.xlu0 %v3576, 64
    %v3578 = vpop.permute.xlu0 %3577
    %v3579 = vsel %vm200, %v3578, 0
    %3581 = vmatprep.subr.mxu0 0.0
    %3582 = vmatpush1.msra.mxu0 0.0
    %3583 = vmatprep.subr.mxu0 0.0
    %3584 = vmatpush1.msra.mxu0 0.0
    %3585 = vmatprep.subr.mxu0 0.0
    %3586 = vmatpush1.msra.mxu0 0.0
    %3587 = vmatprep.subr.mxu0 0.0
    %3588 = vmatpush1.msra.mxu0 0.0
    %3589 = vmatprep.subr.mxu0 0.0
    %3590 = vmatpush1.msra.mxu0 0.0
    %3591 = vmatprep.subr.mxu0 0.0
    %3592 = vmatpush1.msra.mxu0 0.0
    %3593 = vmatprep.subr.mxu0 0.0
    %3594 = vmatpush1.msra.mxu0 0.0
    %3595 = vmatprep.subr.mxu0 0.0
    %3596 = vmatpush1.msra.mxu0 0.0
    %3597 = vmatprep.subr.mxu0 %v3040
    %3598 = vmatpush1.msra.mxu0 %v3039
    %3599 = vmatprep.subr.mxu0 %v3038
    %3600 = vmatpush1.msra.mxu0 %v3037
    %3601 = vmatprep.subr.mxu0 %v3036
    %3602 = vmatpush1.msra.mxu0 %v3035
    %3603 = vmatprep.subr.mxu0 %v3034
    %3604 = vmatpush1.msra.mxu0 %v3033
    %3605 = vmatprep.subr.mxu0 %v3032
    %3606 = vmatpush1.msra.mxu0 %v3031
    %3607 = vmatprep.subr.mxu0 %v3030
    %3608 = vmatpush1.msra.mxu0 %v3029
    %3609 = vmatprep.subr.mxu0 %v3028
    %3610 = vmatpush1.msra.mxu0 %v3027
    %3611 = vmatprep.subr.mxu0 %v3026
    %3612 = vmatpush1.msra.mxu0 %v3025
    %3613 = vmatprep.subr.mxu0 0.0
    %3614 = vmatpush2.msra.mxu0 0.0
    %3615 = vmatprep.subr.mxu0 0.0
    %3616 = vmatpush2.msra.mxu0 0.0
    %3617 = vmatprep.subr.mxu0 0.0
    %3618 = vmatpush2.msra.mxu0 0.0
    %3619 = vmatprep.subr.mxu0 0.0
    %3620 = vmatpush2.msra.mxu0 0.0
    %3621 = vmatprep.subr.mxu0 0.0
    %3622 = vmatpush2.msra.mxu0 0.0
    %3623 = vmatprep.subr.mxu0 0.0
    %3624 = vmatpush2.msra.mxu0 0.0
    %3625 = vmatprep.subr.mxu0 0.0
    %3626 = vmatpush2.msra.mxu0 0.0
    %3627 = vmatprep.subr.mxu0 0.0
    %3628 = vmatpush2.msra.mxu0 0.0
    %3629 = vmatprep.subr.mxu0 0.0
    %3630 = vmatpush2.msra.mxu0 0.0
    %3631 = vmatprep.subr.mxu0 0.0
    %3632 = vmatpush2.msra.mxu0 0.0
    %3633 = vmatprep.subr.mxu0 0.0
    %3634 = vmatpush2.msra.mxu0 0.0
    %3635 = vmatprep.subr.mxu0 0.0
    %3636 = vmatpush2.msra.mxu0 0.0
    %3637 = vmatprep.subr.mxu0 0.0
    %3638 = vmatpush2.msra.mxu0 0.0
    %3639 = vmatprep.subr.mxu0 0.0
    %3640 = vmatpush2.msra.mxu0 0.0
    %3641 = vmatprep.subr.mxu0 0.0
    %3642 = vmatpush2.msra.mxu0 0.0
    %3643 = vmatprep.subr.mxu0 0.0
    %3644 = vmatpush2.msra.mxu0 0.0
    %3645 = vmatprep.mubr.f32.mxu0 0.0
    %3646 = vmatmul.mubr.f32.gmra.mxu0 %v3579
    %v3647 = vpop.f32.mrf.mxu0
    %v3648 = vadd.f32 0.0, %v3647
    %v3649 = vpop.f32.mrf.mxu0
    %v3650 = vadd.f32 0.0, %v3649
    %3651 = vdwg.mxu0
    %v3654 = vrot.slane %v3648, 3
    %v3655 = vrot.slane %v3650, 3
    %v3658 = vadd.f32 %v3021, %v3654
    %v3659 = vadd.f32 %v3023, %v3655
    %v3660 = vxor.u32 %v3658, 2147483648
    %v3661 = vmul.f32 %v3660, 1.442695
    %v3662 = vpow.pop %v3661
    %v3663 = vadd.f32 %v3662, 1.0
    %v3664 = vrcp.pop %v3663
    %v3665 = vmul.f32 1.0, %v3664
    %v3666 = vtanh.pop %v3659
    %v3667 = vxor.u32 %v3659, 2147483648
    %v3668 = vmul.f32 %v3667, 1.442695
    %v3669 = vpow.pop %v3668
    %v3670 = vadd.f32 %v3669, 1.0
    %v3671 = vrcp.pop %v3670
    %v3672 = vmul.f32 1.0, %v3671
    %v3674 = vrot.slane %v3572, 7
    %v3676 = vmul.f32 %v3665, %v3674
    %v3677 = vmul.f32 %v3665, %v3666
    %3679 = vrot.lane.b32.xlu0 %v3677, 64
    %v3680 = vpop.permute.xlu0 %3679
    %v3682 = vadd.f32 %v3676, %v3680
    %v3683 = vtanh.pop %v3682
    %v3684 = vmul.f32 %v3672, %v3683
    %v3686 = vrot.slane %v3684, 5
    %3687 = vrot.lane.b32.xlu0 %v3686, 64
    %v3688 = vpop.permute.xlu0 %3687
    %v3689 = vsel %vm200, %v3688, 0
    %3691 = vmatprep.subr.mxu0 0.0
    %3692 = vmatpush1.msra.mxu0 0.0
    %3693 = vmatprep.subr.mxu0 0.0
    %3694 = vmatpush1.msra.mxu0 0.0
    %3695 = vmatprep.subr.mxu0 0.0
    %3696 = vmatpush1.msra.mxu0 0.0
    %3697 = vmatprep.subr.mxu0 0.0
    %3698 = vmatpush1.msra.mxu0 0.0
    %3699 = vmatprep.subr.mxu0 0.0
    %3700 = vmatpush1.msra.mxu0 0.0
    %3701 = vmatprep.subr.mxu0 0.0
    %3702 = vmatpush1.msra.mxu0 0.0
    %3703 = vmatprep.subr.mxu0 0.0
    %3704 = vmatpush1.msra.mxu0 0.0
    %3705 = vmatprep.subr.mxu0 0.0
    %3706 = vmatpush1.msra.mxu0 0.0
    %3707 = vmatprep.subr.mxu0 %v3040
    %3708 = vmatpush1.msra.mxu0 %v3039
    %3709 = vmatprep.subr.mxu0 %v3038
    %3710 = vmatpush1.msra.mxu0 %v3037
    %3711 = vmatprep.subr.mxu0 %v3036
    %3712 = vmatpush1.msra.mxu0 %v3035
    %3713 = vmatprep.subr.mxu0 %v3034
    %3714 = vmatpush1.msra.mxu0 %v3033
    %3715 = vmatprep.subr.mxu0 %v3032
    %3716 = vmatpush1.msra.mxu0 %v3031
    %3717 = vmatprep.subr.mxu0 %v3030
    %3718 = vmatpush1.msra.mxu0 %v3029
    %3719 = vmatprep.subr.mxu0 %v3028
    %3720 = vmatpush1.msra.mxu0 %v3027
    %3721 = vmatprep.subr.mxu0 %v3026
    %3722 = vmatpush1.msra.mxu0 %v3025
    %3723 = vmatprep.subr.mxu0 0.0
    %3724 = vmatpush2.msra.mxu0 0.0
    %3725 = vmatprep.subr.mxu0 0.0
    %3726 = vmatpush2.msra.mxu0 0.0
    %3727 = vmatprep.subr.mxu0 0.0
    %3728 = vmatpush2.msra.mxu0 0.0
    %3729 = vmatprep.subr.mxu0 0.0
    %3730 = vmatpush2.msra.mxu0 0.0
    %3731 = vmatprep.subr.mxu0 0.0
    %3732 = vmatpush2.msra.mxu0 0.0
    %3733 = vmatprep.subr.mxu0 0.0
    %3734 = vmatpush2.msra.mxu0 0.0
    %3735 = vmatprep.subr.mxu0 0.0
    %3736 = vmatpush2.msra.mxu0 0.0
    %3737 = vmatprep.subr.mxu0 0.0
    %3738 = vmatpush2.msra.mxu0 0.0
    %3739 = vmatprep.subr.mxu0 0.0
    %3740 = vmatpush2.msra.mxu0 0.0
    %3741 = vmatprep.subr.mxu0 0.0
    %3742 = vmatpush2.msra.mxu0 0.0
    %3743 = vmatprep.subr.mxu0 0.0
    %3744 = vmatpush2.msra.mxu0 0.0
    %3745 = vmatprep.subr.mxu0 0.0
    %3746 = vmatpush2.msra.mxu0 0.0
    %3747 = vmatprep.subr.mxu0 0.0
    %3748 = vmatpush2.msra.mxu0 0.0
    %3749 = vmatprep.subr.mxu0 0.0
    %3750 = vmatpush2.msra.mxu0 0.0
    %3751 = vmatprep.subr.mxu0 0.0
    %3752 = vmatpush2.msra.mxu0 0.0
    %3753 = vmatprep.subr.mxu0 0.0
    %3754 = vmatpush2.msra.mxu0 0.0
    %3755 = vmatprep.mubr.f32.mxu0 0.0
    %3756 = vmatmul.mubr.f32.gmra.mxu0 %v3689
    %v3757 = vpop.f32.mrf.mxu0
    %v3758 = vadd.f32 0.0, %v3757
    %v3759 = vpop.f32.mrf.mxu0
    %v3760 = vadd.f32 0.0, %v3759
    %3761 = vdwg.mxu0
    %v3764 = vrot.slane %v3758, 2
    %v3765 = vrot.slane %v3760, 2
    %v3768 = vadd.f32 %v3021, %v3764
    %v3769 = vadd.f32 %v3023, %v3765
    %v3770 = vxor.u32 %v3768, 2147483648
    %v3771 = vmul.f32 %v3770, 1.442695
    %v3772 = vpow.pop %v3771
    %v3773 = vadd.f32 %v3772, 1.0
    %v3774 = vrcp.pop %v3773
    %v3775 = vmul.f32 1.0, %v3774
    %v3776 = vtanh.pop %v3769
    %v3777 = vxor.u32 %v3769, 2147483648
    %v3778 = vmul.f32 %v3777, 1.442695
    %v3779 = vpow.pop %v3778
    %v3780 = vadd.f32 %v3779, 1.0
    %v3781 = vrcp.pop %v3780
    %v3782 = vmul.f32 1.0, %v3781
    %v3784 = vrot.slane %v3682, 7
    %v3786 = vmul.f32 %v3775, %v3784
    %v3787 = vmul.f32 %v3775, %v3776
    %3789 = vrot.lane.b32.xlu0 %v3787, 64
    %v3790 = vpop.permute.xlu0 %3789
    %v3792 = vadd.f32 %v3786, %v3790
    %v3793 = vtanh.pop %v3792
    %v3794 = vmul.f32 %v3782, %v3793
    %v3796 = vrot.slane %v3794, 6
    %3797 = vrot.lane.b32.xlu0 %v3796, 64
    %v3798 = vpop.permute.xlu0 %3797
    %v3799 = vsel %vm200, %v3798, 0
    %3801 = vmatprep.subr.mxu0 0.0
    %3802 = vmatpush1.msra.mxu0 0.0
    %3803 = vmatprep.subr.mxu0 0.0
    %3804 = vmatpush1.msra.mxu0 0.0
    %3805 = vmatprep.subr.mxu0 0.0
    %3806 = vmatpush1.msra.mxu0 0.0
    %3807 = vmatprep.subr.mxu0 0.0
    %3808 = vmatpush1.msra.mxu0 0.0
    %3809 = vmatprep.subr.mxu0 0.0
    %3810 = vmatpush1.msra.mxu0 0.0
    %3811 = vmatprep.subr.mxu0 0.0
    %3812 = vmatpush1.msra.mxu0 0.0
    %3813 = vmatprep.subr.mxu0 0.0
    %3814 = vmatpush1.msra.mxu0 0.0
    %3815 = vmatprep.subr.mxu0 0.0
    %3816 = vmatpush1.msra.mxu0 0.0
    %3817 = vmatprep.subr.mxu0 %v3040
    %3818 = vmatpush1.msra.mxu0 %v3039
    %3819 = vmatprep.subr.mxu0 %v3038
    %3820 = vmatpush1.msra.mxu0 %v3037
    %3821 = vmatprep.subr.mxu0 %v3036
    %3822 = vmatpush1.msra.mxu0 %v3035
    %3823 = vmatprep.subr.mxu0 %v3034
    %3824 = vmatpush1.msra.mxu0 %v3033
    %3825 = vmatprep.subr.mxu0 %v3032
    %3826 = vmatpush1.msra.mxu0 %v3031
    %3827 = vmatprep.subr.mxu0 %v3030
    %3828 = vmatpush1.msra.mxu0 %v3029
    %3829 = vmatprep.subr.mxu0 %v3028
    %3830 = vmatpush1.msra.mxu0 %v3027
    %3831 = vmatprep.subr.mxu0 %v3026
    %3832 = vmatpush1.msra.mxu0 %v3025
    %3833 = vmatprep.subr.mxu0 0.0
    %3834 = vmatpush2.msra.mxu0 0.0
    %3835 = vmatprep.subr.mxu0 0.0
    %3836 = vmatpush2.msra.mxu0 0.0
    %3837 = vmatprep.subr.mxu0 0.0
    %3838 = vmatpush2.msra.mxu0 0.0
    %3839 = vmatprep.subr.mxu0 0.0
    %3840 = vmatpush2.msra.mxu0 0.0
    %3841 = vmatprep.subr.mxu0 0.0
    %3842 = vmatpush2.msra.mxu0 0.0
    %3843 = vmatprep.subr.mxu0 0.0
    %3844 = vmatpush2.msra.mxu0 0.0
    %3845 = vmatprep.subr.mxu0 0.0
    %3846 = vmatpush2.msra.mxu0 0.0
    %3847 = vmatprep.subr.mxu0 0.0
    %3848 = vmatpush2.msra.mxu0 0.0
    %3849 = vmatprep.subr.mxu0 0.0
    %3850 = vmatpush2.msra.mxu0 0.0
    %3851 = vmatprep.subr.mxu0 0.0
    %3852 = vmatpush2.msra.mxu0 0.0
    %3853 = vmatprep.subr.mxu0 0.0
    %3854 = vmatpush2.msra.mxu0 0.0
    %3855 = vmatprep.subr.mxu0 0.0
    %3856 = vmatpush2.msra.mxu0 0.0
    %3857 = vmatprep.subr.mxu0 0.0
    %3858 = vmatpush2.msra.mxu0 0.0
    %3859 = vmatprep.subr.mxu0 0.0
    %3860 = vmatpush2.msra.mxu0 0.0
    %3861 = vmatprep.subr.mxu0 0.0
    %3862 = vmatpush2.msra.mxu0 0.0
    %3863 = vmatprep.subr.mxu0 0.0
    %3864 = vmatpush2.msra.mxu0 0.0
    %3865 = vmatprep.mubr.f32.mxu0 0.0
    %3866 = vmatmul.mubr.f32.gmra.mxu0 %v3799
    %v3867 = vpop.f32.mrf.mxu0
    %v3868 = vadd.f32 0.0, %v3867
    %v3869 = vpop.f32.mrf.mxu0
    %v3870 = vadd.f32 0.0, %v3869
    %3871 = vdwg.mxu0
    %v3874 = vrot.slane %v3868, 1
    %v3875 = vrot.slane %v3870, 1
    %v3878 = vadd.f32 %v3021, %v3874
    %v3879 = vadd.f32 %v3023, %v3875
    %v3880 = vxor.u32 %v3878, 2147483648
    %v3881 = vmul.f32 %v3880, 1.442695
    %v3882 = vpow.pop %v3881
    %v3883 = vadd.f32 %v3882, 1.0
    %v3884 = vrcp.pop %v3883
    %v3885 = vmul.f32 1.0, %v3884
    %v3886 = vtanh.pop %v3879
    %v3887 = vxor.u32 %v3879, 2147483648
    %v3888 = vmul.f32 %v3887, 1.442695
    %v3889 = vpow.pop %v3888
    %v3890 = vadd.f32 %v3889, 1.0
    %v3891 = vrcp.pop %v3890
    %v3892 = vmul.f32 1.0, %v3891
    %v3894 = vrot.slane %v3792, 7
    %v3896 = vmul.f32 %v3885, %v3894
    %v3897 = vmul.f32 %v3885, %v3886
    %3899 = vrot.lane.b32.xlu0 %v3897, 64
    %v3900 = vpop.permute.xlu0 %3899
    %v3902 = vadd.f32 %v3896, %v3900
    %v3903 = vtanh.pop %v3902
    %v3904 = vmul.f32 %v3892, %v3903
    %v3905 = vsel %vm1068, %v3135, %v3244
    %v3906 = vsel %vm1070, %v3905, %v3354
    %v3907 = vsel %vm1072, %v3906, %v3464
    %v3908 = vsel %vm1074, %v3907, %v3574
    %v3909 = vsel %vm1076, %v3908, %v3684
    %v3910 = vsel %vm1078, %v3909, %v3794
    %v3911 = vsel %vm1080, %v3910, %v3904
    %v3912 = vld [vmem:[%s13] sm:$0x1]
    %v3914 = vlaneseq
    %v3915 = vshrl.u32 %v3914, 7
    %v3916 = vsub.s32 0, %v3915
    %v3917 = vrot.slane %v3912, %v3916
    %3918 = vrot.lane.b32.xlu0 %v3917, 64
    %v3919 = vpop.permute.xlu0 %3918
    %v3921 = vmul.f32 %v3911, %v3919
    %3923 = vrot.lane.b32.xlu0 %v3921, 64
    %v3924 = vpop.permute.xlu0 %3923
    %v3926 = vsel %vm200, %v3924, 0.0
    %3927 = vadd.xlane.f32.xlu0 %v3926
    %v3928 = vpop.xlane.xlu0 %3927
    %v3929 = vld [vmem:[#allocation2] sm:$0x1]
    %v3931 = vlaneseq
    %v3932 = vshrl.u32 %v3931, 7
    %v3933 = vsub.s32 0, %v3932
    %v3934 = vrot.slane %v3929, %v3933
    %v3936 = vadd.f32 %v3928, %v3934
    %vm3937 = vcmask 7168
    %3938 = vst.msk [vmem:[%s16] sm:$0xff] %vm3937, %v3936
    // Predicated region
    $region90: #{tpu_custom_call.1} parent=1 // pred_check
      _
    $region91: #{tpu_custom_call.1} parent=1 // pred_check_branch
      %3940 = sbr.rel (0) target = $region93
    $region92: #{tpu_custom_call.1} parent=1 // pred_region
      %s3942 = ssub.s32 16, 16
      %3943 = vsyncadd [#allocation5], %s3942
      %s3945 = sshll.u32 [#allocation15], 4
      %s3946 = int_to_ptr.vmem [resolvable:$true] %s3945
      %3948 = dma.vmem_to_hbm [thread:$0]  %s3946, 16, %s15, [#allocation5]
    $region93: #{tpu_custom_call.1} parent=1 // pred_fallthru
      _
    // Predicated region
    $region94: #{tpu_custom_call.1} parent=1 // pred_check
      _
    $region95: #{tpu_custom_call.1} parent=1 // pred_check_branch
      %3950 = sbr.rel (0) target = $region97
    $region96: #{tpu_custom_call.1} parent=1 // pred_region
      _
    $region97: #{tpu_custom_call.1} parent=1 // pred_fallthru
      _
    // Predicated region
    $region98: #{tpu_custom_call.1} parent=1 // pred_check
      _
    $region99: #{tpu_custom_call.1} parent=1 // pred_check_branch
      %3952 = sbr.rel (0) target = $region101
    $region100: #{tpu_custom_call.1} parent=1 // pred_region
      %3953 = dma.done [#allocation5], 16
    $region101: #{tpu_custom_call.1} parent=1 // pred_fallthru
      _
    // Predicated region
    $region102: #{tpu_custom_call.1} parent=1 // pred_check
      _
    $region103: #{tpu_custom_call.1} parent=1 // pred_check_branch
      %3955 = sbr.rel (0) target = $region105
    $region104: #{tpu_custom_call.1} parent=1 // pred_region
      _
    $region105: #{tpu_custom_call.1} parent=1 // pred_fallthru
      _
    %3956 = vsyncpa [#allocation4], 1
    %3957 = vsyncpa [#allocation7], 1
    %3958 = vsyncpa [#allocation10], 1
    %3959 = vsyncpa [#allocation13], 1
    %3960 = vsyncpa [#allocation5], 1

</llo_original>
